<compile_context>
chip_gen: v6e
topology: v6e:2x2x1
jax: 0.10.0
libtpu: 0.0.40
codegen_flags: <defaults>
</compile_context>

<pallas_src>
import functools
import math

import jax
import jax.numpy as jnp
import numpy as np
from jax import lax
from jax.experimental import pallas as pl
from jax.experimental.pallas import tpu as pltpu


def _denoiser_kernel(x_ref, w1_ref, b1_ref, a1_ref, w2_ref, b2_ref, a2_ref,
                     w3_ref, b3_ref, o_ref, *, rows_per_pass, compute_dtype):
    # x_ref/o_ref: (b_tile, S, 128) in the input dtype (f32)
    # per-feature params: (C, S, 128) / (C, C, S, 128) in compute_dtype
    # a1_ref/a2_ref: (C,) PReLU alphas in SMEM (f32)
    C = w1_ref.shape[0]
    b_tile = x_ref.shape[0]
    n_pass = b_tile // rows_per_pass
    cd = compute_dtype

    def one_pass(p, carry):
        r0 = pl.multiple_of(p * rows_per_pass, rows_per_pass)
        x = x_ref[pl.ds(r0, rows_per_pass)]                 # (rp, S, 128), f32
        xc = x.astype(cd)

        # conv1 (1 -> C, per-feature scalar weight) + PReLU(C)
        h1 = []
        for c in range(C):
            v = xc * w1_ref[c][None] + b1_ref[c][None]      # (rp, S, 128)
            h1.append(jnp.where(v > 0, v, a1_ref[c].astype(cd) * v))

        # conv2 (C -> C, per-feature CxC matrix) + PReLU(C), fused with conv3 (C -> 1):
        # each h2[co] is consumed immediately so only the C h1 channels stay live.
        y = b3_ref[...].astype(cd)                          # (1, S, 128)
        for co in range(C):
            acc = b2_ref[co][None]                          # (1, S, 128)
            for ci in range(C):
                acc = acc + w2_ref[co, ci][None] * h1[ci]   # (rp, S, 128)
            h2 = jnp.where(acc > 0, acc, a2_ref[co].astype(cd) * acc)
            y = y + w3_ref[co][None] * h2

        # Residual add in the input dtype (exact for the f32 path, f32 store always).
        o_ref[pl.ds(r0, rows_per_pass)] = (x + y.astype(x.dtype)).astype(o_ref.dtype)
        return carry

    # n_pass is static; unroll=2 lets the scheduler overlap the next pass's weight loads
    # with the current pass's VALU tail.
    lax.fori_loop(0, n_pass, one_pass, 0,
                  unroll=2 if (n_pass >= 2 and n_pass % 2 == 0) else 1)


def feature_denoiser(x, w1, b1, a1, w2, b2, a2, w3, b3, *,
                     compute_dtype=None, b_tile=None, s_tile=None, rows_per_pass=None):
    B, F = x.shape
    C = w1.shape[0]
    if F % 128 != 0:
        raise ValueError("n_features must be a multiple of 128")
    NF = F // 128  # number of 128-wide feature chunks

    cd = jnp.dtype(compute_dtype) if compute_dtype is not None else jnp.dtype(x.dtype)
    sub_pack = max(8, 32 // cd.itemsize)   # native sublane packing: 8 (f32) / 16 (bf16)

    # ---- Fold batch rows into the sublane axis so vregs are always full --------------
    # x (B, F) -> (B/r, S=r*NF, 128); weights are tiled r x along the chunk axis so
    # sublane s = j*NF + f (batch offset j, chunk f) sees the chunk-f weights.
    if NF % sub_pack == 0:
        r = 1
    else:
        r = sub_pack // math.gcd(NF, sub_pack)   # smallest r with (r*NF) % sub_pack == 0
    S = r * NF

    if s_tile is None:
        for cand in (4 * sub_pack, 2 * sub_pack, sub_pack):
            if S % cand == 0:
                s_tile = cand
                break
        else:
            s_tile = S
    assert S % s_tile == 0 and (s_tile % 8 == 0 or s_tile == S)
    nf = S // s_tile

    # Rows per inner pass: bound the live vreg set
    #   ~ (C + 4) * rows_per_pass * vregs_per_row  <=  ~44 of 64 vregs (sweep 2-4 at C=10).
    vregs_per_row = max(1, (s_tile * 128 * cd.itemsize) // 4096)
    if rows_per_pass is None:
        rows_per_pass = max(1, 44 // ((C + 4) * vregs_per_row))

    # Batch tiling with zero padding (never collapse to tiny divisor tiles for awkward B).
    B_pad1 = -(-B // r) * r
    B_eff = B_pad1 // r
    if b_tile is None:
        nb = -(-B_eff // 256)                      # cap x/out blocks at ~256 effective rows
        b_tile = -(-B_eff // nb)
        b_tile = -(-b_tile // rows_per_pass) * rows_per_pass
    else:
        rows_per_pass = max(1, min(rows_per_pass, b_tile))
        while b_tile % rows_per_pass:
            rows_per_pass -= 1
    B_eff_pad = -(-B_eff // b_tile) * b_tile
    nb = B_eff_pad // b_tile

    # ---- Host-side repack: lane axis = dense 128-wide feature chunk ------------------
    xr = x if B_pad1 == B else jnp.pad(x, ((0, B_pad1 - B), (0, 0)))
    xr = xr.reshape(B_eff, S, 128)
    if B_eff_pad != B_eff:
        xr = jnp.pad(xr, ((0, B_eff_pad - B_eff), (0, 0), (0, 0)))

    def prep(w, lead):
        w = w.reshape(*lead, NF, 128)
        if r > 1:
            w = jnp.tile(w, (1,) * len(lead) + (r, 1))
        return w.astype(cd)

    w1r = prep(w1, (C,))
    b1r = prep(b1, (C,))
    w2r = prep(w2, (C, C))
    b2r = prep(b2, (C,))
    w3r = prep(w3, (C,))
    b3r = prep(b3, (1,))
    a1f = a1.astype(jnp.float32)
    a2f = a2.astype(jnp.float32)

    # VMEM budget: (x + out) blocks in the input dtype + ALL weight blocks
    # (C*C + 4*C + 1 of them) in the compute dtype, double-buffered, plus headroom.
    # Conservative cap for v7x's 64 MiB/TC VMEM.
    itemsize_x = jnp.dtype(x.dtype).itemsize
    step_bytes = (2 * b_tile * itemsize_x
                  + (C * C + 4 * C + 1) * cd.itemsize) * s_tile * 128
    vmem_limit = int(min(max(2 * step_bytes + (8 << 20), 32 << 20), 56 << 20))

    flops = 2 * B * F * (C * C + 5 * C)
    bytes_accessed = int(2 * B * F * itemsize_x + (C * C + 4 * C + 1) * F * cd.itemsize)
    cost = pl.CostEstimate(flops=flops, transcendentals=0, bytes_accessed=bytes_accessed)

    smem = pl.BlockSpec(memory_space=pltpu.MemorySpace.SMEM)
    kernel = functools.partial(_denoiser_kernel,
                               rows_per_pass=rows_per_pass, compute_dtype=cd)

    out = pl.pallas_call(
        kernel,
        out_shape=jax.ShapeDtypeStruct((B_eff_pad, S, 128), x.dtype),
        grid_spec=pltpu.PrefetchScalarGridSpec(
            num_scalar_prefetch=0,
            grid=(nf, nb),   # batch innermost: weight blocks DMA'd once per feature block
            in_specs=[
                pl.BlockSpec((b_tile, s_tile, 128), lambda fi, bi: (bi, fi, 0)),    # x
                pl.BlockSpec((C, s_tile, 128),      lambda fi, bi: (0, fi, 0)),     # w1
                pl.BlockSpec((C, s_tile, 128),      lambda fi, bi: (0, fi, 0)),     # b1
                smem,                                                               # a1
                pl.BlockSpec((C, C, s_tile, 128),   lambda fi, bi: (0, 0, fi, 0)),  # w2
                pl.BlockSpec((C, s_tile, 128),      lambda fi, bi: (0, fi, 0)),     # b2
                smem,                                                               # a2
                pl.BlockSpec((C, s_tile, 128),      lambda fi, bi: (0, fi, 0)),     # w3
                pl.BlockSpec((1, s_tile, 128),      lambda fi, bi: (0, fi, 0)),     # b3
            ],
            out_specs=pl.BlockSpec((b_tile, s_tile, 128), lambda fi, bi: (bi, fi, 0)),
        ),
        compiler_params=pltpu.CompilerParams(
            dimension_semantics=("parallel", "parallel"),
            vmem_limit_bytes=vmem_limit),
        cost_estimate=cost,
    )(xr, w1r, b1r, a1f, w2r, b2r, a2f, w3r, b3r)

    # Undo batch folding / padding.
    return out.reshape(B_eff_pad * r, F)[:B]


def init_params(key, n_features, n_channels, dtype=jnp.float32):
    """Deterministic init mirroring Conv2dLocal.reset_parameters + PReLU defaults."""
    F, C = n_features, n_channels
    k1, k2, k3, k4, k5, k6 = jax.random.split(key, 6)
    stdv1 = 1.0 / np.sqrt(1.0)        # conv1: in_channels=1, 1x1 kernel
    stdv2 = 1.0 / np.sqrt(float(C))   # conv2: in_channels=C
    stdv3 = 1.0 / np.sqrt(float(C))   # conv3: in_channels=C
    w1 = jax.random.uniform(k1, (C, F), dtype, -stdv1, stdv1)
    b1 = jax.random.uniform(k2, (C, F), dtype, -stdv1, stdv1)
    w2 = jax.random.uniform(k3, (C, C, F), dtype, -stdv2, stdv2)
    b2 = jax.random.uniform(k4, (C, F), dtype, -stdv2, stdv2)
    w3 = jax.random.uniform(k5, (C, F), dtype, -stdv3, stdv3)
    b3 = jax.random.uniform(k6, (1, F), dtype, -stdv3, stdv3)
    a1 = jnp.full((C,), 0.25, dtype)  # PReLU default init
    a2 = jnp.full((C,), 0.25, dtype)
    return w1, b1, a1, w2, b2, a2, w3, b3


def reference(x, w1, b1, a1, w2, b2, a2, w3, b3):
    """Pure-JAX reference matching conv2d_local / PReLU semantics."""
    h1 = x[:, None, :] * w1[None] + b1[None]                   # (B, C, F)
    h1 = jnp.where(h1 > 0, h1, a1[None, :, None] * h1)
    h2 = jnp.einsum('oif,bif->bof', w2, h1) + b2[None]         # (B, C, F)
    h2 = jnp.where(h2 > 0, h2, a2[None, :, None] * h2)
    y = jnp.einsum('cf,bcf->bf', w3, h2) + b3                  # (B, F)
    return x + y


if __name__ == "__main__":
    # Module defaults: n_features=512, n_channels=10; small batch.
    B, F, C = 16, 512, 10
    key = jax.random.PRNGKey(0)
    kx, kp = jax.random.split(key)
    x = jax.random.normal(kx, (B, F), jnp.float32)
    params = init_params(kp, F, C)
    ref = reference(x, *params)

    # 1) f32, auto tiling: NF=4 -> batch fold r=2, dense (.., 8, 128) blocks.
    out = jax.block_until_ready(feature_denoiser(x, *params))
    np.testing.assert_allclose(np.asarray(out), np.asarray(ref), rtol=1e-5, atol=1e-5)

    # 2) f32, awkward batch (B=13) + forced multi-step batch grid:
    #    exercises the zero-padding path and weight-block reuse across batch steps.
    x_odd = x[:13]
    ref_odd = reference(x_odd, *params)
    out2 = jax.block_until_ready(
        feature_denoiser(x_odd, *params, b_tile=2, rows_per_pass=2))
    np.testing.assert_allclose(np.asarray(out2), np.asarray(ref_odd), rtol=1e-5, atol=1e-5)

    # 3) bf16 compute path (v6e/v7x fast path; f32 residual/store, looser tolerance
    #    for bf16 weight/accumulation rounding).
    out3 = jax.block_until_ready(
        feature_denoiser(x, *params, compute_dtype=jnp.bfloat16))
    np.testing.assert_allclose(np.asarray(out3), np.asarray(ref), rtol=1e-1, atol=1e-1)

    print("KERNEL_OK")
</pallas_src>

<mosaic_0001>
module attributes {stable_mosaic.version = 11 : i64} {
  func.func @_denoiser_kernel(%arg0: i32, %arg1: i32, %arg2: memref<9x8x128xf32, #tpu.memory_space<vmem>>, %arg3: memref<10x8x128xf32, #tpu.memory_space<vmem>>, %arg4: memref<10x8x128xf32, #tpu.memory_space<vmem>>, %arg5: memref<10xf32, #tpu.memory_space<smem>>, %arg6: memref<10x10x8x128xf32, #tpu.memory_space<vmem>>, %arg7: memref<10x8x128xf32, #tpu.memory_space<vmem>>, %arg8: memref<10xf32, #tpu.memory_space<smem>>, %arg9: memref<10x8x128xf32, #tpu.memory_space<vmem>>, %arg10: memref<1x8x128xf32, #tpu.memory_space<vmem>>, %arg11: memref<9x8x128xf32, #tpu.memory_space<vmem>>) attributes {dimension_semantics = [#tpu.dimension_semantics<parallel>, #tpu.dimension_semantics<parallel>], iteration_bounds = array<i64: 1, 1>, scalar_prefetch = 0 : i64, scratch_operands = 0 : i64, tpu.core_type = #tpu.core_type<tc>, window_params = [{transform_indices = @transform_0, window_bounds = array<i64: 9, 8, 128>}, {transform_indices = @transform_1, window_bounds = array<i64: 10, 8, 128>}, {transform_indices = @transform_2, window_bounds = array<i64: 10, 8, 128>}, {transform_indices = @transform_3, window_bounds = array<i64: 10>}, {transform_indices = @transform_4, window_bounds = array<i64: 10, 10, 8, 128>}, {transform_indices = @transform_5, window_bounds = array<i64: 10, 8, 128>}, {transform_indices = @transform_6, window_bounds = array<i64: 10>}, {transform_indices = @transform_7, window_bounds = array<i64: 10, 8, 128>}, {transform_indices = @transform_8, window_bounds = array<i64: 1, 8, 128>}, {transform_indices = @transform_9, window_bounds = array<i64: 9, 8, 128>}]} {
    %c0_i32 = arith.constant 0 : i32
    %c3_i32 = arith.constant 3 : i32
    %0 = arith.addi %c0_i32, %c3_i32 : i32
    %c1_i32 = arith.constant 1 : i32
    scf.for %arg12 = %c0_i32 to %0 step %c1_i32  : i32 {
      %c3_i32_1 = arith.constant 3 : i32
      %1 = arith.muli %arg12, %c3_i32_1 : i32
      %2 = tpu.assume_multiple %1, 3 : i32
      %3 = arith.index_cast %2 : i32 to index
      %c0 = arith.constant 0 : index
      %c0_2 = arith.constant 0 : index
      %4 = vector.load %arg2[%3, %c0, %c0_2] : memref<9x8x128xf32, #tpu.memory_space<vmem>>, vector<3x8x128xf32>
      %c0_3 = arith.constant 0 : index
      %c0_4 = arith.constant 0 : index
      %c0_5 = arith.constant 0 : index
      %5 = vector.load %arg3[%c0_3, %c0_4, %c0_5] : memref<10x8x128xf32, #tpu.memory_space<vmem>>, vector<1x8x128xf32>
      %6 = vector.shape_cast %5 : vector<1x8x128xf32> to vector<8x128xf32>
      %7 = vector.shape_cast %6 : vector<8x128xf32> to vector<1x8x128xf32>
      %8 = vector.broadcast %7 : vector<1x8x128xf32> to vector<3x8x128xf32>
      %9 = arith.mulf %4, %8 : vector<3x8x128xf32>
      %c0_6 = arith.constant 0 : index
      %c0_7 = arith.constant 0 : index
      %c0_8 = arith.constant 0 : index
      %10 = vector.load %arg4[%c0_6, %c0_7, %c0_8] : memref<10x8x128xf32, #tpu.memory_space<vmem>>, vector<1x8x128xf32>
      %11 = vector.shape_cast %10 : vector<1x8x128xf32> to vector<8x128xf32>
      %12 = vector.shape_cast %11 : vector<8x128xf32> to vector<1x8x128xf32>
      %13 = vector.broadcast %12 : vector<1x8x128xf32> to vector<3x8x128xf32>
      %14 = arith.addf %9, %13 : vector<3x8x128xf32>
      %cst = arith.constant 0.000000e+00 : f32
      %15 = vector.broadcast %cst : f32 to vector<3x8x128xf32>
      %16 = arith.cmpf ogt, %14, %15 : vector<3x8x128xf32>
      %c0_9 = arith.constant 0 : index
      %17 = memref.load %arg5[%c0_9] : memref<10xf32, #tpu.memory_space<smem>>
      %18 = vector.broadcast %17 : f32 to vector<3x8x128xf32>
      %19 = arith.mulf %18, %14 : vector<3x8x128xf32>
      %20 = arith.select %16, %14, %19 : vector<3x8x128xi1>, vector<3x8x128xf32>
      %c1 = arith.constant 1 : index
      %c0_10 = arith.constant 0 : index
      %c0_11 = arith.constant 0 : index
      %21 = vector.load %arg3[%c1, %c0_10, %c0_11] : memref<10x8x128xf32, #tpu.memory_space<vmem>>, vector<1x8x128xf32>
      %22 = vector.shape_cast %21 : vector<1x8x128xf32> to vector<8x128xf32>
      %23 = vector.shape_cast %22 : vector<8x128xf32> to vector<1x8x128xf32>
      %24 = vector.broadcast %23 : vector<1x8x128xf32> to vector<3x8x128xf32>
      %25 = arith.mulf %4, %24 : vector<3x8x128xf32>
      %c1_12 = arith.constant 1 : index
      %c0_13 = arith.constant 0 : index
      %c0_14 = arith.constant 0 : index
      %26 = vector.load %arg4[%c1_12, %c0_13, %c0_14] : memref<10x8x128xf32, #tpu.memory_space<vmem>>, vector<1x8x128xf32>
      %27 = vector.shape_cast %26 : vector<1x8x128xf32> to vector<8x128xf32>
      %28 = vector.shape_cast %27 : vector<8x128xf32> to vector<1x8x128xf32>
      %29 = vector.broadcast %28 : vector<1x8x128xf32> to vector<3x8x128xf32>
      %30 = arith.addf %25, %29 : vector<3x8x128xf32>
      %cst_15 = arith.constant 0.000000e+00 : f32
      %31 = vector.broadcast %cst_15 : f32 to vector<3x8x128xf32>
      %32 = arith.cmpf ogt, %30, %31 : vector<3x8x128xf32>
      %c1_16 = arith.constant 1 : index
      %33 = memref.load %arg5[%c1_16] : memref<10xf32, #tpu.memory_space<smem>>
      %34 = vector.broadcast %33 : f32 to vector<3x8x128xf32>
      %35 = arith.mulf %34, %30 : vector<3x8x128xf32>
      %36 = arith.select %32, %30, %35 : vector<3x8x128xi1>, vector<3x8x128xf32>
      %c2 = arith.constant 2 : index
      %c0_17 = arith.constant 0 : index
      %c0_18 = arith.constant 0 : index
      %37 = vector.load %arg3[%c2, %c0_17, %c0_18] : memref<10x8x128xf32, #tpu.memory_space<vmem>>, vector<1x8x128xf32>
      %38 = vector.shape_cast %37 : vector<1x8x128xf32> to vector<8x128xf32>
      %39 = vector.shape_cast %38 : vector<8x128xf32> to vector<1x8x128xf32>
      %40 = vector.broadcast %39 : vector<1x8x128xf32> to vector<3x8x128xf32>
      %41 = arith.mulf %4, %40 : vector<3x8x128xf32>
      %c2_19 = arith.constant 2 : index
      %c0_20 = arith.constant 0 : index
      %c0_21 = arith.constant 0 : index
      %42 = vector.load %arg4[%c2_19, %c0_20, %c0_21] : memref<10x8x128xf32, #tpu.memory_space<vmem>>, vector<1x8x128xf32>
      %43 = vector.shape_cast %42 : vector<1x8x128xf32> to vector<8x128xf32>
      %44 = vector.shape_cast %43 : vector<8x128xf32> to vector<1x8x128xf32>
      %45 = vector.broadcast %44 : vector<1x8x128xf32> to vector<3x8x128xf32>
      %46 = arith.addf %41, %45 : vector<3x8x128xf32>
      %cst_22 = arith.constant 0.000000e+00 : f32
      %47 = vector.broadcast %cst_22 : f32 to vector<3x8x128xf32>
      %48 = arith.cmpf ogt, %46, %47 : vector<3x8x128xf32>
      %c2_23 = arith.constant 2 : index
      %49 = memref.load %arg5[%c2_23] : memref<10xf32, #tpu.memory_space<smem>>
      %50 = vector.broadcast %49 : f32 to vector<3x8x128xf32>
      %51 = arith.mulf %50, %46 : vector<3x8x128xf32>
      %52 = arith.select %48, %46, %51 : vector<3x8x128xi1>, vector<3x8x128xf32>
      %c3 = arith.constant 3 : index
      %c0_24 = arith.constant 0 : index
      %c0_25 = arith.constant 0 : index
      %53 = vector.load %arg3[%c3, %c0_24, %c0_25] : memref<10x8x128xf32, #tpu.memory_space<vmem>>, vector<1x8x128xf32>
      %54 = vector.shape_cast %53 : vector<1x8x128xf32> to vector<8x128xf32>
      %55 = vector.shape_cast %54 : vector<8x128xf32> to vector<1x8x128xf32>
      %56 = vector.broadcast %55 : vector<1x8x128xf32> to vector<3x8x128xf32>
      %57 = arith.mulf %4, %56 : vector<3x8x128xf32>
      %c3_26 = arith.constant 3 : index
      %c0_27 = arith.constant 0 : index
      %c0_28 = arith.constant 0 : index
      %58 = vector.load %arg4[%c3_26, %c0_27, %c0_28] : memref<10x8x128xf32, #tpu.memory_space<vmem>>, vector<1x8x128xf32>
      %59 = vector.shape_cast %58 : vector<1x8x128xf32> to vector<8x128xf32>
      %60 = vector.shape_cast %59 : vector<8x128xf32> to vector<1x8x128xf32>
      %61 = vector.broadcast %60 : vector<1x8x128xf32> to vector<3x8x128xf32>
      %62 = arith.addf %57, %61 : vector<3x8x128xf32>
      %cst_29 = arith.constant 0.000000e+00 : f32
      %63 = vector.broadcast %cst_29 : f32 to vector<3x8x128xf32>
      %64 = arith.cmpf ogt, %62, %63 : vector<3x8x128xf32>
      %c3_30 = arith.constant 3 : index
      %65 = memref.load %arg5[%c3_30] : memref<10xf32, #tpu.memory_space<smem>>
      %66 = vector.broadcast %65 : f32 to vector<3x8x128xf32>
      %67 = arith.mulf %66, %62 : vector<3x8x128xf32>
      %68 = arith.select %64, %62, %67 : vector<3x8x128xi1>, vector<3x8x128xf32>
      %c4 = arith.constant 4 : index
      %c0_31 = arith.constant 0 : index
      %c0_32 = arith.constant 0 : index
      %69 = vector.load %arg3[%c4, %c0_31, %c0_32] : memref<10x8x128xf32, #tpu.memory_space<vmem>>, vector<1x8x128xf32>
      %70 = vector.shape_cast %69 : vector<1x8x128xf32> to vector<8x128xf32>
      %71 = vector.shape_cast %70 : vector<8x128xf32> to vector<1x8x128xf32>
      %72 = vector.broadcast %71 : vector<1x8x128xf32> to vector<3x8x128xf32>
      %73 = arith.mulf %4, %72 : vector<3x8x128xf32>
      %c4_33 = arith.constant 4 : index
      %c0_34 = arith.constant 0 : index
      %c0_35 = arith.constant 0 : index
      %74 = vector.load %arg4[%c4_33, %c0_34, %c0_35] : memref<10x8x128xf32, #tpu.memory_space<vmem>>, vector<1x8x128xf32>
      %75 = vector.shape_cast %74 : vector<1x8x128xf32> to vector<8x128xf32>
      %76 = vector.shape_cast %75 : vector<8x128xf32> to vector<1x8x128xf32>
      %77 = vector.broadcast %76 : vector<1x8x128xf32> to vector<3x8x128xf32>
      %78 = arith.addf %73, %77 : vector<3x8x128xf32>
      %cst_36 = arith.constant 0.000000e+00 : f32
      %79 = vector.broadcast %cst_36 : f32 to vector<3x8x128xf32>
      %80 = arith.cmpf ogt, %78, %79 : vector<3x8x128xf32>
      %c4_37 = arith.constant 4 : index
      %81 = memref.load %arg5[%c4_37] : memref<10xf32, #tpu.memory_space<smem>>
      %82 = vector.broadcast %81 : f32 to vector<3x8x128xf32>
      %83 = arith.mulf %82, %78 : vector<3x8x128xf32>
      %84 = arith.select %80, %78, %83 : vector<3x8x128xi1>, vector<3x8x128xf32>
      %c5 = arith.constant 5 : index
      %c0_38 = arith.constant 0 : index
      %c0_39 = arith.constant 0 : index
      %85 = vector.load %arg3[%c5, %c0_38, %c0_39] : memref<10x8x128xf32, #tpu.memory_space<vmem>>, vector<1x8x128xf32>
      %86 = vector.shape_cast %85 : vector<1x8x128xf32> to vector<8x128xf32>
      %87 = vector.shape_cast %86 : vector<8x128xf32> to vector<1x8x128xf32>
      %88 = vector.broadcast %87 : vector<1x8x128xf32> to vector<3x8x128xf32>
      %89 = arith.mulf %4, %88 : vector<3x8x128xf32>
      %c5_40 = arith.constant 5 : index
      %c0_41 = arith.constant 0 : index
      %c0_42 = arith.constant 0 : index
      %90 = vector.load %arg4[%c5_40, %c0_41, %c0_42] : memref<10x8x128xf32, #tpu.memory_space<vmem>>, vector<1x8x128xf32>
      %91 = vector.shape_cast %90 : vector<1x8x128xf32> to vector<8x128xf32>
      %92 = vector.shape_cast %91 : vector<8x128xf32> to vector<1x8x128xf32>
      %93 = vector.broadcast %92 : vector<1x8x128xf32> to vector<3x8x128xf32>
      %94 = arith.addf %89, %93 : vector<3x8x128xf32>
      %cst_43 = arith.constant 0.000000e+00 : f32
      %95 = vector.broadcast %cst_43 : f32 to vector<3x8x128xf32>
      %96 = arith.cmpf ogt, %94, %95 : vector<3x8x128xf32>
      %c5_44 = arith.constant 5 : index
      %97 = memref.load %arg5[%c5_44] : memref<10xf32, #tpu.memory_space<smem>>
      %98 = vector.broadcast %97 : f32 to vector<3x8x128xf32>
      %99 = arith.mulf %98, %94 : vector<3x8x128xf32>
      %100 = arith.select %96, %94, %99 : vector<3x8x128xi1>, vector<3x8x128xf32>
      %c6 = arith.constant 6 : index
      %c0_45 = arith.constant 0 : index
      %c0_46 = arith.constant 0 : index
      %101 = vector.load %arg3[%c6, %c0_45, %c0_46] : memref<10x8x128xf32, #tpu.memory_space<vmem>>, vector<1x8x128xf32>
      %102 = vector.shape_cast %101 : vector<1x8x128xf32> to vector<8x128xf32>
      %103 = vector.shape_cast %102 : vector<8x128xf32> to vector<1x8x128xf32>
      %104 = vector.broadcast %103 : vector<1x8x128xf32> to vector<3x8x128xf32>
      %105 = arith.mulf %4, %104 : vector<3x8x128xf32>
      %c6_47 = arith.constant 6 : index
      %c0_48 = arith.constant 0 : index
      %c0_49 = arith.constant 0 : index
      %106 = vector.load %arg4[%c6_47, %c0_48, %c0_49] : memref<10x8x128xf32, #tpu.memory_space<vmem>>, vector<1x8x128xf32>
      %107 = vector.shape_cast %106 : vector<1x8x128xf32> to vector<8x128xf32>
      %108 = vector.shape_cast %107 : vector<8x128xf32> to vector<1x8x128xf32>
      %109 = vector.broadcast %108 : vector<1x8x128xf32> to vector<3x8x128xf32>
      %110 = arith.addf %105, %109 : vector<3x8x128xf32>
      %cst_50 = arith.constant 0.000000e+00 : f32
      %111 = vector.broadcast %cst_50 : f32 to vector<3x8x128xf32>
      %112 = arith.cmpf ogt, %110, %111 : vector<3x8x128xf32>
      %c6_51 = arith.constant 6 : index
      %113 = memref.load %arg5[%c6_51] : memref<10xf32, #tpu.memory_space<smem>>
      %114 = vector.broadcast %113 : f32 to vector<3x8x128xf32>
      %115 = arith.mulf %114, %110 : vector<3x8x128xf32>
      %116 = arith.select %112, %110, %115 : vector<3x8x128xi1>, vector<3x8x128xf32>
      %c7 = arith.constant 7 : index
      %c0_52 = arith.constant 0 : index
      %c0_53 = arith.constant 0 : index
      %117 = vector.load %arg3[%c7, %c0_52, %c0_53] : memref<10x8x128xf32, #tpu.memory_space<vmem>>, vector<1x8x128xf32>
      %118 = vector.shape_cast %117 : vector<1x8x128xf32> to vector<8x128xf32>
      %119 = vector.shape_cast %118 : vector<8x128xf32> to vector<1x8x128xf32>
      %120 = vector.broadcast %119 : vector<1x8x128xf32> to vector<3x8x128xf32>
      %121 = arith.mulf %4, %120 : vector<3x8x128xf32>
      %c7_54 = arith.constant 7 : index
      %c0_55 = arith.constant 0 : index
      %c0_56 = arith.constant 0 : index
      %122 = vector.load %arg4[%c7_54, %c0_55, %c0_56] : memref<10x8x128xf32, #tpu.memory_space<vmem>>, vector<1x8x128xf32>
      %123 = vector.shape_cast %122 : vector<1x8x128xf32> to vector<8x128xf32>
      %124 = vector.shape_cast %123 : vector<8x128xf32> to vector<1x8x128xf32>
      %125 = vector.broadcast %124 : vector<1x8x128xf32> to vector<3x8x128xf32>
      %126 = arith.addf %121, %125 : vector<3x8x128xf32>
      %cst_57 = arith.constant 0.000000e+00 : f32
      %127 = vector.broadcast %cst_57 : f32 to vector<3x8x128xf32>
      %128 = arith.cmpf ogt, %126, %127 : vector<3x8x128xf32>
      %c7_58 = arith.constant 7 : index
      %129 = memref.load %arg5[%c7_58] : memref<10xf32, #tpu.memory_space<smem>>
      %130 = vector.broadcast %129 : f32 to vector<3x8x128xf32>
      %131 = arith.mulf %130, %126 : vector<3x8x128xf32>
      %132 = arith.select %128, %126, %131 : vector<3x8x128xi1>, vector<3x8x128xf32>
      %c8 = arith.constant 8 : index
      %c0_59 = arith.constant 0 : index
      %c0_60 = arith.constant 0 : index
      %133 = vector.load %arg3[%c8, %c0_59, %c0_60] : memref<10x8x128xf32, #tpu.memory_space<vmem>>, vector<1x8x128xf32>
      %134 = vector.shape_cast %133 : vector<1x8x128xf32> to vector<8x128xf32>
      %135 = vector.shape_cast %134 : vector<8x128xf32> to vector<1x8x128xf32>
      %136 = vector.broadcast %135 : vector<1x8x128xf32> to vector<3x8x128xf32>
      %137 = arith.mulf %4, %136 : vector<3x8x128xf32>
      %c8_61 = arith.constant 8 : index
      %c0_62 = arith.constant 0 : index
      %c0_63 = arith.constant 0 : index
      %138 = vector.load %arg4[%c8_61, %c0_62, %c0_63] : memref<10x8x128xf32, #tpu.memory_space<vmem>>, vector<1x8x128xf32>
      %139 = vector.shape_cast %138 : vector<1x8x128xf32> to vector<8x128xf32>
      %140 = vector.shape_cast %139 : vector<8x128xf32> to vector<1x8x128xf32>
      %141 = vector.broadcast %140 : vector<1x8x128xf32> to vector<3x8x128xf32>
      %142 = arith.addf %137, %141 : vector<3x8x128xf32>
      %cst_64 = arith.constant 0.000000e+00 : f32
      %143 = vector.broadcast %cst_64 : f32 to vector<3x8x128xf32>
      %144 = arith.cmpf ogt, %142, %143 : vector<3x8x128xf32>
      %c8_65 = arith.constant 8 : index
      %145 = memref.load %arg5[%c8_65] : memref<10xf32, #tpu.memory_space<smem>>
      %146 = vector.broadcast %145 : f32 to vector<3x8x128xf32>
      %147 = arith.mulf %146, %142 : vector<3x8x128xf32>
      %148 = arith.select %144, %142, %147 : vector<3x8x128xi1>, vector<3x8x128xf32>
      %c9 = arith.constant 9 : index
      %c0_66 = arith.constant 0 : index
      %c0_67 = arith.constant 0 : index
      %149 = vector.load %arg3[%c9, %c0_66, %c0_67] : memref<10x8x128xf32, #tpu.memory_space<vmem>>, vector<1x8x128xf32>
      %150 = vector.shape_cast %149 : vector<1x8x128xf32> to vector<8x128xf32>
      %151 = vector.shape_cast %150 : vector<8x128xf32> to vector<1x8x128xf32>
      %152 = vector.broadcast %151 : vector<1x8x128xf32> to vector<3x8x128xf32>
      %153 = arith.mulf %4, %152 : vector<3x8x128xf32>
      %c9_68 = arith.constant 9 : index
      %c0_69 = arith.constant 0 : index
      %c0_70 = arith.constant 0 : index
      %154 = vector.load %arg4[%c9_68, %c0_69, %c0_70] : memref<10x8x128xf32, #tpu.memory_space<vmem>>, vector<1x8x128xf32>
      %155 = vector.shape_cast %154 : vector<1x8x128xf32> to vector<8x128xf32>
      %156 = vector.shape_cast %155 : vector<8x128xf32> to vector<1x8x128xf32>
      %157 = vector.broadcast %156 : vector<1x8x128xf32> to vector<3x8x128xf32>
      %158 = arith.addf %153, %157 : vector<3x8x128xf32>
      %cst_71 = arith.constant 0.000000e+00 : f32
      %159 = vector.broadcast %cst_71 : f32 to vector<3x8x128xf32>
      %160 = arith.cmpf ogt, %158, %159 : vector<3x8x128xf32>
      %c9_72 = arith.constant 9 : index
      %161 = memref.load %arg5[%c9_72] : memref<10xf32, #tpu.memory_space<smem>>
      %162 = vector.broadcast %161 : f32 to vector<3x8x128xf32>
      %163 = arith.mulf %162, %158 : vector<3x8x128xf32>
      %164 = arith.select %160, %158, %163 : vector<3x8x128xi1>, vector<3x8x128xf32>
      %c0_73 = arith.constant 0 : index
      %c0_74 = arith.constant 0 : index
      %c0_75 = arith.constant 0 : index
      %165 = vector.load %arg10[%c0_73, %c0_74, %c0_75] : memref<1x8x128xf32, #tpu.memory_space<vmem>>, vector<1x8x128xf32>
      %c0_76 = arith.constant 0 : index
      %c0_77 = arith.constant 0 : index
      %c0_78 = arith.constant 0 : index
      %166 = vector.load %arg7[%c0_76, %c0_77, %c0_78] : memref<10x8x128xf32, #tpu.memory_space<vmem>>, vector<1x8x128xf32>
      %167 = vector.shape_cast %166 : vector<1x8x128xf32> to vector<8x128xf32>
      %168 = vector.shape_cast %167 : vector<8x128xf32> to vector<1x8x128xf32>
      %c0_79 = arith.constant 0 : index
      %c0_80 = arith.constant 0 : index
      %c0_81 = arith.constant 0 : index
      %c0_82 = arith.constant 0 : index
      %169 = vector.load %arg6[%c0_79, %c0_80, %c0_81, %c0_82] : memref<10x10x8x128xf32, #tpu.memory_space<vmem>>, vector<1x1x8x128xf32>
      %170 = vector.shape_cast %169 : vector<1x1x8x128xf32> to vector<8x128xf32>
      %171 = vector.shape_cast %170 : vector<8x128xf32> to vector<1x8x128xf32>
      %172 = vector.broadcast %171 : vector<1x8x128xf32> to vector<3x8x128xf32>
      %173 = arith.mulf %172, %20 : vector<3x8x128xf32>
      %174 = vector.broadcast %168 : vector<1x8x128xf32> to vector<3x8x128xf32>
      %175 = arith.addf %174, %173 : vector<3x8x128xf32>
      %c0_83 = arith.constant 0 : index
      %c1_84 = arith.constant 1 : index
      %c0_85 = arith.constant 0 : index
      %c0_86 = arith.constant 0 : index
      %176 = vector.load %arg6[%c0_83, %c1_84, %c0_85, %c0_86] : memref<10x10x8x128xf32, #tpu.memory_space<vmem>>, vector<1x1x8x128xf32>
      %177 = vector.shape_cast %176 : vector<1x1x8x128xf32> to vector<8x128xf32>
      %178 = vector.shape_cast %177 : vector<8x128xf32> to vector<1x8x128xf32>
      %179 = vector.broadcast %178 : vector<1x8x128xf32> to vector<3x8x128xf32>
      %180 = arith.mulf %179, %36 : vector<3x8x128xf32>
      %181 = arith.addf %175, %180 : vector<3x8x128xf32>
      %c0_87 = arith.constant 0 : index
      %c2_88 = arith.constant 2 : index
      %c0_89 = arith.constant 0 : index
      %c0_90 = arith.constant 0 : index
      %182 = vector.load %arg6[%c0_87, %c2_88, %c0_89, %c0_90] : memref<10x10x8x128xf32, #tpu.memory_space<vmem>>, vector<1x1x8x128xf32>
      %183 = vector.shape_cast %182 : vector<1x1x8x128xf32> to vector<8x128xf32>
      %184 = vector.shape_cast %183 : vector<8x128xf32> to vector<1x8x128xf32>
      %185 = vector.broadcast %184 : vector<1x8x128xf32> to vector<3x8x128xf32>
      %186 = arith.mulf %185, %52 : vector<3x8x128xf32>
      %187 = arith.addf %181, %186 : vector<3x8x128xf32>
      %c0_91 = arith.constant 0 : index
      %c3_92 = arith.constant 3 : index
      %c0_93 = arith.constant 0 : index
      %c0_94 = arith.constant 0 : index
      %188 = vector.load %arg6[%c0_91, %c3_92, %c0_93, %c0_94] : memref<10x10x8x128xf32, #tpu.memory_space<vmem>>, vector<1x1x8x128xf32>
      %189 = vector.shape_cast %188 : vector<1x1x8x128xf32> to vector<8x128xf32>
      %190 = vector.shape_cast %189 : vector<8x128xf32> to vector<1x8x128xf32>
      %191 = vector.broadcast %190 : vector<1x8x128xf32> to vector<3x8x128xf32>
      %192 = arith.mulf %191, %68 : vector<3x8x128xf32>
      %193 = arith.addf %187, %192 : vector<3x8x128xf32>
      %c0_95 = arith.constant 0 : index
      %c4_96 = arith.constant 4 : index
      %c0_97 = arith.constant 0 : index
      %c0_98 = arith.constant 0 : index
      %194 = vector.load %arg6[%c0_95, %c4_96, %c0_97, %c0_98] : memref<10x10x8x128xf32, #tpu.memory_space<vmem>>, vector<1x1x8x128xf32>
      %195 = vector.shape_cast %194 : vector<1x1x8x128xf32> to vector<8x128xf32>
      %196 = vector.shape_cast %195 : vector<8x128xf32> to vector<1x8x128xf32>
      %197 = vector.broadcast %196 : vector<1x8x128xf32> to vector<3x8x128xf32>
      %198 = arith.mulf %197, %84 : vector<3x8x128xf32>
      %199 = arith.addf %193, %198 : vector<3x8x128xf32>
      %c0_99 = arith.constant 0 : index
      %c5_100 = arith.constant 5 : index
      %c0_101 = arith.constant 0 : index
      %c0_102 = arith.constant 0 : index
      %200 = vector.load %arg6[%c0_99, %c5_100, %c0_101, %c0_102] : memref<10x10x8x128xf32, #tpu.memory_space<vmem>>, vector<1x1x8x128xf32>
      %201 = vector.shape_cast %200 : vector<1x1x8x128xf32> to vector<8x128xf32>
      %202 = vector.shape_cast %201 : vector<8x128xf32> to vector<1x8x128xf32>
      %203 = vector.broadcast %202 : vector<1x8x128xf32> to vector<3x8x128xf32>
      %204 = arith.mulf %203, %100 : vector<3x8x128xf32>
      %205 = arith.addf %199, %204 : vector<3x8x128xf32>
      %c0_103 = arith.constant 0 : index
      %c6_104 = arith.constant 6 : index
      %c0_105 = arith.constant 0 : index
      %c0_106 = arith.constant 0 : index
      %206 = vector.load %arg6[%c0_103, %c6_104, %c0_105, %c0_106] : memref<10x10x8x128xf32, #tpu.memory_space<vmem>>, vector<1x1x8x128xf32>
      %207 = vector.shape_cast %206 : vector<1x1x8x128xf32> to vector<8x128xf32>
      %208 = vector.shape_cast %207 : vector<8x128xf32> to vector<1x8x128xf32>
      %209 = vector.broadcast %208 : vector<1x8x128xf32> to vector<3x8x128xf32>
      %210 = arith.mulf %209, %116 : vector<3x8x128xf32>
      %211 = arith.addf %205, %210 : vector<3x8x128xf32>
      %c0_107 = arith.constant 0 : index
      %c7_108 = arith.constant 7 : index
      %c0_109 = arith.constant 0 : index
      %c0_110 = arith.constant 0 : index
      %212 = vector.load %arg6[%c0_107, %c7_108, %c0_109, %c0_110] : memref<10x10x8x128xf32, #tpu.memory_space<vmem>>, vector<1x1x8x128xf32>
      %213 = vector.shape_cast %212 : vector<1x1x8x128xf32> to vector<8x128xf32>
      %214 = vector.shape_cast %213 : vector<8x128xf32> to vector<1x8x128xf32>
      %215 = vector.broadcast %214 : vector<1x8x128xf32> to vector<3x8x128xf32>
      %216 = arith.mulf %215, %132 : vector<3x8x128xf32>
      %217 = arith.addf %211, %216 : vector<3x8x128xf32>
      %c0_111 = arith.constant 0 : index
      %c8_112 = arith.constant 8 : index
      %c0_113 = arith.constant 0 : index
      %c0_114 = arith.constant 0 : index
      %218 = vector.load %arg6[%c0_111, %c8_112, %c0_113, %c0_114] : memref<10x10x8x128xf32, #tpu.memory_space<vmem>>, vector<1x1x8x128xf32>
      %219 = vector.shape_cast %218 : vector<1x1x8x128xf32> to vector<8x128xf32>
      %220 = vector.shape_cast %219 : vector<8x128xf32> to vector<1x8x128xf32>
      %221 = vector.broadcast %220 : vector<1x8x128xf32> to vector<3x8x128xf32>
      %222 = arith.mulf %221, %148 : vector<3x8x128xf32>
      %223 = arith.addf %217, %222 : vector<3x8x128xf32>
      %c0_115 = arith.constant 0 : index
      %c9_116 = arith.constant 9 : index
      %c0_117 = arith.constant 0 : index
      %c0_118 = arith.constant 0 : index
      %224 = vector.load %arg6[%c0_115, %c9_116, %c0_117, %c0_118] : memref<10x10x8x128xf32, #tpu.memory_space<vmem>>, vector<1x1x8x128xf32>
      %225 = vector.shape_cast %224 : vector<1x1x8x128xf32> to vector<8x128xf32>
      %226 = vector.shape_cast %225 : vector<8x128xf32> to vector<1x8x128xf32>
      %227 = vector.broadcast %226 : vector<1x8x128xf32> to vector<3x8x128xf32>
      %228 = arith.mulf %227, %164 : vector<3x8x128xf32>
      %229 = arith.addf %223, %228 : vector<3x8x128xf32>
      %cst_119 = arith.constant 0.000000e+00 : f32
      %230 = vector.broadcast %cst_119 : f32 to vector<3x8x128xf32>
      %231 = arith.cmpf ogt, %229, %230 : vector<3x8x128xf32>
      %c0_120 = arith.constant 0 : index
      %232 = memref.load %arg8[%c0_120] : memref<10xf32, #tpu.memory_space<smem>>
      %233 = vector.broadcast %232 : f32 to vector<3x8x128xf32>
      %234 = arith.mulf %233, %229 : vector<3x8x128xf32>
      %235 = arith.select %231, %229, %234 : vector<3x8x128xi1>, vector<3x8x128xf32>
      %c0_121 = arith.constant 0 : index
      %c0_122 = arith.constant 0 : index
      %c0_123 = arith.constant 0 : index
      %236 = vector.load %arg9[%c0_121, %c0_122, %c0_123] : memref<10x8x128xf32, #tpu.memory_space<vmem>>, vector<1x8x128xf32>
      %237 = vector.shape_cast %236 : vector<1x8x128xf32> to vector<8x128xf32>
      %238 = vector.shape_cast %237 : vector<8x128xf32> to vector<1x8x128xf32>
      %239 = vector.broadcast %238 : vector<1x8x128xf32> to vector<3x8x128xf32>
      %240 = arith.mulf %239, %235 : vector<3x8x128xf32>
      %241 = vector.broadcast %165 : vector<1x8x128xf32> to vector<3x8x128xf32>
      %242 = arith.addf %241, %240 : vector<3x8x128xf32>
      %c1_124 = arith.constant 1 : index
      %c0_125 = arith.constant 0 : index
      %c0_126 = arith.constant 0 : index
      %243 = vector.load %arg7[%c1_124, %c0_125, %c0_126] : memref<10x8x128xf32, #tpu.memory_space<vmem>>, vector<1x8x128xf32>
      %244 = vector.shape_cast %243 : vector<1x8x128xf32> to vector<8x128xf32>
      %245 = vector.shape_cast %244 : vector<8x128xf32> to vector<1x8x128xf32>
      %c1_127 = arith.constant 1 : index
      %c0_128 = arith.constant 0 : index
      %c0_129 = arith.constant 0 : index
      %c0_130 = arith.constant 0 : index
      %246 = vector.load %arg6[%c1_127, %c0_128, %c0_129, %c0_130] : memref<10x10x8x128xf32, #tpu.memory_space<vmem>>, vector<1x1x8x128xf32>
      %247 = vector.shape_cast %246 : vector<1x1x8x128xf32> to vector<8x128xf32>
      %248 = vector.shape_cast %247 : vector<8x128xf32> to vector<1x8x128xf32>
      %249 = vector.broadcast %248 : vector<1x8x128xf32> to vector<3x8x128xf32>
      %250 = arith.mulf %249, %20 : vector<3x8x128xf32>
      %251 = vector.broadcast %245 : vector<1x8x128xf32> to vector<3x8x128xf32>
      %252 = arith.addf %251, %250 : vector<3x8x128xf32>
      %c1_131 = arith.constant 1 : index
      %c1_132 = arith.constant 1 : index
      %c0_133 = arith.constant 0 : index
      %c0_134 = arith.constant 0 : index
      %253 = vector.load %arg6[%c1_131, %c1_132, %c0_133, %c0_134] : memref<10x10x8x128xf32, #tpu.memory_space<vmem>>, vector<1x1x8x128xf32>
      %254 = vector.shape_cast %253 : vector<1x1x8x128xf32> to vector<8x128xf32>
      %255 = vector.shape_cast %254 : vector<8x128xf32> to vector<1x8x128xf32>
      %256 = vector.broadcast %255 : vector<1x8x128xf32> to vector<3x8x128xf32>
      %257 = arith.mulf %256, %36 : vector<3x8x128xf32>
      %258 = arith.addf %252, %257 : vector<3x8x128xf32>
      %c1_135 = arith.constant 1 : index
      %c2_136 = arith.constant 2 : index
      %c0_137 = arith.constant 0 : index
      %c0_138 = arith.constant 0 : index
      %259 = vector.load %arg6[%c1_135, %c2_136, %c0_137, %c0_138] : memref<10x10x8x128xf32, #tpu.memory_space<vmem>>, vector<1x1x8x128xf32>
      %260 = vector.shape_cast %259 : vector<1x1x8x128xf32> to vector<8x128xf32>
      %261 = vector.shape_cast %260 : vector<8x128xf32> to vector<1x8x128xf32>
      %262 = vector.broadcast %261 : vector<1x8x128xf32> to vector<3x8x128xf32>
      %263 = arith.mulf %262, %52 : vector<3x8x128xf32>
      %264 = arith.addf %258, %263 : vector<3x8x128xf32>
      %c1_139 = arith.constant 1 : index
      %c3_140 = arith.constant 3 : index
      %c0_141 = arith.constant 0 : index
      %c0_142 = arith.constant 0 : index
      %265 = vector.load %arg6[%c1_139, %c3_140, %c0_141, %c0_142] : memref<10x10x8x128xf32, #tpu.memory_space<vmem>>, vector<1x1x8x128xf32>
      %266 = vector.shape_cast %265 : vector<1x1x8x128xf32> to vector<8x128xf32>
      %267 = vector.shape_cast %266 : vector<8x128xf32> to vector<1x8x128xf32>
      %268 = vector.broadcast %267 : vector<1x8x128xf32> to vector<3x8x128xf32>
      %269 = arith.mulf %268, %68 : vector<3x8x128xf32>
      %270 = arith.addf %264, %269 : vector<3x8x128xf32>
      %c1_143 = arith.constant 1 : index
      %c4_144 = arith.constant 4 : index
      %c0_145 = arith.constant 0 : index
      %c0_146 = arith.constant 0 : index
      %271 = vector.load %arg6[%c1_143, %c4_144, %c0_145, %c0_146] : memref<10x10x8x128xf32, #tpu.memory_space<vmem>>, vector<1x1x8x128xf32>
      %272 = vector.shape_cast %271 : vector<1x1x8x128xf32> to vector<8x128xf32>
      %273 = vector.shape_cast %272 : vector<8x128xf32> to vector<1x8x128xf32>
      %274 = vector.broadcast %273 : vector<1x8x128xf32> to vector<3x8x128xf32>
      %275 = arith.mulf %274, %84 : vector<3x8x128xf32>
      %276 = arith.addf %270, %275 : vector<3x8x128xf32>
      %c1_147 = arith.constant 1 : index
      %c5_148 = arith.constant 5 : index
      %c0_149 = arith.constant 0 : index
      %c0_150 = arith.constant 0 : index
      %277 = vector.load %arg6[%c1_147, %c5_148, %c0_149, %c0_150] : memref<10x10x8x128xf32, #tpu.memory_space<vmem>>, vector<1x1x8x128xf32>
      %278 = vector.shape_cast %277 : vector<1x1x8x128xf32> to vector<8x128xf32>
      %279 = vector.shape_cast %278 : vector<8x128xf32> to vector<1x8x128xf32>
      %280 = vector.broadcast %279 : vector<1x8x128xf32> to vector<3x8x128xf32>
      %281 = arith.mulf %280, %100 : vector<3x8x128xf32>
      %282 = arith.addf %276, %281 : vector<3x8x128xf32>
      %c1_151 = arith.constant 1 : index
      %c6_152 = arith.constant 6 : index
      %c0_153 = arith.constant 0 : index
      %c0_154 = arith.constant 0 : index
      %283 = vector.load %arg6[%c1_151, %c6_152, %c0_153, %c0_154] : memref<10x10x8x128xf32, #tpu.memory_space<vmem>>, vector<1x1x8x128xf32>
      %284 = vector.shape_cast %283 : vector<1x1x8x128xf32> to vector<8x128xf32>
      %285 = vector.shape_cast %284 : vector<8x128xf32> to vector<1x8x128xf32>
      %286 = vector.broadcast %285 : vector<1x8x128xf32> to vector<3x8x128xf32>
      %287 = arith.mulf %286, %116 : vector<3x8x128xf32>
      %288 = arith.addf %282, %287 : vector<3x8x128xf32>
      %c1_155 = arith.constant 1 : index
      %c7_156 = arith.constant 7 : index
      %c0_157 = arith.constant 0 : index
      %c0_158 = arith.constant 0 : index
      %289 = vector.load %arg6[%c1_155, %c7_156, %c0_157, %c0_158] : memref<10x10x8x128xf32, #tpu.memory_space<vmem>>, vector<1x1x8x128xf32>
      %290 = vector.shape_cast %289 : vector<1x1x8x128xf32> to vector<8x128xf32>
      %291 = vector.shape_cast %290 : vector<8x128xf32> to vector<1x8x128xf32>
      %292 = vector.broadcast %291 : vector<1x8x128xf32> to vector<3x8x128xf32>
      %293 = arith.mulf %292, %132 : vector<3x8x128xf32>
      %294 = arith.addf %288, %293 : vector<3x8x128xf32>
      %c1_159 = arith.constant 1 : index
      %c8_160 = arith.constant 8 : index
      %c0_161 = arith.constant 0 : index
      %c0_162 = arith.constant 0 : index
      %295 = vector.load %arg6[%c1_159, %c8_160, %c0_161, %c0_162] : memref<10x10x8x128xf32, #tpu.memory_space<vmem>>, vector<1x1x8x128xf32>
      %296 = vector.shape_cast %295 : vector<1x1x8x128xf32> to vector<8x128xf32>
      %297 = vector.shape_cast %296 : vector<8x128xf32> to vector<1x8x128xf32>
      %298 = vector.broadcast %297 : vector<1x8x128xf32> to vector<3x8x128xf32>
      %299 = arith.mulf %298, %148 : vector<3x8x128xf32>
      %300 = arith.addf %294, %299 : vector<3x8x128xf32>
      %c1_163 = arith.constant 1 : index
      %c9_164 = arith.constant 9 : index
      %c0_165 = arith.constant 0 : index
      %c0_166 = arith.constant 0 : index
      %301 = vector.load %arg6[%c1_163, %c9_164, %c0_165, %c0_166] : memref<10x10x8x128xf32, #tpu.memory_space<vmem>>, vector<1x1x8x128xf32>
      %302 = vector.shape_cast %301 : vector<1x1x8x128xf32> to vector<8x128xf32>
      %303 = vector.shape_cast %302 : vector<8x128xf32> to vector<1x8x128xf32>
      %304 = vector.broadcast %303 : vector<1x8x128xf32> to vector<3x8x128xf32>
      %305 = arith.mulf %304, %164 : vector<3x8x128xf32>
      %306 = arith.addf %300, %305 : vector<3x8x128xf32>
      %cst_167 = arith.constant 0.000000e+00 : f32
      %307 = vector.broadcast %cst_167 : f32 to vector<3x8x128xf32>
      %308 = arith.cmpf ogt, %306, %307 : vector<3x8x128xf32>
      %c1_168 = arith.constant 1 : index
      %309 = memref.load %arg8[%c1_168] : memref<10xf32, #tpu.memory_space<smem>>
      %310 = vector.broadcast %309 : f32 to vector<3x8x128xf32>
      %311 = arith.mulf %310, %306 : vector<3x8x128xf32>
      %312 = arith.select %308, %306, %311 : vector<3x8x128xi1>, vector<3x8x128xf32>
      %c1_169 = arith.constant 1 : index
      %c0_170 = arith.constant 0 : index
      %c0_171 = arith.constant 0 : index
      %313 = vector.load %arg9[%c1_169, %c0_170, %c0_171] : memref<10x8x128xf32, #tpu.memory_space<vmem>>, vector<1x8x128xf32>
      %314 = vector.shape_cast %313 : vector<1x8x128xf32> to vector<8x128xf32>
      %315 = vector.shape_cast %314 : vector<8x128xf32> to vector<1x8x128xf32>
      %316 = vector.broadcast %315 : vector<1x8x128xf32> to vector<3x8x128xf32>
      %317 = arith.mulf %316, %312 : vector<3x8x128xf32>
      %318 = arith.addf %242, %317 : vector<3x8x128xf32>
      %c2_172 = arith.constant 2 : index
      %c0_173 = arith.constant 0 : index
      %c0_174 = arith.constant 0 : index
      %319 = vector.load %arg7[%c2_172, %c0_173, %c0_174] : memref<10x8x128xf32, #tpu.memory_space<vmem>>, vector<1x8x128xf32>
      %320 = vector.shape_cast %319 : vector<1x8x128xf32> to vector<8x128xf32>
      %321 = vector.shape_cast %320 : vector<8x128xf32> to vector<1x8x128xf32>
      %c2_175 = arith.constant 2 : index
      %c0_176 = arith.constant 0 : index
      %c0_177 = arith.constant 0 : index
      %c0_178 = arith.constant 0 : index
      %322 = vector.load %arg6[%c2_175, %c0_176, %c0_177, %c0_178] : memref<10x10x8x128xf32, #tpu.memory_space<vmem>>, vector<1x1x8x128xf32>
      %323 = vector.shape_cast %322 : vector<1x1x8x128xf32> to vector<8x128xf32>
      %324 = vector.shape_cast %323 : vector<8x128xf32> to vector<1x8x128xf32>
      %325 = vector.broadcast %324 : vector<1x8x128xf32> to vector<3x8x128xf32>
      %326 = arith.mulf %325, %20 : vector<3x8x128xf32>
      %327 = vector.broadcast %321 : vector<1x8x128xf32> to vector<3x8x128xf32>
      %328 = arith.addf %327, %326 : vector<3x8x128xf32>
      %c2_179 = arith.constant 2 : index
      %c1_180 = arith.constant 1 : index
      %c0_181 = arith.constant 0 : index
      %c0_182 = arith.constant 0 : index
      %329 = vector.load %arg6[%c2_179, %c1_180, %c0_181, %c0_182] : memref<10x10x8x128xf32, #tpu.memory_space<vmem>>, vector<1x1x8x128xf32>
      %330 = vector.shape_cast %329 : vector<1x1x8x128xf32> to vector<8x128xf32>
      %331 = vector.shape_cast %330 : vector<8x128xf32> to vector<1x8x128xf32>
      %332 = vector.broadcast %331 : vector<1x8x128xf32> to vector<3x8x128xf32>
      %333 = arith.mulf %332, %36 : vector<3x8x128xf32>
      %334 = arith.addf %328, %333 : vector<3x8x128xf32>
      %c2_183 = arith.constant 2 : index
      %c2_184 = arith.constant 2 : index
      %c0_185 = arith.constant 0 : index
      %c0_186 = arith.constant 0 : index
      %335 = vector.load %arg6[%c2_183, %c2_184, %c0_185, %c0_186] : memref<10x10x8x128xf32, #tpu.memory_space<vmem>>, vector<1x1x8x128xf32>
      %336 = vector.shape_cast %335 : vector<1x1x8x128xf32> to vector<8x128xf32>
      %337 = vector.shape_cast %336 : vector<8x128xf32> to vector<1x8x128xf32>
      %338 = vector.broadcast %337 : vector<1x8x128xf32> to vector<3x8x128xf32>
      %339 = arith.mulf %338, %52 : vector<3x8x128xf32>
      %340 = arith.addf %334, %339 : vector<3x8x128xf32>
      %c2_187 = arith.constant 2 : index
      %c3_188 = arith.constant 3 : index
      %c0_189 = arith.constant 0 : index
      %c0_190 = arith.constant 0 : index
      %341 = vector.load %arg6[%c2_187, %c3_188, %c0_189, %c0_190] : memref<10x10x8x128xf32, #tpu.memory_space<vmem>>, vector<1x1x8x128xf32>
      %342 = vector.shape_cast %341 : vector<1x1x8x128xf32> to vector<8x128xf32>
      %343 = vector.shape_cast %342 : vector<8x128xf32> to vector<1x8x128xf32>
      %344 = vector.broadcast %343 : vector<1x8x128xf32> to vector<3x8x128xf32>
      %345 = arith.mulf %344, %68 : vector<3x8x128xf32>
      %346 = arith.addf %340, %345 : vector<3x8x128xf32>
      %c2_191 = arith.constant 2 : index
      %c4_192 = arith.constant 4 : index
      %c0_193 = arith.constant 0 : index
      %c0_194 = arith.constant 0 : index
      %347 = vector.load %arg6[%c2_191, %c4_192, %c0_193, %c0_194] : memref<10x10x8x128xf32, #tpu.memory_space<vmem>>, vector<1x1x8x128xf32>
      %348 = vector.shape_cast %347 : vector<1x1x8x128xf32> to vector<8x128xf32>
      %349 = vector.shape_cast %348 : vector<8x128xf32> to vector<1x8x128xf32>
      %350 = vector.broadcast %349 : vector<1x8x128xf32> to vector<3x8x128xf32>
      %351 = arith.mulf %350, %84 : vector<3x8x128xf32>
      %352 = arith.addf %346, %351 : vector<3x8x128xf32>
      %c2_195 = arith.constant 2 : index
      %c5_196 = arith.constant 5 : index
      %c0_197 = arith.constant 0 : index
      %c0_198 = arith.constant 0 : index
      %353 = vector.load %arg6[%c2_195, %c5_196, %c0_197, %c0_198] : memref<10x10x8x128xf32, #tpu.memory_space<vmem>>, vector<1x1x8x128xf32>
      %354 = vector.shape_cast %353 : vector<1x1x8x128xf32> to vector<8x128xf32>
      %355 = vector.shape_cast %354 : vector<8x128xf32> to vector<1x8x128xf32>
      %356 = vector.broadcast %355 : vector<1x8x128xf32> to vector<3x8x128xf32>
      %357 = arith.mulf %356, %100 : vector<3x8x128xf32>
      %358 = arith.addf %352, %357 : vector<3x8x128xf32>
      %c2_199 = arith.constant 2 : index
      %c6_200 = arith.constant 6 : index
      %c0_201 = arith.constant 0 : index
      %c0_202 = arith.constant 0 : index
      %359 = vector.load %arg6[%c2_199, %c6_200, %c0_201, %c0_202] : memref<10x10x8x128xf32, #tpu.memory_space<vmem>>, vector<1x1x8x128xf32>
      %360 = vector.shape_cast %359 : vector<1x1x8x128xf32> to vector<8x128xf32>
      %361 = vector.shape_cast %360 : vector<8x128xf32> to vector<1x8x128xf32>
      %362 = vector.broadcast %361 : vector<1x8x128xf32> to vector<3x8x128xf32>
      %363 = arith.mulf %362, %116 : vector<3x8x128xf32>
      %364 = arith.addf %358, %363 : vector<3x8x128xf32>
      %c2_203 = arith.constant 2 : index
      %c7_204 = arith.constant 7 : index
      %c0_205 = arith.constant 0 : index
      %c0_206 = arith.constant 0 : index
      %365 = vector.load %arg6[%c2_203, %c7_204, %c0_205, %c0_206] : memref<10x10x8x128xf32, #tpu.memory_space<vmem>>, vector<1x1x8x128xf32>
      %366 = vector.shape_cast %365 : vector<1x1x8x128xf32> to vector<8x128xf32>
      %367 = vector.shape_cast %366 : vector<8x128xf32> to vector<1x8x128xf32>
      %368 = vector.broadcast %367 : vector<1x8x128xf32> to vector<3x8x128xf32>
      %369 = arith.mulf %368, %132 : vector<3x8x128xf32>
      %370 = arith.addf %364, %369 : vector<3x8x128xf32>
      %c2_207 = arith.constant 2 : index
      %c8_208 = arith.constant 8 : index
      %c0_209 = arith.constant 0 : index
      %c0_210 = arith.constant 0 : index
      %371 = vector.load %arg6[%c2_207, %c8_208, %c0_209, %c0_210] : memref<10x10x8x128xf32, #tpu.memory_space<vmem>>, vector<1x1x8x128xf32>
      %372 = vector.shape_cast %371 : vector<1x1x8x128xf32> to vector<8x128xf32>
      %373 = vector.shape_cast %372 : vector<8x128xf32> to vector<1x8x128xf32>
      %374 = vector.broadcast %373 : vector<1x8x128xf32> to vector<3x8x128xf32>
      %375 = arith.mulf %374, %148 : vector<3x8x128xf32>
      %376 = arith.addf %370, %375 : vector<3x8x128xf32>
      %c2_211 = arith.constant 2 : index
      %c9_212 = arith.constant 9 : index
      %c0_213 = arith.constant 0 : index
      %c0_214 = arith.constant 0 : index
      %377 = vector.load %arg6[%c2_211, %c9_212, %c0_213, %c0_214] : memref<10x10x8x128xf32, #tpu.memory_space<vmem>>, vector<1x1x8x128xf32>
      %378 = vector.shape_cast %377 : vector<1x1x8x128xf32> to vector<8x128xf32>
      %379 = vector.shape_cast %378 : vector<8x128xf32> to vector<1x8x128xf32>
      %380 = vector.broadcast %379 : vector<1x8x128xf32> to vector<3x8x128xf32>
      %381 = arith.mulf %380, %164 : vector<3x8x128xf32>
      %382 = arith.addf %376, %381 : vector<3x8x128xf32>
      %cst_215 = arith.constant 0.000000e+00 : f32
      %383 = vector.broadcast %cst_215 : f32 to vector<3x8x128xf32>
      %384 = arith.cmpf ogt, %382, %383 : vector<3x8x128xf32>
      %c2_216 = arith.constant 2 : index
      %385 = memref.load %arg8[%c2_216] : memref<10xf32, #tpu.memory_space<smem>>
      %386 = vector.broadcast %385 : f32 to vector<3x8x128xf32>
      %387 = arith.mulf %386, %382 : vector<3x8x128xf32>
      %388 = arith.select %384, %382, %387 : vector<3x8x128xi1>, vector<3x8x128xf32>
      %c2_217 = arith.constant 2 : index
      %c0_218 = arith.constant 0 : index
      %c0_219 = arith.constant 0 : index
      %389 = vector.load %arg9[%c2_217, %c0_218, %c0_219] : memref<10x8x128xf32, #tpu.memory_space<vmem>>, vector<1x8x128xf32>
      %390 = vector.shape_cast %389 : vector<1x8x128xf32> to vector<8x128xf32>
      %391 = vector.shape_cast %390 : vector<8x128xf32> to vector<1x8x128xf32>
      %392 = vector.broadcast %391 : vector<1x8x128xf32> to vector<3x8x128xf32>
      %393 = arith.mulf %392, %388 : vector<3x8x128xf32>
      %394 = arith.addf %318, %393 : vector<3x8x128xf32>
      %c3_220 = arith.constant 3 : index
      %c0_221 = arith.constant 0 : index
      %c0_222 = arith.constant 0 : index
      %395 = vector.load %arg7[%c3_220, %c0_221, %c0_222] : memref<10x8x128xf32, #tpu.memory_space<vmem>>, vector<1x8x128xf32>
      %396 = vector.shape_cast %395 : vector<1x8x128xf32> to vector<8x128xf32>
      %397 = vector.shape_cast %396 : vector<8x128xf32> to vector<1x8x128xf32>
      %c3_223 = arith.constant 3 : index
      %c0_224 = arith.constant 0 : index
      %c0_225 = arith.constant 0 : index
      %c0_226 = arith.constant 0 : index
      %398 = vector.load %arg6[%c3_223, %c0_224, %c0_225, %c0_226] : memref<10x10x8x128xf32, #tpu.memory_space<vmem>>, vector<1x1x8x128xf32>
      %399 = vector.shape_cast %398 : vector<1x1x8x128xf32> to vector<8x128xf32>
      %400 = vector.shape_cast %399 : vector<8x128xf32> to vector<1x8x128xf32>
      %401 = vector.broadcast %400 : vector<1x8x128xf32> to vector<3x8x128xf32>
      %402 = arith.mulf %401, %20 : vector<3x8x128xf32>
      %403 = vector.broadcast %397 : vector<1x8x128xf32> to vector<3x8x128xf32>
      %404 = arith.addf %403, %402 : vector<3x8x128xf32>
      %c3_227 = arith.constant 3 : index
      %c1_228 = arith.constant 1 : index
      %c0_229 = arith.constant 0 : index
      %c0_230 = arith.constant 0 : index
      %405 = vector.load %arg6[%c3_227, %c1_228, %c0_229, %c0_230] : memref<10x10x8x128xf32, #tpu.memory_space<vmem>>, vector<1x1x8x128xf32>
      %406 = vector.shape_cast %405 : vector<1x1x8x128xf32> to vector<8x128xf32>
      %407 = vector.shape_cast %406 : vector<8x128xf32> to vector<1x8x128xf32>
      %408 = vector.broadcast %407 : vector<1x8x128xf32> to vector<3x8x128xf32>
      %409 = arith.mulf %408, %36 : vector<3x8x128xf32>
      %410 = arith.addf %404, %409 : vector<3x8x128xf32>
      %c3_231 = arith.constant 3 : index
      %c2_232 = arith.constant 2 : index
      %c0_233 = arith.constant 0 : index
      %c0_234 = arith.constant 0 : index
      %411 = vector.load %arg6[%c3_231, %c2_232, %c0_233, %c0_234] : memref<10x10x8x128xf32, #tpu.memory_space<vmem>>, vector<1x1x8x128xf32>
      %412 = vector.shape_cast %411 : vector<1x1x8x128xf32> to vector<8x128xf32>
      %413 = vector.shape_cast %412 : vector<8x128xf32> to vector<1x8x128xf32>
      %414 = vector.broadcast %413 : vector<1x8x128xf32> to vector<3x8x128xf32>
      %415 = arith.mulf %414, %52 : vector<3x8x128xf32>
      %416 = arith.addf %410, %415 : vector<3x8x128xf32>
      %c3_235 = arith.constant 3 : index
      %c3_236 = arith.constant 3 : index
      %c0_237 = arith.constant 0 : index
      %c0_238 = arith.constant 0 : index
      %417 = vector.load %arg6[%c3_235, %c3_236, %c0_237, %c0_238] : memref<10x10x8x128xf32, #tpu.memory_space<vmem>>, vector<1x1x8x128xf32>
      %418 = vector.shape_cast %417 : vector<1x1x8x128xf32> to vector<8x128xf32>
      %419 = vector.shape_cast %418 : vector<8x128xf32> to vector<1x8x128xf32>
      %420 = vector.broadcast %419 : vector<1x8x128xf32> to vector<3x8x128xf32>
      %421 = arith.mulf %420, %68 : vector<3x8x128xf32>
      %422 = arith.addf %416, %421 : vector<3x8x128xf32>
      %c3_239 = arith.constant 3 : index
      %c4_240 = arith.constant 4 : index
      %c0_241 = arith.constant 0 : index
      %c0_242 = arith.constant 0 : index
      %423 = vector.load %arg6[%c3_239, %c4_240, %c0_241, %c0_242] : memref<10x10x8x128xf32, #tpu.memory_space<vmem>>, vector<1x1x8x128xf32>
      %424 = vector.shape_cast %423 : vector<1x1x8x128xf32> to vector<8x128xf32>
      %425 = vector.shape_cast %424 : vector<8x128xf32> to vector<1x8x128xf32>
      %426 = vector.broadcast %425 : vector<1x8x128xf32> to vector<3x8x128xf32>
      %427 = arith.mulf %426, %84 : vector<3x8x128xf32>
      %428 = arith.addf %422, %427 : vector<3x8x128xf32>
      %c3_243 = arith.constant 3 : index
      %c5_244 = arith.constant 5 : index
      %c0_245 = arith.constant 0 : index
      %c0_246 = arith.constant 0 : index
      %429 = vector.load %arg6[%c3_243, %c5_244, %c0_245, %c0_246] : memref<10x10x8x128xf32, #tpu.memory_space<vmem>>, vector<1x1x8x128xf32>
      %430 = vector.shape_cast %429 : vector<1x1x8x128xf32> to vector<8x128xf32>
      %431 = vector.shape_cast %430 : vector<8x128xf32> to vector<1x8x128xf32>
      %432 = vector.broadcast %431 : vector<1x8x128xf32> to vector<3x8x128xf32>
      %433 = arith.mulf %432, %100 : vector<3x8x128xf32>
      %434 = arith.addf %428, %433 : vector<3x8x128xf32>
      %c3_247 = arith.constant 3 : index
      %c6_248 = arith.constant 6 : index
      %c0_249 = arith.constant 0 : index
      %c0_250 = arith.constant 0 : index
      %435 = vector.load %arg6[%c3_247, %c6_248, %c0_249, %c0_250] : memref<10x10x8x128xf32, #tpu.memory_space<vmem>>, vector<1x1x8x128xf32>
      %436 = vector.shape_cast %435 : vector<1x1x8x128xf32> to vector<8x128xf32>
      %437 = vector.shape_cast %436 : vector<8x128xf32> to vector<1x8x128xf32>
      %438 = vector.broadcast %437 : vector<1x8x128xf32> to vector<3x8x128xf32>
      %439 = arith.mulf %438, %116 : vector<3x8x128xf32>
      %440 = arith.addf %434, %439 : vector<3x8x128xf32>
      %c3_251 = arith.constant 3 : index
      %c7_252 = arith.constant 7 : index
      %c0_253 = arith.constant 0 : index
      %c0_254 = arith.constant 0 : index
      %441 = vector.load %arg6[%c3_251, %c7_252, %c0_253, %c0_254] : memref<10x10x8x128xf32, #tpu.memory_space<vmem>>, vector<1x1x8x128xf32>
      %442 = vector.shape_cast %441 : vector<1x1x8x128xf32> to vector<8x128xf32>
      %443 = vector.shape_cast %442 : vector<8x128xf32> to vector<1x8x128xf32>
      %444 = vector.broadcast %443 : vector<1x8x128xf32> to vector<3x8x128xf32>
      %445 = arith.mulf %444, %132 : vector<3x8x128xf32>
      %446 = arith.addf %440, %445 : vector<3x8x128xf32>
      %c3_255 = arith.constant 3 : index
      %c8_256 = arith.constant 8 : index
      %c0_257 = arith.constant 0 : index
      %c0_258 = arith.constant 0 : index
      %447 = vector.load %arg6[%c3_255, %c8_256, %c0_257, %c0_258] : memref<10x10x8x128xf32, #tpu.memory_space<vmem>>, vector<1x1x8x128xf32>
      %448 = vector.shape_cast %447 : vector<1x1x8x128xf32> to vector<8x128xf32>
      %449 = vector.shape_cast %448 : vector<8x128xf32> to vector<1x8x128xf32>
      %450 = vector.broadcast %449 : vector<1x8x128xf32> to vector<3x8x128xf32>
      %451 = arith.mulf %450, %148 : vector<3x8x128xf32>
      %452 = arith.addf %446, %451 : vector<3x8x128xf32>
      %c3_259 = arith.constant 3 : index
      %c9_260 = arith.constant 9 : index
      %c0_261 = arith.constant 0 : index
      %c0_262 = arith.constant 0 : index
      %453 = vector.load %arg6[%c3_259, %c9_260, %c0_261, %c0_262] : memref<10x10x8x128xf32, #tpu.memory_space<vmem>>, vector<1x1x8x128xf32>
      %454 = vector.shape_cast %453 : vector<1x1x8x128xf32> to vector<8x128xf32>
      %455 = vector.shape_cast %454 : vector<8x128xf32> to vector<1x8x128xf32>
      %456 = vector.broadcast %455 : vector<1x8x128xf32> to vector<3x8x128xf32>
      %457 = arith.mulf %456, %164 : vector<3x8x128xf32>
      %458 = arith.addf %452, %457 : vector<3x8x128xf32>
      %cst_263 = arith.constant 0.000000e+00 : f32
      %459 = vector.broadcast %cst_263 : f32 to vector<3x8x128xf32>
      %460 = arith.cmpf ogt, %458, %459 : vector<3x8x128xf32>
      %c3_264 = arith.constant 3 : index
      %461 = memref.load %arg8[%c3_264] : memref<10xf32, #tpu.memory_space<smem>>
      %462 = vector.broadcast %461 : f32 to vector<3x8x128xf32>
      %463 = arith.mulf %462, %458 : vector<3x8x128xf32>
      %464 = arith.select %460, %458, %463 : vector<3x8x128xi1>, vector<3x8x128xf32>
      %c3_265 = arith.constant 3 : index
      %c0_266 = arith.constant 0 : index
      %c0_267 = arith.constant 0 : index
      %465 = vector.load %arg9[%c3_265, %c0_266, %c0_267] : memref<10x8x128xf32, #tpu.memory_space<vmem>>, vector<1x8x128xf32>
      %466 = vector.shape_cast %465 : vector<1x8x128xf32> to vector<8x128xf32>
      %467 = vector.shape_cast %466 : vector<8x128xf32> to vector<1x8x128xf32>
      %468 = vector.broadcast %467 : vector<1x8x128xf32> to vector<3x8x128xf32>
      %469 = arith.mulf %468, %464 : vector<3x8x128xf32>
      %470 = arith.addf %394, %469 : vector<3x8x128xf32>
      %c4_268 = arith.constant 4 : index
      %c0_269 = arith.constant 0 : index
      %c0_270 = arith.constant 0 : index
      %471 = vector.load %arg7[%c4_268, %c0_269, %c0_270] : memref<10x8x128xf32, #tpu.memory_space<vmem>>, vector<1x8x128xf32>
      %472 = vector.shape_cast %471 : vector<1x8x128xf32> to vector<8x128xf32>
      %473 = vector.shape_cast %472 : vector<8x128xf32> to vector<1x8x128xf32>
      %c4_271 = arith.constant 4 : index
      %c0_272 = arith.constant 0 : index
      %c0_273 = arith.constant 0 : index
      %c0_274 = arith.constant 0 : index
      %474 = vector.load %arg6[%c4_271, %c0_272, %c0_273, %c0_274] : memref<10x10x8x128xf32, #tpu.memory_space<vmem>>, vector<1x1x8x128xf32>
      %475 = vector.shape_cast %474 : vector<1x1x8x128xf32> to vector<8x128xf32>
      %476 = vector.shape_cast %475 : vector<8x128xf32> to vector<1x8x128xf32>
      %477 = vector.broadcast %476 : vector<1x8x128xf32> to vector<3x8x128xf32>
      %478 = arith.mulf %477, %20 : vector<3x8x128xf32>
      %479 = vector.broadcast %473 : vector<1x8x128xf32> to vector<3x8x128xf32>
      %480 = arith.addf %479, %478 : vector<3x8x128xf32>
      %c4_275 = arith.constant 4 : index
      %c1_276 = arith.constant 1 : index
      %c0_277 = arith.constant 0 : index
      %c0_278 = arith.constant 0 : index
      %481 = vector.load %arg6[%c4_275, %c1_276, %c0_277, %c0_278] : memref<10x10x8x128xf32, #tpu.memory_space<vmem>>, vector<1x1x8x128xf32>
      %482 = vector.shape_cast %481 : vector<1x1x8x128xf32> to vector<8x128xf32>
      %483 = vector.shape_cast %482 : vector<8x128xf32> to vector<1x8x128xf32>
      %484 = vector.broadcast %483 : vector<1x8x128xf32> to vector<3x8x128xf32>
      %485 = arith.mulf %484, %36 : vector<3x8x128xf32>
      %486 = arith.addf %480, %485 : vector<3x8x128xf32>
      %c4_279 = arith.constant 4 : index
      %c2_280 = arith.constant 2 : index
      %c0_281 = arith.constant 0 : index
      %c0_282 = arith.constant 0 : index
      %487 = vector.load %arg6[%c4_279, %c2_280, %c0_281, %c0_282] : memref<10x10x8x128xf32, #tpu.memory_space<vmem>>, vector<1x1x8x128xf32>
      %488 = vector.shape_cast %487 : vector<1x1x8x128xf32> to vector<8x128xf32>
      %489 = vector.shape_cast %488 : vector<8x128xf32> to vector<1x8x128xf32>
      %490 = vector.broadcast %489 : vector<1x8x128xf32> to vector<3x8x128xf32>
      %491 = arith.mulf %490, %52 : vector<3x8x128xf32>
      %492 = arith.addf %486, %491 : vector<3x8x128xf32>
      %c4_283 = arith.constant 4 : index
      %c3_284 = arith.constant 3 : index
      %c0_285 = arith.constant 0 : index
      %c0_286 = arith.constant 0 : index
      %493 = vector.load %arg6[%c4_283, %c3_284, %c0_285, %c0_286] : memref<10x10x8x128xf32, #tpu.memory_space<vmem>>, vector<1x1x8x128xf32>
      %494 = vector.shape_cast %493 : vector<1x1x8x128xf32> to vector<8x128xf32>
      %495 = vector.shape_cast %494 : vector<8x128xf32> to vector<1x8x128xf32>
      %496 = vector.broadcast %495 : vector<1x8x128xf32> to vector<3x8x128xf32>
      %497 = arith.mulf %496, %68 : vector<3x8x128xf32>
      %498 = arith.addf %492, %497 : vector<3x8x128xf32>
      %c4_287 = arith.constant 4 : index
      %c4_288 = arith.constant 4 : index
      %c0_289 = arith.constant 0 : index
      %c0_290 = arith.constant 0 : index
      %499 = vector.load %arg6[%c4_287, %c4_288, %c0_289, %c0_290] : memref<10x10x8x128xf32, #tpu.memory_space<vmem>>, vector<1x1x8x128xf32>
      %500 = vector.shape_cast %499 : vector<1x1x8x128xf32> to vector<8x128xf32>
      %501 = vector.shape_cast %500 : vector<8x128xf32> to vector<1x8x128xf32>
      %502 = vector.broadcast %501 : vector<1x8x128xf32> to vector<3x8x128xf32>
      %503 = arith.mulf %502, %84 : vector<3x8x128xf32>
      %504 = arith.addf %498, %503 : vector<3x8x128xf32>
      %c4_291 = arith.constant 4 : index
      %c5_292 = arith.constant 5 : index
      %c0_293 = arith.constant 0 : index
      %c0_294 = arith.constant 0 : index
      %505 = vector.load %arg6[%c4_291, %c5_292, %c0_293, %c0_294] : memref<10x10x8x128xf32, #tpu.memory_space<vmem>>, vector<1x1x8x128xf32>
      %506 = vector.shape_cast %505 : vector<1x1x8x128xf32> to vector<8x128xf32>
      %507 = vector.shape_cast %506 : vector<8x128xf32> to vector<1x8x128xf32>
      %508 = vector.broadcast %507 : vector<1x8x128xf32> to vector<3x8x128xf32>
      %509 = arith.mulf %508, %100 : vector<3x8x128xf32>
      %510 = arith.addf %504, %509 : vector<3x8x128xf32>
      %c4_295 = arith.constant 4 : index
      %c6_296 = arith.constant 6 : index
      %c0_297 = arith.constant 0 : index
      %c0_298 = arith.constant 0 : index
      %511 = vector.load %arg6[%c4_295, %c6_296, %c0_297, %c0_298] : memref<10x10x8x128xf32, #tpu.memory_space<vmem>>, vector<1x1x8x128xf32>
      %512 = vector.shape_cast %511 : vector<1x1x8x128xf32> to vector<8x128xf32>
      %513 = vector.shape_cast %512 : vector<8x128xf32> to vector<1x8x128xf32>
      %514 = vector.broadcast %513 : vector<1x8x128xf32> to vector<3x8x128xf32>
      %515 = arith.mulf %514, %116 : vector<3x8x128xf32>
      %516 = arith.addf %510, %515 : vector<3x8x128xf32>
      %c4_299 = arith.constant 4 : index
      %c7_300 = arith.constant 7 : index
      %c0_301 = arith.constant 0 : index
      %c0_302 = arith.constant 0 : index
      %517 = vector.load %arg6[%c4_299, %c7_300, %c0_301, %c0_302] : memref<10x10x8x128xf32, #tpu.memory_space<vmem>>, vector<1x1x8x128xf32>
      %518 = vector.shape_cast %517 : vector<1x1x8x128xf32> to vector<8x128xf32>
      %519 = vector.shape_cast %518 : vector<8x128xf32> to vector<1x8x128xf32>
      %520 = vector.broadcast %519 : vector<1x8x128xf32> to vector<3x8x128xf32>
      %521 = arith.mulf %520, %132 : vector<3x8x128xf32>
      %522 = arith.addf %516, %521 : vector<3x8x128xf32>
      %c4_303 = arith.constant 4 : index
      %c8_304 = arith.constant 8 : index
      %c0_305 = arith.constant 0 : index
      %c0_306 = arith.constant 0 : index
      %523 = vector.load %arg6[%c4_303, %c8_304, %c0_305, %c0_306] : memref<10x10x8x128xf32, #tpu.memory_space<vmem>>, vector<1x1x8x128xf32>
      %524 = vector.shape_cast %523 : vector<1x1x8x128xf32> to vector<8x128xf32>
      %525 = vector.shape_cast %524 : vector<8x128xf32> to vector<1x8x128xf32>
      %526 = vector.broadcast %525 : vector<1x8x128xf32> to vector<3x8x128xf32>
      %527 = arith.mulf %526, %148 : vector<3x8x128xf32>
      %528 = arith.addf %522, %527 : vector<3x8x128xf32>
      %c4_307 = arith.constant 4 : index
      %c9_308 = arith.constant 9 : index
      %c0_309 = arith.constant 0 : index
      %c0_310 = arith.constant 0 : index
      %529 = vector.load %arg6[%c4_307, %c9_308, %c0_309, %c0_310] : memref<10x10x8x128xf32, #tpu.memory_space<vmem>>, vector<1x1x8x128xf32>
      %530 = vector.shape_cast %529 : vector<1x1x8x128xf32> to vector<8x128xf32>
      %531 = vector.shape_cast %530 : vector<8x128xf32> to vector<1x8x128xf32>
      %532 = vector.broadcast %531 : vector<1x8x128xf32> to vector<3x8x128xf32>
      %533 = arith.mulf %532, %164 : vector<3x8x128xf32>
      %534 = arith.addf %528, %533 : vector<3x8x128xf32>
      %cst_311 = arith.constant 0.000000e+00 : f32
      %535 = vector.broadcast %cst_311 : f32 to vector<3x8x128xf32>
      %536 = arith.cmpf ogt, %534, %535 : vector<3x8x128xf32>
      %c4_312 = arith.constant 4 : index
      %537 = memref.load %arg8[%c4_312] : memref<10xf32, #tpu.memory_space<smem>>
      %538 = vector.broadcast %537 : f32 to vector<3x8x128xf32>
      %539 = arith.mulf %538, %534 : vector<3x8x128xf32>
      %540 = arith.select %536, %534, %539 : vector<3x8x128xi1>, vector<3x8x128xf32>
      %c4_313 = arith.constant 4 : index
      %c0_314 = arith.constant 0 : index
      %c0_315 = arith.constant 0 : index
      %541 = vector.load %arg9[%c4_313, %c0_314, %c0_315] : memref<10x8x128xf32, #tpu.memory_space<vmem>>, vector<1x8x128xf32>
      %542 = vector.shape_cast %541 : vector<1x8x128xf32> to vector<8x128xf32>
      %543 = vector.shape_cast %542 : vector<8x128xf32> to vector<1x8x128xf32>
      %544 = vector.broadcast %543 : vector<1x8x128xf32> to vector<3x8x128xf32>
      %545 = arith.mulf %544, %540 : vector<3x8x128xf32>
      %546 = arith.addf %470, %545 : vector<3x8x128xf32>
      %c5_316 = arith.constant 5 : index
      %c0_317 = arith.constant 0 : index
      %c0_318 = arith.constant 0 : index
      %547 = vector.load %arg7[%c5_316, %c0_317, %c0_318] : memref<10x8x128xf32, #tpu.memory_space<vmem>>, vector<1x8x128xf32>
      %548 = vector.shape_cast %547 : vector<1x8x128xf32> to vector<8x128xf32>
      %549 = vector.shape_cast %548 : vector<8x128xf32> to vector<1x8x128xf32>
      %c5_319 = arith.constant 5 : index
      %c0_320 = arith.constant 0 : index
      %c0_321 = arith.constant 0 : index
      %c0_322 = arith.constant 0 : index
      %550 = vector.load %arg6[%c5_319, %c0_320, %c0_321, %c0_322] : memref<10x10x8x128xf32, #tpu.memory_space<vmem>>, vector<1x1x8x128xf32>
      %551 = vector.shape_cast %550 : vector<1x1x8x128xf32> to vector<8x128xf32>
      %552 = vector.shape_cast %551 : vector<8x128xf32> to vector<1x8x128xf32>
      %553 = vector.broadcast %552 : vector<1x8x128xf32> to vector<3x8x128xf32>
      %554 = arith.mulf %553, %20 : vector<3x8x128xf32>
      %555 = vector.broadcast %549 : vector<1x8x128xf32> to vector<3x8x128xf32>
      %556 = arith.addf %555, %554 : vector<3x8x128xf32>
      %c5_323 = arith.constant 5 : index
      %c1_324 = arith.constant 1 : index
      %c0_325 = arith.constant 0 : index
      %c0_326 = arith.constant 0 : index
      %557 = vector.load %arg6[%c5_323, %c1_324, %c0_325, %c0_326] : memref<10x10x8x128xf32, #tpu.memory_space<vmem>>, vector<1x1x8x128xf32>
      %558 = vector.shape_cast %557 : vector<1x1x8x128xf32> to vector<8x128xf32>
      %559 = vector.shape_cast %558 : vector<8x128xf32> to vector<1x8x128xf32>
      %560 = vector.broadcast %559 : vector<1x8x128xf32> to vector<3x8x128xf32>
      %561 = arith.mulf %560, %36 : vector<3x8x128xf32>
      %562 = arith.addf %556, %561 : vector<3x8x128xf32>
      %c5_327 = arith.constant 5 : index
      %c2_328 = arith.constant 2 : index
      %c0_329 = arith.constant 0 : index
      %c0_330 = arith.constant 0 : index
      %563 = vector.load %arg6[%c5_327, %c2_328, %c0_329, %c0_330] : memref<10x10x8x128xf32, #tpu.memory_space<vmem>>, vector<1x1x8x128xf32>
      %564 = vector.shape_cast %563 : vector<1x1x8x128xf32> to vector<8x128xf32>
      %565 = vector.shape_cast %564 : vector<8x128xf32> to vector<1x8x128xf32>
      %566 = vector.broadcast %565 : vector<1x8x128xf32> to vector<3x8x128xf32>
      %567 = arith.mulf %566, %52 : vector<3x8x128xf32>
      %568 = arith.addf %562, %567 : vector<3x8x128xf32>
      %c5_331 = arith.constant 5 : index
      %c3_332 = arith.constant 3 : index
      %c0_333 = arith.constant 0 : index
      %c0_334 = arith.constant 0 : index
      %569 = vector.load %arg6[%c5_331, %c3_332, %c0_333, %c0_334] : memref<10x10x8x128xf32, #tpu.memory_space<vmem>>, vector<1x1x8x128xf32>
      %570 = vector.shape_cast %569 : vector<1x1x8x128xf32> to vector<8x128xf32>
      %571 = vector.shape_cast %570 : vector<8x128xf32> to vector<1x8x128xf32>
      %572 = vector.broadcast %571 : vector<1x8x128xf32> to vector<3x8x128xf32>
      %573 = arith.mulf %572, %68 : vector<3x8x128xf32>
      %574 = arith.addf %568, %573 : vector<3x8x128xf32>
      %c5_335 = arith.constant 5 : index
      %c4_336 = arith.constant 4 : index
      %c0_337 = arith.constant 0 : index
      %c0_338 = arith.constant 0 : index
      %575 = vector.load %arg6[%c5_335, %c4_336, %c0_337, %c0_338] : memref<10x10x8x128xf32, #tpu.memory_space<vmem>>, vector<1x1x8x128xf32>
      %576 = vector.shape_cast %575 : vector<1x1x8x128xf32> to vector<8x128xf32>
      %577 = vector.shape_cast %576 : vector<8x128xf32> to vector<1x8x128xf32>
      %578 = vector.broadcast %577 : vector<1x8x128xf32> to vector<3x8x128xf32>
      %579 = arith.mulf %578, %84 : vector<3x8x128xf32>
      %580 = arith.addf %574, %579 : vector<3x8x128xf32>
      %c5_339 = arith.constant 5 : index
      %c5_340 = arith.constant 5 : index
      %c0_341 = arith.constant 0 : index
      %c0_342 = arith.constant 0 : index
      %581 = vector.load %arg6[%c5_339, %c5_340, %c0_341, %c0_342] : memref<10x10x8x128xf32, #tpu.memory_space<vmem>>, vector<1x1x8x128xf32>
      %582 = vector.shape_cast %581 : vector<1x1x8x128xf32> to vector<8x128xf32>
      %583 = vector.shape_cast %582 : vector<8x128xf32> to vector<1x8x128xf32>
      %584 = vector.broadcast %583 : vector<1x8x128xf32> to vector<3x8x128xf32>
      %585 = arith.mulf %584, %100 : vector<3x8x128xf32>
      %586 = arith.addf %580, %585 : vector<3x8x128xf32>
      %c5_343 = arith.constant 5 : index
      %c6_344 = arith.constant 6 : index
      %c0_345 = arith.constant 0 : index
      %c0_346 = arith.constant 0 : index
      %587 = vector.load %arg6[%c5_343, %c6_344, %c0_345, %c0_346] : memref<10x10x8x128xf32, #tpu.memory_space<vmem>>, vector<1x1x8x128xf32>
      %588 = vector.shape_cast %587 : vector<1x1x8x128xf32> to vector<8x128xf32>
      %589 = vector.shape_cast %588 : vector<8x128xf32> to vector<1x8x128xf32>
      %590 = vector.broadcast %589 : vector<1x8x128xf32> to vector<3x8x128xf32>
      %591 = arith.mulf %590, %116 : vector<3x8x128xf32>
      %592 = arith.addf %586, %591 : vector<3x8x128xf32>
      %c5_347 = arith.constant 5 : index
      %c7_348 = arith.constant 7 : index
      %c0_349 = arith.constant 0 : index
      %c0_350 = arith.constant 0 : index
      %593 = vector.load %arg6[%c5_347, %c7_348, %c0_349, %c0_350] : memref<10x10x8x128xf32, #tpu.memory_space<vmem>>, vector<1x1x8x128xf32>
      %594 = vector.shape_cast %593 : vector<1x1x8x128xf32> to vector<8x128xf32>
      %595 = vector.shape_cast %594 : vector<8x128xf32> to vector<1x8x128xf32>
      %596 = vector.broadcast %595 : vector<1x8x128xf32> to vector<3x8x128xf32>
      %597 = arith.mulf %596, %132 : vector<3x8x128xf32>
      %598 = arith.addf %592, %597 : vector<3x8x128xf32>
      %c5_351 = arith.constant 5 : index
      %c8_352 = arith.constant 8 : index
      %c0_353 = arith.constant 0 : index
      %c0_354 = arith.constant 0 : index
      %599 = vector.load %arg6[%c5_351, %c8_352, %c0_353, %c0_354] : memref<10x10x8x128xf32, #tpu.memory_space<vmem>>, vector<1x1x8x128xf32>
      %600 = vector.shape_cast %599 : vector<1x1x8x128xf32> to vector<8x128xf32>
      %601 = vector.shape_cast %600 : vector<8x128xf32> to vector<1x8x128xf32>
      %602 = vector.broadcast %601 : vector<1x8x128xf32> to vector<3x8x128xf32>
      %603 = arith.mulf %602, %148 : vector<3x8x128xf32>
      %604 = arith.addf %598, %603 : vector<3x8x128xf32>
      %c5_355 = arith.constant 5 : index
      %c9_356 = arith.constant 9 : index
      %c0_357 = arith.constant 0 : index
      %c0_358 = arith.constant 0 : index
      %605 = vector.load %arg6[%c5_355, %c9_356, %c0_357, %c0_358] : memref<10x10x8x128xf32, #tpu.memory_space<vmem>>, vector<1x1x8x128xf32>
      %606 = vector.shape_cast %605 : vector<1x1x8x128xf32> to vector<8x128xf32>
      %607 = vector.shape_cast %606 : vector<8x128xf32> to vector<1x8x128xf32>
      %608 = vector.broadcast %607 : vector<1x8x128xf32> to vector<3x8x128xf32>
      %609 = arith.mulf %608, %164 : vector<3x8x128xf32>
      %610 = arith.addf %604, %609 : vector<3x8x128xf32>
      %cst_359 = arith.constant 0.000000e+00 : f32
      %611 = vector.broadcast %cst_359 : f32 to vector<3x8x128xf32>
      %612 = arith.cmpf ogt, %610, %611 : vector<3x8x128xf32>
      %c5_360 = arith.constant 5 : index
      %613 = memref.load %arg8[%c5_360] : memref<10xf32, #tpu.memory_space<smem>>
      %614 = vector.broadcast %613 : f32 to vector<3x8x128xf32>
      %615 = arith.mulf %614, %610 : vector<3x8x128xf32>
      %616 = arith.select %612, %610, %615 : vector<3x8x128xi1>, vector<3x8x128xf32>
      %c5_361 = arith.constant 5 : index
      %c0_362 = arith.constant 0 : index
      %c0_363 = arith.constant 0 : index
      %617 = vector.load %arg9[%c5_361, %c0_362, %c0_363] : memref<10x8x128xf32, #tpu.memory_space<vmem>>, vector<1x8x128xf32>
      %618 = vector.shape_cast %617 : vector<1x8x128xf32> to vector<8x128xf32>
      %619 = vector.shape_cast %618 : vector<8x128xf32> to vector<1x8x128xf32>
      %620 = vector.broadcast %619 : vector<1x8x128xf32> to vector<3x8x128xf32>
      %621 = arith.mulf %620, %616 : vector<3x8x128xf32>
      %622 = arith.addf %546, %621 : vector<3x8x128xf32>
      %c6_364 = arith.constant 6 : index
      %c0_365 = arith.constant 0 : index
      %c0_366 = arith.constant 0 : index
      %623 = vector.load %arg7[%c6_364, %c0_365, %c0_366] : memref<10x8x128xf32, #tpu.memory_space<vmem>>, vector<1x8x128xf32>
      %624 = vector.shape_cast %623 : vector<1x8x128xf32> to vector<8x128xf32>
      %625 = vector.shape_cast %624 : vector<8x128xf32> to vector<1x8x128xf32>
      %c6_367 = arith.constant 6 : index
      %c0_368 = arith.constant 0 : index
      %c0_369 = arith.constant 0 : index
      %c0_370 = arith.constant 0 : index
      %626 = vector.load %arg6[%c6_367, %c0_368, %c0_369, %c0_370] : memref<10x10x8x128xf32, #tpu.memory_space<vmem>>, vector<1x1x8x128xf32>
      %627 = vector.shape_cast %626 : vector<1x1x8x128xf32> to vector<8x128xf32>
      %628 = vector.shape_cast %627 : vector<8x128xf32> to vector<1x8x128xf32>
      %629 = vector.broadcast %628 : vector<1x8x128xf32> to vector<3x8x128xf32>
      %630 = arith.mulf %629, %20 : vector<3x8x128xf32>
      %631 = vector.broadcast %625 : vector<1x8x128xf32> to vector<3x8x128xf32>
      %632 = arith.addf %631, %630 : vector<3x8x128xf32>
      %c6_371 = arith.constant 6 : index
      %c1_372 = arith.constant 1 : index
      %c0_373 = arith.constant 0 : index
      %c0_374 = arith.constant 0 : index
      %633 = vector.load %arg6[%c6_371, %c1_372, %c0_373, %c0_374] : memref<10x10x8x128xf32, #tpu.memory_space<vmem>>, vector<1x1x8x128xf32>
      %634 = vector.shape_cast %633 : vector<1x1x8x128xf32> to vector<8x128xf32>
      %635 = vector.shape_cast %634 : vector<8x128xf32> to vector<1x8x128xf32>
      %636 = vector.broadcast %635 : vector<1x8x128xf32> to vector<3x8x128xf32>
      %637 = arith.mulf %636, %36 : vector<3x8x128xf32>
      %638 = arith.addf %632, %637 : vector<3x8x128xf32>
      %c6_375 = arith.constant 6 : index
      %c2_376 = arith.constant 2 : index
      %c0_377 = arith.constant 0 : index
      %c0_378 = arith.constant 0 : index
      %639 = vector.load %arg6[%c6_375, %c2_376, %c0_377, %c0_378] : memref<10x10x8x128xf32, #tpu.memory_space<vmem>>, vector<1x1x8x128xf32>
      %640 = vector.shape_cast %639 : vector<1x1x8x128xf32> to vector<8x128xf32>
      %641 = vector.shape_cast %640 : vector<8x128xf32> to vector<1x8x128xf32>
      %642 = vector.broadcast %641 : vector<1x8x128xf32> to vector<3x8x128xf32>
      %643 = arith.mulf %642, %52 : vector<3x8x128xf32>
      %644 = arith.addf %638, %643 : vector<3x8x128xf32>
      %c6_379 = arith.constant 6 : index
      %c3_380 = arith.constant 3 : index
      %c0_381 = arith.constant 0 : index
      %c0_382 = arith.constant 0 : index
      %645 = vector.load %arg6[%c6_379, %c3_380, %c0_381, %c0_382] : memref<10x10x8x128xf32, #tpu.memory_space<vmem>>, vector<1x1x8x128xf32>
      %646 = vector.shape_cast %645 : vector<1x1x8x128xf32> to vector<8x128xf32>
      %647 = vector.shape_cast %646 : vector<8x128xf32> to vector<1x8x128xf32>
      %648 = vector.broadcast %647 : vector<1x8x128xf32> to vector<3x8x128xf32>
      %649 = arith.mulf %648, %68 : vector<3x8x128xf32>
      %650 = arith.addf %644, %649 : vector<3x8x128xf32>
      %c6_383 = arith.constant 6 : index
      %c4_384 = arith.constant 4 : index
      %c0_385 = arith.constant 0 : index
      %c0_386 = arith.constant 0 : index
      %651 = vector.load %arg6[%c6_383, %c4_384, %c0_385, %c0_386] : memref<10x10x8x128xf32, #tpu.memory_space<vmem>>, vector<1x1x8x128xf32>
      %652 = vector.shape_cast %651 : vector<1x1x8x128xf32> to vector<8x128xf32>
      %653 = vector.shape_cast %652 : vector<8x128xf32> to vector<1x8x128xf32>
      %654 = vector.broadcast %653 : vector<1x8x128xf32> to vector<3x8x128xf32>
      %655 = arith.mulf %654, %84 : vector<3x8x128xf32>
      %656 = arith.addf %650, %655 : vector<3x8x128xf32>
      %c6_387 = arith.constant 6 : index
      %c5_388 = arith.constant 5 : index
      %c0_389 = arith.constant 0 : index
      %c0_390 = arith.constant 0 : index
      %657 = vector.load %arg6[%c6_387, %c5_388, %c0_389, %c0_390] : memref<10x10x8x128xf32, #tpu.memory_space<vmem>>, vector<1x1x8x128xf32>
      %658 = vector.shape_cast %657 : vector<1x1x8x128xf32> to vector<8x128xf32>
      %659 = vector.shape_cast %658 : vector<8x128xf32> to vector<1x8x128xf32>
      %660 = vector.broadcast %659 : vector<1x8x128xf32> to vector<3x8x128xf32>
      %661 = arith.mulf %660, %100 : vector<3x8x128xf32>
      %662 = arith.addf %656, %661 : vector<3x8x128xf32>
      %c6_391 = arith.constant 6 : index
      %c6_392 = arith.constant 6 : index
      %c0_393 = arith.constant 0 : index
      %c0_394 = arith.constant 0 : index
      %663 = vector.load %arg6[%c6_391, %c6_392, %c0_393, %c0_394] : memref<10x10x8x128xf32, #tpu.memory_space<vmem>>, vector<1x1x8x128xf32>
      %664 = vector.shape_cast %663 : vector<1x1x8x128xf32> to vector<8x128xf32>
      %665 = vector.shape_cast %664 : vector<8x128xf32> to vector<1x8x128xf32>
      %666 = vector.broadcast %665 : vector<1x8x128xf32> to vector<3x8x128xf32>
      %667 = arith.mulf %666, %116 : vector<3x8x128xf32>
      %668 = arith.addf %662, %667 : vector<3x8x128xf32>
      %c6_395 = arith.constant 6 : index
      %c7_396 = arith.constant 7 : index
      %c0_397 = arith.constant 0 : index
      %c0_398 = arith.constant 0 : index
      %669 = vector.load %arg6[%c6_395, %c7_396, %c0_397, %c0_398] : memref<10x10x8x128xf32, #tpu.memory_space<vmem>>, vector<1x1x8x128xf32>
      %670 = vector.shape_cast %669 : vector<1x1x8x128xf32> to vector<8x128xf32>
      %671 = vector.shape_cast %670 : vector<8x128xf32> to vector<1x8x128xf32>
      %672 = vector.broadcast %671 : vector<1x8x128xf32> to vector<3x8x128xf32>
      %673 = arith.mulf %672, %132 : vector<3x8x128xf32>
      %674 = arith.addf %668, %673 : vector<3x8x128xf32>
      %c6_399 = arith.constant 6 : index
      %c8_400 = arith.constant 8 : index
      %c0_401 = arith.constant 0 : index
      %c0_402 = arith.constant 0 : index
      %675 = vector.load %arg6[%c6_399, %c8_400, %c0_401, %c0_402] : memref<10x10x8x128xf32, #tpu.memory_space<vmem>>, vector<1x1x8x128xf32>
      %676 = vector.shape_cast %675 : vector<1x1x8x128xf32> to vector<8x128xf32>
      %677 = vector.shape_cast %676 : vector<8x128xf32> to vector<1x8x128xf32>
      %678 = vector.broadcast %677 : vector<1x8x128xf32> to vector<3x8x128xf32>
      %679 = arith.mulf %678, %148 : vector<3x8x128xf32>
      %680 = arith.addf %674, %679 : vector<3x8x128xf32>
      %c6_403 = arith.constant 6 : index
      %c9_404 = arith.constant 9 : index
      %c0_405 = arith.constant 0 : index
      %c0_406 = arith.constant 0 : index
      %681 = vector.load %arg6[%c6_403, %c9_404, %c0_405, %c0_406] : memref<10x10x8x128xf32, #tpu.memory_space<vmem>>, vector<1x1x8x128xf32>
      %682 = vector.shape_cast %681 : vector<1x1x8x128xf32> to vector<8x128xf32>
      %683 = vector.shape_cast %682 : vector<8x128xf32> to vector<1x8x128xf32>
      %684 = vector.broadcast %683 : vector<1x8x128xf32> to vector<3x8x128xf32>
      %685 = arith.mulf %684, %164 : vector<3x8x128xf32>
      %686 = arith.addf %680, %685 : vector<3x8x128xf32>
      %cst_407 = arith.constant 0.000000e+00 : f32
      %687 = vector.broadcast %cst_407 : f32 to vector<3x8x128xf32>
      %688 = arith.cmpf ogt, %686, %687 : vector<3x8x128xf32>
      %c6_408 = arith.constant 6 : index
      %689 = memref.load %arg8[%c6_408] : memref<10xf32, #tpu.memory_space<smem>>
      %690 = vector.broadcast %689 : f32 to vector<3x8x128xf32>
      %691 = arith.mulf %690, %686 : vector<3x8x128xf32>
      %692 = arith.select %688, %686, %691 : vector<3x8x128xi1>, vector<3x8x128xf32>
      %c6_409 = arith.constant 6 : index
      %c0_410 = arith.constant 0 : index
      %c0_411 = arith.constant 0 : index
      %693 = vector.load %arg9[%c6_409, %c0_410, %c0_411] : memref<10x8x128xf32, #tpu.memory_space<vmem>>, vector<1x8x128xf32>
      %694 = vector.shape_cast %693 : vector<1x8x128xf32> to vector<8x128xf32>
      %695 = vector.shape_cast %694 : vector<8x128xf32> to vector<1x8x128xf32>
      %696 = vector.broadcast %695 : vector<1x8x128xf32> to vector<3x8x128xf32>
      %697 = arith.mulf %696, %692 : vector<3x8x128xf32>
      %698 = arith.addf %622, %697 : vector<3x8x128xf32>
      %c7_412 = arith.constant 7 : index
      %c0_413 = arith.constant 0 : index
      %c0_414 = arith.constant 0 : index
      %699 = vector.load %arg7[%c7_412, %c0_413, %c0_414] : memref<10x8x128xf32, #tpu.memory_space<vmem>>, vector<1x8x128xf32>
      %700 = vector.shape_cast %699 : vector<1x8x128xf32> to vector<8x128xf32>
      %701 = vector.shape_cast %700 : vector<8x128xf32> to vector<1x8x128xf32>
      %c7_415 = arith.constant 7 : index
      %c0_416 = arith.constant 0 : index
      %c0_417 = arith.constant 0 : index
      %c0_418 = arith.constant 0 : index
      %702 = vector.load %arg6[%c7_415, %c0_416, %c0_417, %c0_418] : memref<10x10x8x128xf32, #tpu.memory_space<vmem>>, vector<1x1x8x128xf32>
      %703 = vector.shape_cast %702 : vector<1x1x8x128xf32> to vector<8x128xf32>
      %704 = vector.shape_cast %703 : vector<8x128xf32> to vector<1x8x128xf32>
      %705 = vector.broadcast %704 : vector<1x8x128xf32> to vector<3x8x128xf32>
      %706 = arith.mulf %705, %20 : vector<3x8x128xf32>
      %707 = vector.broadcast %701 : vector<1x8x128xf32> to vector<3x8x128xf32>
      %708 = arith.addf %707, %706 : vector<3x8x128xf32>
      %c7_419 = arith.constant 7 : index
      %c1_420 = arith.constant 1 : index
      %c0_421 = arith.constant 0 : index
      %c0_422 = arith.constant 0 : index
      %709 = vector.load %arg6[%c7_419, %c1_420, %c0_421, %c0_422] : memref<10x10x8x128xf32, #tpu.memory_space<vmem>>, vector<1x1x8x128xf32>
      %710 = vector.shape_cast %709 : vector<1x1x8x128xf32> to vector<8x128xf32>
      %711 = vector.shape_cast %710 : vector<8x128xf32> to vector<1x8x128xf32>
      %712 = vector.broadcast %711 : vector<1x8x128xf32> to vector<3x8x128xf32>
      %713 = arith.mulf %712, %36 : vector<3x8x128xf32>
      %714 = arith.addf %708, %713 : vector<3x8x128xf32>
      %c7_423 = arith.constant 7 : index
      %c2_424 = arith.constant 2 : index
      %c0_425 = arith.constant 0 : index
      %c0_426 = arith.constant 0 : index
      %715 = vector.load %arg6[%c7_423, %c2_424, %c0_425, %c0_426] : memref<10x10x8x128xf32, #tpu.memory_space<vmem>>, vector<1x1x8x128xf32>
      %716 = vector.shape_cast %715 : vector<1x1x8x128xf32> to vector<8x128xf32>
      %717 = vector.shape_cast %716 : vector<8x128xf32> to vector<1x8x128xf32>
      %718 = vector.broadcast %717 : vector<1x8x128xf32> to vector<3x8x128xf32>
      %719 = arith.mulf %718, %52 : vector<3x8x128xf32>
      %720 = arith.addf %714, %719 : vector<3x8x128xf32>
      %c7_427 = arith.constant 7 : index
      %c3_428 = arith.constant 3 : index
      %c0_429 = arith.constant 0 : index
      %c0_430 = arith.constant 0 : index
      %721 = vector.load %arg6[%c7_427, %c3_428, %c0_429, %c0_430] : memref<10x10x8x128xf32, #tpu.memory_space<vmem>>, vector<1x1x8x128xf32>
      %722 = vector.shape_cast %721 : vector<1x1x8x128xf32> to vector<8x128xf32>
      %723 = vector.shape_cast %722 : vector<8x128xf32> to vector<1x8x128xf32>
      %724 = vector.broadcast %723 : vector<1x8x128xf32> to vector<3x8x128xf32>
      %725 = arith.mulf %724, %68 : vector<3x8x128xf32>
      %726 = arith.addf %720, %725 : vector<3x8x128xf32>
      %c7_431 = arith.constant 7 : index
      %c4_432 = arith.constant 4 : index
      %c0_433 = arith.constant 0 : index
      %c0_434 = arith.constant 0 : index
      %727 = vector.load %arg6[%c7_431, %c4_432, %c0_433, %c0_434] : memref<10x10x8x128xf32, #tpu.memory_space<vmem>>, vector<1x1x8x128xf32>
      %728 = vector.shape_cast %727 : vector<1x1x8x128xf32> to vector<8x128xf32>
      %729 = vector.shape_cast %728 : vector<8x128xf32> to vector<1x8x128xf32>
      %730 = vector.broadcast %729 : vector<1x8x128xf32> to vector<3x8x128xf32>
      %731 = arith.mulf %730, %84 : vector<3x8x128xf32>
      %732 = arith.addf %726, %731 : vector<3x8x128xf32>
      %c7_435 = arith.constant 7 : index
      %c5_436 = arith.constant 5 : index
      %c0_437 = arith.constant 0 : index
      %c0_438 = arith.constant 0 : index
      %733 = vector.load %arg6[%c7_435, %c5_436, %c0_437, %c0_438] : memref<10x10x8x128xf32, #tpu.memory_space<vmem>>, vector<1x1x8x128xf32>
      %734 = vector.shape_cast %733 : vector<1x1x8x128xf32> to vector<8x128xf32>
      %735 = vector.shape_cast %734 : vector<8x128xf32> to vector<1x8x128xf32>
      %736 = vector.broadcast %735 : vector<1x8x128xf32> to vector<3x8x128xf32>
      %737 = arith.mulf %736, %100 : vector<3x8x128xf32>
      %738 = arith.addf %732, %737 : vector<3x8x128xf32>
      %c7_439 = arith.constant 7 : index
      %c6_440 = arith.constant 6 : index
      %c0_441 = arith.constant 0 : index
      %c0_442 = arith.constant 0 : index
      %739 = vector.load %arg6[%c7_439, %c6_440, %c0_441, %c0_442] : memref<10x10x8x128xf32, #tpu.memory_space<vmem>>, vector<1x1x8x128xf32>
      %740 = vector.shape_cast %739 : vector<1x1x8x128xf32> to vector<8x128xf32>
      %741 = vector.shape_cast %740 : vector<8x128xf32> to vector<1x8x128xf32>
      %742 = vector.broadcast %741 : vector<1x8x128xf32> to vector<3x8x128xf32>
      %743 = arith.mulf %742, %116 : vector<3x8x128xf32>
      %744 = arith.addf %738, %743 : vector<3x8x128xf32>
      %c7_443 = arith.constant 7 : index
      %c7_444 = arith.constant 7 : index
      %c0_445 = arith.constant 0 : index
      %c0_446 = arith.constant 0 : index
      %745 = vector.load %arg6[%c7_443, %c7_444, %c0_445, %c0_446] : memref<10x10x8x128xf32, #tpu.memory_space<vmem>>, vector<1x1x8x128xf32>
      %746 = vector.shape_cast %745 : vector<1x1x8x128xf32> to vector<8x128xf32>
      %747 = vector.shape_cast %746 : vector<8x128xf32> to vector<1x8x128xf32>
      %748 = vector.broadcast %747 : vector<1x8x128xf32> to vector<3x8x128xf32>
      %749 = arith.mulf %748, %132 : vector<3x8x128xf32>
      %750 = arith.addf %744, %749 : vector<3x8x128xf32>
      %c7_447 = arith.constant 7 : index
      %c8_448 = arith.constant 8 : index
      %c0_449 = arith.constant 0 : index
      %c0_450 = arith.constant 0 : index
      %751 = vector.load %arg6[%c7_447, %c8_448, %c0_449, %c0_450] : memref<10x10x8x128xf32, #tpu.memory_space<vmem>>, vector<1x1x8x128xf32>
      %752 = vector.shape_cast %751 : vector<1x1x8x128xf32> to vector<8x128xf32>
      %753 = vector.shape_cast %752 : vector<8x128xf32> to vector<1x8x128xf32>
      %754 = vector.broadcast %753 : vector<1x8x128xf32> to vector<3x8x128xf32>
      %755 = arith.mulf %754, %148 : vector<3x8x128xf32>
      %756 = arith.addf %750, %755 : vector<3x8x128xf32>
      %c7_451 = arith.constant 7 : index
      %c9_452 = arith.constant 9 : index
      %c0_453 = arith.constant 0 : index
      %c0_454 = arith.constant 0 : index
      %757 = vector.load %arg6[%c7_451, %c9_452, %c0_453, %c0_454] : memref<10x10x8x128xf32, #tpu.memory_space<vmem>>, vector<1x1x8x128xf32>
      %758 = vector.shape_cast %757 : vector<1x1x8x128xf32> to vector<8x128xf32>
      %759 = vector.shape_cast %758 : vector<8x128xf32> to vector<1x8x128xf32>
      %760 = vector.broadcast %759 : vector<1x8x128xf32> to vector<3x8x128xf32>
      %761 = arith.mulf %760, %164 : vector<3x8x128xf32>
      %762 = arith.addf %756, %761 : vector<3x8x128xf32>
      %cst_455 = arith.constant 0.000000e+00 : f32
      %763 = vector.broadcast %cst_455 : f32 to vector<3x8x128xf32>
      %764 = arith.cmpf ogt, %762, %763 : vector<3x8x128xf32>
      %c7_456 = arith.constant 7 : index
      %765 = memref.load %arg8[%c7_456] : memref<10xf32, #tpu.memory_space<smem>>
      %766 = vector.broadcast %765 : f32 to vector<3x8x128xf32>
      %767 = arith.mulf %766, %762 : vector<3x8x128xf32>
      %768 = arith.select %764, %762, %767 : vector<3x8x128xi1>, vector<3x8x128xf32>
      %c7_457 = arith.constant 7 : index
      %c0_458 = arith.constant 0 : index
      %c0_459 = arith.constant 0 : index
      %769 = vector.load %arg9[%c7_457, %c0_458, %c0_459] : memref<10x8x128xf32, #tpu.memory_space<vmem>>, vector<1x8x128xf32>
      %770 = vector.shape_cast %769 : vector<1x8x128xf32> to vector<8x128xf32>
      %771 = vector.shape_cast %770 : vector<8x128xf32> to vector<1x8x128xf32>
      %772 = vector.broadcast %771 : vector<1x8x128xf32> to vector<3x8x128xf32>
      %773 = arith.mulf %772, %768 : vector<3x8x128xf32>
      %774 = arith.addf %698, %773 : vector<3x8x128xf32>
      %c8_460 = arith.constant 8 : index
      %c0_461 = arith.constant 0 : index
      %c0_462 = arith.constant 0 : index
      %775 = vector.load %arg7[%c8_460, %c0_461, %c0_462] : memref<10x8x128xf32, #tpu.memory_space<vmem>>, vector<1x8x128xf32>
      %776 = vector.shape_cast %775 : vector<1x8x128xf32> to vector<8x128xf32>
      %777 = vector.shape_cast %776 : vector<8x128xf32> to vector<1x8x128xf32>
      %c8_463 = arith.constant 8 : index
      %c0_464 = arith.constant 0 : index
      %c0_465 = arith.constant 0 : index
      %c0_466 = arith.constant 0 : index
      %778 = vector.load %arg6[%c8_463, %c0_464, %c0_465, %c0_466] : memref<10x10x8x128xf32, #tpu.memory_space<vmem>>, vector<1x1x8x128xf32>
      %779 = vector.shape_cast %778 : vector<1x1x8x128xf32> to vector<8x128xf32>
      %780 = vector.shape_cast %779 : vector<8x128xf32> to vector<1x8x128xf32>
      %781 = vector.broadcast %780 : vector<1x8x128xf32> to vector<3x8x128xf32>
      %782 = arith.mulf %781, %20 : vector<3x8x128xf32>
      %783 = vector.broadcast %777 : vector<1x8x128xf32> to vector<3x8x128xf32>
      %784 = arith.addf %783, %782 : vector<3x8x128xf32>
      %c8_467 = arith.constant 8 : index
      %c1_468 = arith.constant 1 : index
      %c0_469 = arith.constant 0 : index
      %c0_470 = arith.constant 0 : index
      %785 = vector.load %arg6[%c8_467, %c1_468, %c0_469, %c0_470] : memref<10x10x8x128xf32, #tpu.memory_space<vmem>>, vector<1x1x8x128xf32>
      %786 = vector.shape_cast %785 : vector<1x1x8x128xf32> to vector<8x128xf32>
      %787 = vector.shape_cast %786 : vector<8x128xf32> to vector<1x8x128xf32>
      %788 = vector.broadcast %787 : vector<1x8x128xf32> to vector<3x8x128xf32>
      %789 = arith.mulf %788, %36 : vector<3x8x128xf32>
      %790 = arith.addf %784, %789 : vector<3x8x128xf32>
      %c8_471 = arith.constant 8 : index
      %c2_472 = arith.constant 2 : index
      %c0_473 = arith.constant 0 : index
      %c0_474 = arith.constant 0 : index
      %791 = vector.load %arg6[%c8_471, %c2_472, %c0_473, %c0_474] : memref<10x10x8x128xf32, #tpu.memory_space<vmem>>, vector<1x1x8x128xf32>
      %792 = vector.shape_cast %791 : vector<1x1x8x128xf32> to vector<8x128xf32>
      %793 = vector.shape_cast %792 : vector<8x128xf32> to vector<1x8x128xf32>
      %794 = vector.broadcast %793 : vector<1x8x128xf32> to vector<3x8x128xf32>
      %795 = arith.mulf %794, %52 : vector<3x8x128xf32>
      %796 = arith.addf %790, %795 : vector<3x8x128xf32>
      %c8_475 = arith.constant 8 : index
      %c3_476 = arith.constant 3 : index
      %c0_477 = arith.constant 0 : index
      %c0_478 = arith.constant 0 : index
      %797 = vector.load %arg6[%c8_475, %c3_476, %c0_477, %c0_478] : memref<10x10x8x128xf32, #tpu.memory_space<vmem>>, vector<1x1x8x128xf32>
      %798 = vector.shape_cast %797 : vector<1x1x8x128xf32> to vector<8x128xf32>
      %799 = vector.shape_cast %798 : vector<8x128xf32> to vector<1x8x128xf32>
      %800 = vector.broadcast %799 : vector<1x8x128xf32> to vector<3x8x128xf32>
      %801 = arith.mulf %800, %68 : vector<3x8x128xf32>
      %802 = arith.addf %796, %801 : vector<3x8x128xf32>
      %c8_479 = arith.constant 8 : index
      %c4_480 = arith.constant 4 : index
      %c0_481 = arith.constant 0 : index
      %c0_482 = arith.constant 0 : index
      %803 = vector.load %arg6[%c8_479, %c4_480, %c0_481, %c0_482] : memref<10x10x8x128xf32, #tpu.memory_space<vmem>>, vector<1x1x8x128xf32>
      %804 = vector.shape_cast %803 : vector<1x1x8x128xf32> to vector<8x128xf32>
      %805 = vector.shape_cast %804 : vector<8x128xf32> to vector<1x8x128xf32>
      %806 = vector.broadcast %805 : vector<1x8x128xf32> to vector<3x8x128xf32>
      %807 = arith.mulf %806, %84 : vector<3x8x128xf32>
      %808 = arith.addf %802, %807 : vector<3x8x128xf32>
      %c8_483 = arith.constant 8 : index
      %c5_484 = arith.constant 5 : index
      %c0_485 = arith.constant 0 : index
      %c0_486 = arith.constant 0 : index
      %809 = vector.load %arg6[%c8_483, %c5_484, %c0_485, %c0_486] : memref<10x10x8x128xf32, #tpu.memory_space<vmem>>, vector<1x1x8x128xf32>
      %810 = vector.shape_cast %809 : vector<1x1x8x128xf32> to vector<8x128xf32>
      %811 = vector.shape_cast %810 : vector<8x128xf32> to vector<1x8x128xf32>
      %812 = vector.broadcast %811 : vector<1x8x128xf32> to vector<3x8x128xf32>
      %813 = arith.mulf %812, %100 : vector<3x8x128xf32>
      %814 = arith.addf %808, %813 : vector<3x8x128xf32>
      %c8_487 = arith.constant 8 : index
      %c6_488 = arith.constant 6 : index
      %c0_489 = arith.constant 0 : index
      %c0_490 = arith.constant 0 : index
      %815 = vector.load %arg6[%c8_487, %c6_488, %c0_489, %c0_490] : memref<10x10x8x128xf32, #tpu.memory_space<vmem>>, vector<1x1x8x128xf32>
      %816 = vector.shape_cast %815 : vector<1x1x8x128xf32> to vector<8x128xf32>
      %817 = vector.shape_cast %816 : vector<8x128xf32> to vector<1x8x128xf32>
      %818 = vector.broadcast %817 : vector<1x8x128xf32> to vector<3x8x128xf32>
      %819 = arith.mulf %818, %116 : vector<3x8x128xf32>
      %820 = arith.addf %814, %819 : vector<3x8x128xf32>
      %c8_491 = arith.constant 8 : index
      %c7_492 = arith.constant 7 : index
      %c0_493 = arith.constant 0 : index
      %c0_494 = arith.constant 0 : index
      %821 = vector.load %arg6[%c8_491, %c7_492, %c0_493, %c0_494] : memref<10x10x8x128xf32, #tpu.memory_space<vmem>>, vector<1x1x8x128xf32>
      %822 = vector.shape_cast %821 : vector<1x1x8x128xf32> to vector<8x128xf32>
      %823 = vector.shape_cast %822 : vector<8x128xf32> to vector<1x8x128xf32>
      %824 = vector.broadcast %823 : vector<1x8x128xf32> to vector<3x8x128xf32>
      %825 = arith.mulf %824, %132 : vector<3x8x128xf32>
      %826 = arith.addf %820, %825 : vector<3x8x128xf32>
      %c8_495 = arith.constant 8 : index
      %c8_496 = arith.constant 8 : index
      %c0_497 = arith.constant 0 : index
      %c0_498 = arith.constant 0 : index
      %827 = vector.load %arg6[%c8_495, %c8_496, %c0_497, %c0_498] : memref<10x10x8x128xf32, #tpu.memory_space<vmem>>, vector<1x1x8x128xf32>
      %828 = vector.shape_cast %827 : vector<1x1x8x128xf32> to vector<8x128xf32>
      %829 = vector.shape_cast %828 : vector<8x128xf32> to vector<1x8x128xf32>
      %830 = vector.broadcast %829 : vector<1x8x128xf32> to vector<3x8x128xf32>
      %831 = arith.mulf %830, %148 : vector<3x8x128xf32>
      %832 = arith.addf %826, %831 : vector<3x8x128xf32>
      %c8_499 = arith.constant 8 : index
      %c9_500 = arith.constant 9 : index
      %c0_501 = arith.constant 0 : index
      %c0_502 = arith.constant 0 : index
      %833 = vector.load %arg6[%c8_499, %c9_500, %c0_501, %c0_502] : memref<10x10x8x128xf32, #tpu.memory_space<vmem>>, vector<1x1x8x128xf32>
      %834 = vector.shape_cast %833 : vector<1x1x8x128xf32> to vector<8x128xf32>
      %835 = vector.shape_cast %834 : vector<8x128xf32> to vector<1x8x128xf32>
      %836 = vector.broadcast %835 : vector<1x8x128xf32> to vector<3x8x128xf32>
      %837 = arith.mulf %836, %164 : vector<3x8x128xf32>
      %838 = arith.addf %832, %837 : vector<3x8x128xf32>
      %cst_503 = arith.constant 0.000000e+00 : f32
      %839 = vector.broadcast %cst_503 : f32 to vector<3x8x128xf32>
      %840 = arith.cmpf ogt, %838, %839 : vector<3x8x128xf32>
      %c8_504 = arith.constant 8 : index
      %841 = memref.load %arg8[%c8_504] : memref<10xf32, #tpu.memory_space<smem>>
      %842 = vector.broadcast %841 : f32 to vector<3x8x128xf32>
      %843 = arith.mulf %842, %838 : vector<3x8x128xf32>
      %844 = arith.select %840, %838, %843 : vector<3x8x128xi1>, vector<3x8x128xf32>
      %c8_505 = arith.constant 8 : index
      %c0_506 = arith.constant 0 : index
      %c0_507 = arith.constant 0 : index
      %845 = vector.load %arg9[%c8_505, %c0_506, %c0_507] : memref<10x8x128xf32, #tpu.memory_space<vmem>>, vector<1x8x128xf32>
      %846 = vector.shape_cast %845 : vector<1x8x128xf32> to vector<8x128xf32>
      %847 = vector.shape_cast %846 : vector<8x128xf32> to vector<1x8x128xf32>
      %848 = vector.broadcast %847 : vector<1x8x128xf32> to vector<3x8x128xf32>
      %849 = arith.mulf %848, %844 : vector<3x8x128xf32>
      %850 = arith.addf %774, %849 : vector<3x8x128xf32>
      %c9_508 = arith.constant 9 : index
      %c0_509 = arith.constant 0 : index
      %c0_510 = arith.constant 0 : index
      %851 = vector.load %arg7[%c9_508, %c0_509, %c0_510] : memref<10x8x128xf32, #tpu.memory_space<vmem>>, vector<1x8x128xf32>
      %852 = vector.shape_cast %851 : vector<1x8x128xf32> to vector<8x128xf32>
      %853 = vector.shape_cast %852 : vector<8x128xf32> to vector<1x8x128xf32>
      %c9_511 = arith.constant 9 : index
      %c0_512 = arith.constant 0 : index
      %c0_513 = arith.constant 0 : index
      %c0_514 = arith.constant 0 : index
      %854 = vector.load %arg6[%c9_511, %c0_512, %c0_513, %c0_514] : memref<10x10x8x128xf32, #tpu.memory_space<vmem>>, vector<1x1x8x128xf32>
      %855 = vector.shape_cast %854 : vector<1x1x8x128xf32> to vector<8x128xf32>
      %856 = vector.shape_cast %855 : vector<8x128xf32> to vector<1x8x128xf32>
      %857 = vector.broadcast %856 : vector<1x8x128xf32> to vector<3x8x128xf32>
      %858 = arith.mulf %857, %20 : vector<3x8x128xf32>
      %859 = vector.broadcast %853 : vector<1x8x128xf32> to vector<3x8x128xf32>
      %860 = arith.addf %859, %858 : vector<3x8x128xf32>
      %c9_515 = arith.constant 9 : index
      %c1_516 = arith.constant 1 : index
      %c0_517 = arith.constant 0 : index
      %c0_518 = arith.constant 0 : index
      %861 = vector.load %arg6[%c9_515, %c1_516, %c0_517, %c0_518] : memref<10x10x8x128xf32, #tpu.memory_space<vmem>>, vector<1x1x8x128xf32>
      %862 = vector.shape_cast %861 : vector<1x1x8x128xf32> to vector<8x128xf32>
      %863 = vector.shape_cast %862 : vector<8x128xf32> to vector<1x8x128xf32>
      %864 = vector.broadcast %863 : vector<1x8x128xf32> to vector<3x8x128xf32>
      %865 = arith.mulf %864, %36 : vector<3x8x128xf32>
      %866 = arith.addf %860, %865 : vector<3x8x128xf32>
      %c9_519 = arith.constant 9 : index
      %c2_520 = arith.constant 2 : index
      %c0_521 = arith.constant 0 : index
      %c0_522 = arith.constant 0 : index
      %867 = vector.load %arg6[%c9_519, %c2_520, %c0_521, %c0_522] : memref<10x10x8x128xf32, #tpu.memory_space<vmem>>, vector<1x1x8x128xf32>
      %868 = vector.shape_cast %867 : vector<1x1x8x128xf32> to vector<8x128xf32>
      %869 = vector.shape_cast %868 : vector<8x128xf32> to vector<1x8x128xf32>
      %870 = vector.broadcast %869 : vector<1x8x128xf32> to vector<3x8x128xf32>
      %871 = arith.mulf %870, %52 : vector<3x8x128xf32>
      %872 = arith.addf %866, %871 : vector<3x8x128xf32>
      %c9_523 = arith.constant 9 : index
      %c3_524 = arith.constant 3 : index
      %c0_525 = arith.constant 0 : index
      %c0_526 = arith.constant 0 : index
      %873 = vector.load %arg6[%c9_523, %c3_524, %c0_525, %c0_526] : memref<10x10x8x128xf32, #tpu.memory_space<vmem>>, vector<1x1x8x128xf32>
      %874 = vector.shape_cast %873 : vector<1x1x8x128xf32> to vector<8x128xf32>
      %875 = vector.shape_cast %874 : vector<8x128xf32> to vector<1x8x128xf32>
      %876 = vector.broadcast %875 : vector<1x8x128xf32> to vector<3x8x128xf32>
      %877 = arith.mulf %876, %68 : vector<3x8x128xf32>
      %878 = arith.addf %872, %877 : vector<3x8x128xf32>
      %c9_527 = arith.constant 9 : index
      %c4_528 = arith.constant 4 : index
      %c0_529 = arith.constant 0 : index
      %c0_530 = arith.constant 0 : index
      %879 = vector.load %arg6[%c9_527, %c4_528, %c0_529, %c0_530] : memref<10x10x8x128xf32, #tpu.memory_space<vmem>>, vector<1x1x8x128xf32>
      %880 = vector.shape_cast %879 : vector<1x1x8x128xf32> to vector<8x128xf32>
      %881 = vector.shape_cast %880 : vector<8x128xf32> to vector<1x8x128xf32>
      %882 = vector.broadcast %881 : vector<1x8x128xf32> to vector<3x8x128xf32>
      %883 = arith.mulf %882, %84 : vector<3x8x128xf32>
      %884 = arith.addf %878, %883 : vector<3x8x128xf32>
      %c9_531 = arith.constant 9 : index
      %c5_532 = arith.constant 5 : index
      %c0_533 = arith.constant 0 : index
      %c0_534 = arith.constant 0 : index
      %885 = vector.load %arg6[%c9_531, %c5_532, %c0_533, %c0_534] : memref<10x10x8x128xf32, #tpu.memory_space<vmem>>, vector<1x1x8x128xf32>
      %886 = vector.shape_cast %885 : vector<1x1x8x128xf32> to vector<8x128xf32>
      %887 = vector.shape_cast %886 : vector<8x128xf32> to vector<1x8x128xf32>
      %888 = vector.broadcast %887 : vector<1x8x128xf32> to vector<3x8x128xf32>
      %889 = arith.mulf %888, %100 : vector<3x8x128xf32>
      %890 = arith.addf %884, %889 : vector<3x8x128xf32>
      %c9_535 = arith.constant 9 : index
      %c6_536 = arith.constant 6 : index
      %c0_537 = arith.constant 0 : index
      %c0_538 = arith.constant 0 : index
      %891 = vector.load %arg6[%c9_535, %c6_536, %c0_537, %c0_538] : memref<10x10x8x128xf32, #tpu.memory_space<vmem>>, vector<1x1x8x128xf32>
      %892 = vector.shape_cast %891 : vector<1x1x8x128xf32> to vector<8x128xf32>
      %893 = vector.shape_cast %892 : vector<8x128xf32> to vector<1x8x128xf32>
      %894 = vector.broadcast %893 : vector<1x8x128xf32> to vector<3x8x128xf32>
      %895 = arith.mulf %894, %116 : vector<3x8x128xf32>
      %896 = arith.addf %890, %895 : vector<3x8x128xf32>
      %c9_539 = arith.constant 9 : index
      %c7_540 = arith.constant 7 : index
      %c0_541 = arith.constant 0 : index
      %c0_542 = arith.constant 0 : index
      %897 = vector.load %arg6[%c9_539, %c7_540, %c0_541, %c0_542] : memref<10x10x8x128xf32, #tpu.memory_space<vmem>>, vector<1x1x8x128xf32>
      %898 = vector.shape_cast %897 : vector<1x1x8x128xf32> to vector<8x128xf32>
      %899 = vector.shape_cast %898 : vector<8x128xf32> to vector<1x8x128xf32>
      %900 = vector.broadcast %899 : vector<1x8x128xf32> to vector<3x8x128xf32>
      %901 = arith.mulf %900, %132 : vector<3x8x128xf32>
      %902 = arith.addf %896, %901 : vector<3x8x128xf32>
      %c9_543 = arith.constant 9 : index
      %c8_544 = arith.constant 8 : index
      %c0_545 = arith.constant 0 : index
      %c0_546 = arith.constant 0 : index
      %903 = vector.load %arg6[%c9_543, %c8_544, %c0_545, %c0_546] : memref<10x10x8x128xf32, #tpu.memory_space<vmem>>, vector<1x1x8x128xf32>
      %904 = vector.shape_cast %903 : vector<1x1x8x128xf32> to vector<8x128xf32>
      %905 = vector.shape_cast %904 : vector<8x128xf32> to vector<1x8x128xf32>
      %906 = vector.broadcast %905 : vector<1x8x128xf32> to vector<3x8x128xf32>
      %907 = arith.mulf %906, %148 : vector<3x8x128xf32>
      %908 = arith.addf %902, %907 : vector<3x8x128xf32>
      %c9_547 = arith.constant 9 : index
      %c9_548 = arith.constant 9 : index
      %c0_549 = arith.constant 0 : index
      %c0_550 = arith.constant 0 : index
      %909 = vector.load %arg6[%c9_547, %c9_548, %c0_549, %c0_550] : memref<10x10x8x128xf32, #tpu.memory_space<vmem>>, vector<1x1x8x128xf32>
      %910 = vector.shape_cast %909 : vector<1x1x8x128xf32> to vector<8x128xf32>
      %911 = vector.shape_cast %910 : vector<8x128xf32> to vector<1x8x128xf32>
      %912 = vector.broadcast %911 : vector<1x8x128xf32> to vector<3x8x128xf32>
      %913 = arith.mulf %912, %164 : vector<3x8x128xf32>
      %914 = arith.addf %908, %913 : vector<3x8x128xf32>
      %cst_551 = arith.constant 0.000000e+00 : f32
      %915 = vector.broadcast %cst_551 : f32 to vector<3x8x128xf32>
      %916 = arith.cmpf ogt, %914, %915 : vector<3x8x128xf32>
      %c9_552 = arith.constant 9 : index
      %917 = memref.load %arg8[%c9_552] : memref<10xf32, #tpu.memory_space<smem>>
      %918 = vector.broadcast %917 : f32 to vector<3x8x128xf32>
      %919 = arith.mulf %918, %914 : vector<3x8x128xf32>
      %920 = arith.select %916, %914, %919 : vector<3x8x128xi1>, vector<3x8x128xf32>
      %c9_553 = arith.constant 9 : index
      %c0_554 = arith.constant 0 : index
      %c0_555 = arith.constant 0 : index
      %921 = vector.load %arg9[%c9_553, %c0_554, %c0_555] : memref<10x8x128xf32, #tpu.memory_space<vmem>>, vector<1x8x128xf32>
      %922 = vector.shape_cast %921 : vector<1x8x128xf32> to vector<8x128xf32>
      %923 = vector.shape_cast %922 : vector<8x128xf32> to vector<1x8x128xf32>
      %924 = vector.broadcast %923 : vector<1x8x128xf32> to vector<3x8x128xf32>
      %925 = arith.mulf %924, %920 : vector<3x8x128xf32>
      %926 = arith.addf %850, %925 : vector<3x8x128xf32>
      %927 = arith.addf %4, %926 : vector<3x8x128xf32>
      %928 = arith.index_cast %2 : i32 to index
      %c0_556 = arith.constant 0 : index
      %c0_557 = arith.constant 0 : index
      %929 = vector.load %arg11[%928, %c0_556, %c0_557] : memref<9x8x128xf32, #tpu.memory_space<vmem>>, vector<3x8x128xf32>
      tpu.vector_store %arg11[%928, %c0_556, %c0_557], %927 {strides = array<i32>} : memref<9x8x128xf32, #tpu.memory_space<vmem>>, vector<3x8x128xf32>,
    }
    %c3_i32_0 = arith.constant 3 : i32
    return
  }
  func.func @transform_0(%arg0: i32, %arg1: i32) -> (i32, i32, i32) {
    %c0_i32 = arith.constant 0 : i32
    %c0_i32_0 = arith.constant 0 : i32
    return %arg1, %arg0, %c0_i32 : i32, i32, i32
  }
  func.func @transform_1(%arg0: i32, %arg1: i32) -> (i32, i32, i32) {
    %c0_i32 = arith.constant 0 : i32
    %c0_i32_0 = arith.constant 0 : i32
    %c0_i32_1 = arith.constant 0 : i32
    return %c0_i32, %arg0, %c0_i32_0 : i32, i32, i32
  }
  func.func @transform_2(%arg0: i32, %arg1: i32) -> (i32, i32, i32) {
    %c0_i32 = arith.constant 0 : i32
    %c0_i32_0 = arith.constant 0 : i32
    %c0_i32_1 = arith.constant 0 : i32
    return %c0_i32, %arg0, %c0_i32_0 : i32, i32, i32
  }
  func.func @transform_3(%arg0: i32, %arg1: i32) -> i32 {
    %c0_i32 = arith.constant 0 : i32
    %c0_i32_0 = arith.constant 0 : i32
    return %c0_i32 : i32
  }
  func.func @transform_4(%arg0: i32, %arg1: i32) -> (i32, i32, i32, i32) {
    %c0_i32 = arith.constant 0 : i32
    %c0_i32_0 = arith.constant 0 : i32
    %c0_i32_1 = arith.constant 0 : i32
    %c0_i32_2 = arith.constant 0 : i32
    return %c0_i32, %c0_i32_0, %arg0, %c0_i32_1 : i32, i32, i32, i32
  }
  func.func @transform_5(%arg0: i32, %arg1: i32) -> (i32, i32, i32) {
    %c0_i32 = arith.constant 0 : i32
    %c0_i32_0 = arith.constant 0 : i32
    %c0_i32_1 = arith.constant 0 : i32
    return %c0_i32, %arg0, %c0_i32_0 : i32, i32, i32
  }
  func.func @transform_6(%arg0: i32, %arg1: i32) -> i32 {
    %c0_i32 = arith.constant 0 : i32
    %c0_i32_0 = arith.constant 0 : i32
    return %c0_i32 : i32
  }
  func.func @transform_7(%arg0: i32, %arg1: i32) -> (i32, i32, i32) {
    %c0_i32 = arith.constant 0 : i32
    %c0_i32_0 = arith.constant 0 : i32
    %c0_i32_1 = arith.constant 0 : i32
    return %c0_i32, %arg0, %c0_i32_0 : i32, i32, i32
  }
  func.func @transform_8(%arg0: i32, %arg1: i32) -> (i32, i32, i32) {
    %c0_i32 = arith.constant 0 : i32
    %c0_i32_0 = arith.constant 0 : i32
    %c0_i32_1 = arith.constant 0 : i32
    return %c0_i32, %arg0, %c0_i32_0 : i32, i32, i32
  }
  func.func @transform_9(%arg0: i32, %arg1: i32) -> (i32, i32, i32) {
    %c0_i32 = arith.constant 0 : i32
    %c0_i32_0 = arith.constant 0 : i32
    return %arg1, %arg0, %c0_i32 : i32, i32, i32
  }
}

</mosaic_0001>

<llo_original>
// kernel: tpu_custom_call.1
$region0: #{tpu_custom_call.1}
  #allocation0 [shape = 'u32[]', space=smem, size = 0x4, offset = 0x4, fixed_abs, tag = 'smem constant byte address 0x4 - core index']
  #allocation1 [shape = 'u32[144,128]{1,0:T(1,128)}', space=vmem, size = 0x12000, scoped, tag = 'internal scratch']
  %s0 = inlined_call_operand.hbm [shape: f32[9,8,128], index: 0, kind: input, shape index: {}]
  %s1 = inlined_call_operand.hbm [shape: f32[10,8,128], index: 1, kind: input, shape index: {}]
  %s2 = inlined_call_operand.hbm [shape: f32[10,8,128], index: 2, kind: input, shape index: {}]
  %s3 = inlined_call_operand.vmem [shape: f32[10], index: 3, kind: input, shape index: {}]
  %s4 = inlined_call_operand.hbm [shape: f32[10,10,8,128], index: 4, kind: input, shape index: {}]
  %s5 = inlined_call_operand.hbm [shape: f32[10,8,128], index: 5, kind: input, shape index: {}]
  %s6 = inlined_call_operand.vmem [shape: f32[10], index: 6, kind: input, shape index: {}]
  %s7 = inlined_call_operand.hbm [shape: f32[10,8,128], index: 7, kind: input, shape index: {}]
  %s8 = inlined_call_operand.vmem [shape: f32[1,8,128], index: 8, kind: input, shape index: {}]
  %s9 = inlined_call_operand.hbm [shape: f32[9,8,128], index: 9, kind: output, shape index: {}]
  %s10 = sld [smem:[#allocation0]]
  $region85: #{tpu_custom_call.1} parent=0
    _
  %s12 = ssub.s32 1, %s10
  %s13 = scalar_select 0, %s12, %s10
  $region1: #{tpu_custom_call.1} parent=0
    #allocation2 [shape = 'u8[36864]{0}', space=vmem, size = 0x9000, scoped, tag = 'input window, operand 0, single buffered']
    #allocation3 [shape = 's32[1]{0}', space=sflag, size = 0x4, scoped, tag = 'scoped memory for tpu_custom_call.1']
    #allocation4 [shape = 's32[1]{0}', space=sflag, size = 0x4, scoped, tag = 'scoped memory for tpu_custom_call.1']
    #allocation5 [shape = 's32[1]{0}', space=sflag, size = 0x4, scoped, tag = 'scoped memory for tpu_custom_call.1']
    #allocation6 [shape = 'u8[40960]{0}', space=vmem, size = 0xa000, scoped, tag = 'input window, operand 1, single buffered']
    #allocation7 [shape = 's32[1]{0}', space=sflag, size = 0x4, scoped, tag = 'scoped memory for tpu_custom_call.1']
    #allocation8 [shape = 'u8[40960]{0}', space=vmem, size = 0xa000, scoped, tag = 'input window, operand 2, single buffered']
    #allocation9 [shape = 'u8[512]{0}', space=smem, size = 0x200, scoped, tag = 'input window, operand 3, single buffered']
    #allocation10 [shape = 'u8[409600]{0}', space=vmem, size = 0x64000, scoped, tag = 'input window, operand 4, single buffered']
    #allocation11 [shape = 's32[1]{0}', space=sflag, size = 0x4, scoped, tag = 'scoped memory for tpu_custom_call.1']
    #allocation12 [shape = 'u8[40960]{0}', space=vmem, size = 0xa000, scoped, tag = 'input window, operand 5, single buffered']
    #allocation13 [shape = 'u8[512]{0}', space=smem, size = 0x200, scoped, tag = 'input window, operand 6, single buffered']
    #allocation14 [shape = 's32[1]{0}', space=sflag, size = 0x4, scoped, tag = 'scoped memory for tpu_custom_call.1']
    #allocation15 [shape = 'u8[40960]{0}', space=vmem, size = 0xa000, scoped, tag = 'input window, operand 7, single buffered']
    #allocation16 [shape = 's32[1]{0}', space=sflag, size = 0x4, scoped, tag = 'scoped memory for tpu_custom_call.1']
    #allocation17 [shape = 'u8[36864]{0}', space=vmem, size = 0x9000, scoped, tag = 'output window, operand 0, single buffered']
    %14 = vsyncpa [#allocation3], 0
    %15 = vsyncpa [#allocation7], 0
    %16 = vsyncpa [#allocation5], 0
    %17 = vsyncpa [#allocation11], 0
    %18 = vsyncpa [#allocation14], 0
    %19 = vsyncpa [#allocation16], 0
    %20 = vsyncpa [#allocation4], 0
    // Predicated region
    $region2: #{tpu_custom_call.1} parent=1 // pred_check
      _
    $region3: #{tpu_custom_call.1} parent=1 // pred_check_branch
      %22 = sbr.rel (0) target = $region5
    $region4: #{tpu_custom_call.1} parent=1 // pred_region
      %s24 = ssub.s32 1152, 1152
      %25 = vsyncadd [#allocation3], %s24
      %s26 = sshll.u32 [#allocation2], 4
      %s27 = int_to_ptr.vmem [resolvable:$true] %s26
      %32 = dma.hbm_to_vmem [thread:$0]  %s0, 1152, %s27, [#allocation3], 128, 128, 8
    $region5: #{tpu_custom_call.1} parent=1 // pred_fallthru
      _
    // Predicated region
    $region6: #{tpu_custom_call.1} parent=1 // pred_check
      _
    $region7: #{tpu_custom_call.1} parent=1 // pred_check_branch
      %34 = sbr.rel (0) target = $region9
    $region8: #{tpu_custom_call.1} parent=1 // pred_region
      %s36 = ssub.s32 1280, 1280
      %37 = vsyncadd [#allocation7], %s36
      %s38 = sshll.u32 [#allocation6], 4
      %s39 = int_to_ptr.vmem [resolvable:$true] %s38
      %44 = dma.hbm_to_vmem [thread:$0]  %s1, 1280, %s39, [#allocation7], 128, 128, 8
    $region9: #{tpu_custom_call.1} parent=1 // pred_fallthru
      _
    // Predicated region
    $region10: #{tpu_custom_call.1} parent=1 // pred_check
      _
    $region11: #{tpu_custom_call.1} parent=1 // pred_check_branch
      %46 = sbr.rel (0) target = $region13
    $region12: #{tpu_custom_call.1} parent=1 // pred_region
      %s48 = ssub.s32 1280, 1280
      %49 = vsyncadd [#allocation7], %s48
      %s50 = sshll.u32 [#allocation8], 4
      %s51 = int_to_ptr.vmem [resolvable:$true] %s50
      %56 = dma.hbm_to_vmem [thread:$0]  %s2, 1280, %s51, [#allocation7], 128, 128, 8
    $region13: #{tpu_custom_call.1} parent=1 // pred_fallthru
      _
    // Predicated region
    $region14: #{tpu_custom_call.1} parent=1 // pred_check
      _
    $region15: #{tpu_custom_call.1} parent=1 // pred_check_branch
      %58 = sbr.rel (0) target = $region17
    $region16: #{tpu_custom_call.1} parent=1 // pred_region
      %s60 = ssub.s32 16, 16
      %61 = vsyncadd [#allocation5], %s60
      %s63 = sshll.u32 %s3, 4
      %s64 = int_to_ptr.vmem [resolvable:$true] %s63
      %66 = dma.vmem_to_smem %s64, 16, [#allocation9], [#allocation5]
    $region17: #{tpu_custom_call.1} parent=1 // pred_fallthru
      _
    // Predicated region
    $region18: #{tpu_custom_call.1} parent=1 // pred_check
      _
    $region19: #{tpu_custom_call.1} parent=1 // pred_check_branch
      %68 = sbr.rel (0) target = $region21
    $region20: #{tpu_custom_call.1} parent=1 // pred_region
      %s70 = ssub.s32 12800, 12800
      %71 = vsyncadd [#allocation11], %s70
      %s72 = sshll.u32 [#allocation10], 4
      %s73 = int_to_ptr.vmem [resolvable:$true] %s72
      %78 = dma.hbm_to_vmem [thread:$0]  %s4, 12800, %s73, [#allocation11], 128, 128, 8
    $region21: #{tpu_custom_call.1} parent=1 // pred_fallthru
      _
    // Predicated region
    $region22: #{tpu_custom_call.1} parent=1 // pred_check
      _
    $region23: #{tpu_custom_call.1} parent=1 // pred_check_branch
      %80 = sbr.rel (0) target = $region25
    $region24: #{tpu_custom_call.1} parent=1 // pred_region
      %s82 = ssub.s32 1280, 1280
      %83 = vsyncadd [#allocation11], %s82
      %s84 = sshll.u32 [#allocation12], 4
      %s85 = int_to_ptr.vmem [resolvable:$true] %s84
      %90 = dma.hbm_to_vmem [thread:$0]  %s5, 1280, %s85, [#allocation11], 128, 128, 8
    $region25: #{tpu_custom_call.1} parent=1 // pred_fallthru
      _
    // Predicated region
    $region26: #{tpu_custom_call.1} parent=1 // pred_check
      _
    $region27: #{tpu_custom_call.1} parent=1 // pred_check_branch
      %92 = sbr.rel (0) target = $region29
    $region28: #{tpu_custom_call.1} parent=1 // pred_region
      %s94 = ssub.s32 16, 16
      %95 = vsyncadd [#allocation14], %s94
      %s97 = sshll.u32 %s6, 4
      %s98 = int_to_ptr.vmem [resolvable:$true] %s97
      %100 = dma.vmem_to_smem %s98, 16, [#allocation13], [#allocation14]
    $region29: #{tpu_custom_call.1} parent=1 // pred_fallthru
      _
    // Predicated region
    $region30: #{tpu_custom_call.1} parent=1 // pred_check
      _
    $region31: #{tpu_custom_call.1} parent=1 // pred_check_branch
      %102 = sbr.rel (0) target = $region33
    $region32: #{tpu_custom_call.1} parent=1 // pred_region
      %s104 = ssub.s32 1280, 1280
      %105 = vsyncadd [#allocation16], %s104
      %s106 = sshll.u32 [#allocation15], 4
      %s107 = int_to_ptr.vmem [resolvable:$true] %s106
      %112 = dma.hbm_to_vmem [thread:$0]  %s7, 1280, %s107, [#allocation16], 128, 128, 8
    $region33: #{tpu_custom_call.1} parent=1 // pred_fallthru
      _
    // Predicated region
    $region34: #{tpu_custom_call.1} parent=1 // pred_check
      _
    $region35: #{tpu_custom_call.1} parent=1 // pred_check_branch
      %114 = sbr.rel (0) target = $region37
    $region36: #{tpu_custom_call.1} parent=1 // pred_region
      _
    $region37: #{tpu_custom_call.1} parent=1 // pred_fallthru
      _
    // Predicated region
    $region38: #{tpu_custom_call.1} parent=1 // pred_check
      _
    $region39: #{tpu_custom_call.1} parent=1 // pred_check_branch
      %116 = sbr.rel (0) target = $region41
    $region40: #{tpu_custom_call.1} parent=1 // pred_region
      %117 = dma.done [#allocation3], 1152
    $region41: #{tpu_custom_call.1} parent=1 // pred_fallthru
      _
    // Predicated region
    $region42: #{tpu_custom_call.1} parent=1 // pred_check
      _
    $region43: #{tpu_custom_call.1} parent=1 // pred_check_branch
      %119 = sbr.rel (0) target = $region45
    $region44: #{tpu_custom_call.1} parent=1 // pred_region
      %120 = dma.done [#allocation7], 1280
    $region45: #{tpu_custom_call.1} parent=1 // pred_fallthru
      _
    // Predicated region
    $region46: #{tpu_custom_call.1} parent=1 // pred_check
      _
    $region47: #{tpu_custom_call.1} parent=1 // pred_check_branch
      %122 = sbr.rel (0) target = $region49
    $region48: #{tpu_custom_call.1} parent=1 // pred_region
      %123 = dma.done [#allocation7], 1280
    $region49: #{tpu_custom_call.1} parent=1 // pred_fallthru
      _
    // Predicated region
    $region50: #{tpu_custom_call.1} parent=1 // pred_check
      _
    $region51: #{tpu_custom_call.1} parent=1 // pred_check_branch
      %125 = sbr.rel (0) target = $region53
    $region52: #{tpu_custom_call.1} parent=1 // pred_region
      %126 = dma.done [#allocation5], 16
    $region53: #{tpu_custom_call.1} parent=1 // pred_fallthru
      _
    // Predicated region
    $region54: #{tpu_custom_call.1} parent=1 // pred_check
      _
    $region55: #{tpu_custom_call.1} parent=1 // pred_check_branch
      %128 = sbr.rel (0) target = $region57
    $region56: #{tpu_custom_call.1} parent=1 // pred_region
      %129 = dma.done [#allocation11], 12800
    $region57: #{tpu_custom_call.1} parent=1 // pred_fallthru
      _
    // Predicated region
    $region58: #{tpu_custom_call.1} parent=1 // pred_check
      _
    $region59: #{tpu_custom_call.1} parent=1 // pred_check_branch
      %131 = sbr.rel (0) target = $region61
    $region60: #{tpu_custom_call.1} parent=1 // pred_region
      %132 = dma.done [#allocation11], 1280
    $region61: #{tpu_custom_call.1} parent=1 // pred_fallthru
      _
    // Predicated region
    $region62: #{tpu_custom_call.1} parent=1 // pred_check
      _
    $region63: #{tpu_custom_call.1} parent=1 // pred_check_branch
      %134 = sbr.rel (0) target = $region65
    $region64: #{tpu_custom_call.1} parent=1 // pred_region
      %135 = dma.done [#allocation14], 16
    $region65: #{tpu_custom_call.1} parent=1 // pred_fallthru
      _
    // Predicated region
    $region66: #{tpu_custom_call.1} parent=1 // pred_check
      _
    $region67: #{tpu_custom_call.1} parent=1 // pred_check_branch
      %137 = sbr.rel (0) target = $region69
    $region68: #{tpu_custom_call.1} parent=1 // pred_region
      %138 = dma.done [#allocation16], 1280
    $region69: #{tpu_custom_call.1} parent=1 // pred_fallthru
      _
    %139 = sfence
    loop: start=0, step=1, limit=3
    $region70: #{tpu_custom_call.1} parent=1 // loop_pre_header
      _
    $region71: #{tpu_custom_call.1} parent=1 // loop_header
      %s141 = sphi 0, %s145
      %p142 = scmp.ge.s32.totalorder %s141, 3
    $region72: #{tpu_custom_call.1} parent=1 // loop_header_branch
      %144 = sbr.rel (%p142) target = $region76
    $region73: #{tpu_custom_call.1} parent=1 // loop_body
      %s146 = smul.u32 %s141, 3
      %s147 = smul.u32 %s146, 8
      %s148 = scalar_lea.vmem [#allocation2], %s147
      %v149 = vld [vmem:[%s148] sm:$0xff]
      %v150 = vld [vmem:[%s148 + $0x8] sm:$0xff]
      %v151 = vld [vmem:[%s148 + $0x10] sm:$0xff]
      %v152 = vld [vmem:[#allocation6] sm:$0xff]
      %v153 = vmul.f32 %v149, %v152
      %v154 = vmul.f32 %v150, %v152
      %v155 = vmul.f32 %v151, %v152
      %v156 = vld [vmem:[#allocation8] sm:$0xff]
      %v157 = vadd.f32 %v153, %v156
      %v158 = vadd.f32 %v154, %v156
      %v159 = vadd.f32 %v155, %v156
      %vm160 = vcmp.gt.f32.partialorder %v157, 0.0
      %vm161 = vcmp.gt.f32.partialorder %v158, 0.0
      %vm162 = vcmp.gt.f32.partialorder %v159, 0.0
      %s163 = sld [smem:[#allocation9]]
      %v164 = vstv %s163
      %v165 = vmul.f32 %v164, %v157
      %v166 = vmul.f32 %v164, %v158
      %v167 = vmul.f32 %v164, %v159
      %v168 = vsel %vm160, %v157, %v165
      %v169 = vsel %vm161, %v158, %v166
      %v170 = vsel %vm162, %v159, %v167
      %s171 = scalar_lea.vmem [#allocation6], 8
      %v172 = vld [vmem:[%s171] sm:$0xff]
      %v173 = vmul.f32 %v149, %v172
      %v174 = vmul.f32 %v150, %v172
      %v175 = vmul.f32 %v151, %v172
      %s176 = scalar_lea.vmem [#allocation8], 8
      %v177 = vld [vmem:[%s176] sm:$0xff]
      %v178 = vadd.f32 %v173, %v177
      %v179 = vadd.f32 %v174, %v177
      %v180 = vadd.f32 %v175, %v177
      %vm181 = vcmp.gt.f32.partialorder %v178, 0.0
      %vm182 = vcmp.gt.f32.partialorder %v179, 0.0
      %vm183 = vcmp.gt.f32.partialorder %v180, 0.0
      %s184 = sld [smem:[#allocation9 + $0x1]]
      %v185 = vstv %s184
      %v186 = vmul.f32 %v185, %v178
      %v187 = vmul.f32 %v185, %v179
      %v188 = vmul.f32 %v185, %v180
      %v189 = vsel %vm181, %v178, %v186
      %v190 = vsel %vm182, %v179, %v187
      %v191 = vsel %vm183, %v180, %v188
      %s192 = scalar_lea.vmem [#allocation6], 16
      %v193 = vld [vmem:[%s192] sm:$0xff]
      %v194 = vmul.f32 %v149, %v193
      %v195 = vmul.f32 %v150, %v193
      %v196 = vmul.f32 %v151, %v193
      %s197 = scalar_lea.vmem [#allocation8], 16
      %v198 = vld [vmem:[%s197] sm:$0xff]
      %v199 = vadd.f32 %v194, %v198
      %v200 = vadd.f32 %v195, %v198
      %v201 = vadd.f32 %v196, %v198
      %vm202 = vcmp.gt.f32.partialorder %v199, 0.0
      %vm203 = vcmp.gt.f32.partialorder %v200, 0.0
      %vm204 = vcmp.gt.f32.partialorder %v201, 0.0
      %s205 = sld [smem:[#allocation9 + $0x2]]
      %v206 = vstv %s205
      %v207 = vmul.f32 %v206, %v199
      %v208 = vmul.f32 %v206, %v200
      %v209 = vmul.f32 %v206, %v201
      %v210 = vsel %vm202, %v199, %v207
      %v211 = vsel %vm203, %v200, %v208
      %v212 = vsel %vm204, %v201, %v209
      %s213 = scalar_lea.vmem [#allocation6], 24
      %v214 = vld [vmem:[%s213] sm:$0xff]
      %v215 = vmul.f32 %v149, %v214
      %v216 = vmul.f32 %v150, %v214
      %v217 = vmul.f32 %v151, %v214
      %s218 = scalar_lea.vmem [#allocation8], 24
      %v219 = vld [vmem:[%s218] sm:$0xff]
      %v220 = vadd.f32 %v215, %v219
      %v221 = vadd.f32 %v216, %v219
      %v222 = vadd.f32 %v217, %v219
      %vm223 = vcmp.gt.f32.partialorder %v220, 0.0
      %vm224 = vcmp.gt.f32.partialorder %v221, 0.0
      %vm225 = vcmp.gt.f32.partialorder %v222, 0.0
      %s226 = sld [smem:[#allocation9 + $0x3]]
      %v227 = vstv %s226
      %v228 = vmul.f32 %v227, %v220
      %v229 = vmul.f32 %v227, %v221
      %v230 = vmul.f32 %v227, %v222
      %v231 = vsel %vm223, %v220, %v228
      %v232 = vsel %vm224, %v221, %v229
      %v233 = vsel %vm225, %v222, %v230
      %s234 = scalar_lea.vmem [#allocation6], 32
      %v235 = vld [vmem:[%s234] sm:$0xff]
      %v236 = vmul.f32 %v149, %v235
      %v237 = vmul.f32 %v150, %v235
      %v238 = vmul.f32 %v151, %v235
      %s239 = scalar_lea.vmem [#allocation8], 32
      %v240 = vld [vmem:[%s239] sm:$0xff]
      %v241 = vadd.f32 %v236, %v240
      %v242 = vadd.f32 %v237, %v240
      %v243 = vadd.f32 %v238, %v240
      %vm244 = vcmp.gt.f32.partialorder %v241, 0.0
      %vm245 = vcmp.gt.f32.partialorder %v242, 0.0
      %vm246 = vcmp.gt.f32.partialorder %v243, 0.0
      %s247 = sld [smem:[#allocation9 + $0x4]]
      %v248 = vstv %s247
      %v249 = vmul.f32 %v248, %v241
      %v250 = vmul.f32 %v248, %v242
      %v251 = vmul.f32 %v248, %v243
      %v252 = vsel %vm244, %v241, %v249
      %v253 = vsel %vm245, %v242, %v250
      %v254 = vsel %vm246, %v243, %v251
      %s255 = scalar_lea.vmem [#allocation6], 40
      %v256 = vld [vmem:[%s255] sm:$0xff]
      %v257 = vmul.f32 %v149, %v256
      %v258 = vmul.f32 %v150, %v256
      %v259 = vmul.f32 %v151, %v256
      %s260 = scalar_lea.vmem [#allocation8], 40
      %v261 = vld [vmem:[%s260] sm:$0xff]
      %v262 = vadd.f32 %v257, %v261
      %v263 = vadd.f32 %v258, %v261
      %v264 = vadd.f32 %v259, %v261
      %vm265 = vcmp.gt.f32.partialorder %v262, 0.0
      %vm266 = vcmp.gt.f32.partialorder %v263, 0.0
      %vm267 = vcmp.gt.f32.partialorder %v264, 0.0
      %s268 = sld [smem:[#allocation9 + $0x5]]
      %v269 = vstv %s268
      %v270 = vmul.f32 %v269, %v262
      %v271 = vmul.f32 %v269, %v263
      %v272 = vmul.f32 %v269, %v264
      %v273 = vsel %vm265, %v262, %v270
      %v274 = vsel %vm266, %v263, %v271
      %v275 = vsel %vm267, %v264, %v272
      %s276 = scalar_lea.vmem [#allocation6], 48
      %v277 = vld [vmem:[%s276] sm:$0xff]
      %v278 = vmul.f32 %v149, %v277
      %v279 = vmul.f32 %v150, %v277
      %v280 = vmul.f32 %v151, %v277
      %s281 = scalar_lea.vmem [#allocation8], 48
      %v282 = vld [vmem:[%s281] sm:$0xff]
      %v283 = vadd.f32 %v278, %v282
      %v284 = vadd.f32 %v279, %v282
      %v285 = vadd.f32 %v280, %v282
      %vm286 = vcmp.gt.f32.partialorder %v283, 0.0
      %vm287 = vcmp.gt.f32.partialorder %v284, 0.0
      %vm288 = vcmp.gt.f32.partialorder %v285, 0.0
      %s289 = sld [smem:[#allocation9 + $0x6]]
      %v290 = vstv %s289
      %v291 = vmul.f32 %v290, %v283
      %v292 = vmul.f32 %v290, %v284
      %v293 = vmul.f32 %v290, %v285
      %v294 = vsel %vm286, %v283, %v291
      %v295 = vsel %vm287, %v284, %v292
      %v296 = vsel %vm288, %v285, %v293
      %s297 = scalar_lea.vmem [#allocation6], 56
      %v298 = vld [vmem:[%s297] sm:$0xff]
      %v299 = vmul.f32 %v149, %v298
      %v300 = vmul.f32 %v150, %v298
      %v301 = vmul.f32 %v151, %v298
      %s302 = scalar_lea.vmem [#allocation8], 56
      %v303 = vld [vmem:[%s302] sm:$0xff]
      %v304 = vadd.f32 %v299, %v303
      %v305 = vadd.f32 %v300, %v303
      %v306 = vadd.f32 %v301, %v303
      %vm307 = vcmp.gt.f32.partialorder %v304, 0.0
      %vm308 = vcmp.gt.f32.partialorder %v305, 0.0
      %vm309 = vcmp.gt.f32.partialorder %v306, 0.0
      %s310 = sld [smem:[#allocation9 + $0x7]]
      %v311 = vstv %s310
      %v312 = vmul.f32 %v311, %v304
      %v313 = vmul.f32 %v311, %v305
      %v314 = vmul.f32 %v311, %v306
      %v315 = vsel %vm307, %v304, %v312
      %v316 = vsel %vm308, %v305, %v313
      %v317 = vsel %vm309, %v306, %v314
      %s318 = scalar_lea.vmem [#allocation6], 64
      %v319 = vld [vmem:[%s318] sm:$0xff]
      %v320 = vmul.f32 %v149, %v319
      %v321 = vmul.f32 %v150, %v319
      %v322 = vmul.f32 %v151, %v319
      %s323 = scalar_lea.vmem [#allocation8], 64
      %v324 = vld [vmem:[%s323] sm:$0xff]
      %v325 = vadd.f32 %v320, %v324
      %v326 = vadd.f32 %v321, %v324
      %v327 = vadd.f32 %v322, %v324
      %vm328 = vcmp.gt.f32.partialorder %v325, 0.0
      %vm329 = vcmp.gt.f32.partialorder %v326, 0.0
      %vm330 = vcmp.gt.f32.partialorder %v327, 0.0
      %s331 = sld [smem:[#allocation9 + $0x8]]
      %v332 = vstv %s331
      %v333 = vmul.f32 %v332, %v325
      %v334 = vmul.f32 %v332, %v326
      %v335 = vmul.f32 %v332, %v327
      %v336 = vsel %vm328, %v325, %v333
      %v337 = vsel %vm329, %v326, %v334
      %v338 = vsel %vm330, %v327, %v335
      %s339 = scalar_lea.vmem [#allocation6], 72
      %v340 = vld [vmem:[%s339] sm:$0xff]
      %v341 = vmul.f32 %v149, %v340
      %v342 = vmul.f32 %v150, %v340
      %v343 = vmul.f32 %v151, %v340
      %s344 = scalar_lea.vmem [#allocation8], 72
      %v345 = vld [vmem:[%s344] sm:$0xff]
      %v346 = vadd.f32 %v341, %v345
      %v347 = vadd.f32 %v342, %v345
      %v348 = vadd.f32 %v343, %v345
      %vm349 = vcmp.gt.f32.partialorder %v346, 0.0
      %vm350 = vcmp.gt.f32.partialorder %v347, 0.0
      %vm351 = vcmp.gt.f32.partialorder %v348, 0.0
      %s352 = sld [smem:[#allocation9 + $0x9]]
      %v353 = vstv %s352
      %v354 = vmul.f32 %v353, %v346
      %v355 = vmul.f32 %v353, %v347
      %v356 = vmul.f32 %v353, %v348
      %v357 = vsel %vm349, %v346, %v354
      %v358 = vsel %vm350, %v347, %v355
      %v359 = vsel %vm351, %v348, %v356
      %v360 = vld [vmem:[%s8] sm:$0xff]
      %v361 = vld [vmem:[#allocation12] sm:$0xff]
      %v362 = vld [vmem:[#allocation10] sm:$0xff]
      %v363 = vmul.f32 %v362, %v168
      %v364 = vmul.f32 %v362, %v169
      %v365 = vmul.f32 %v362, %v170
      %v366 = vadd.f32 %v361, %v363
      %v367 = vadd.f32 %v361, %v364
      %v368 = vadd.f32 %v361, %v365
      %s369 = scalar_lea.vmem [#allocation10], 8
      %v370 = vld [vmem:[%s369] sm:$0xff]
      %v371 = vmul.f32 %v370, %v189
      %v372 = vmul.f32 %v370, %v190
      %v373 = vmul.f32 %v370, %v191
      %v374 = vadd.f32 %v366, %v371
      %v375 = vadd.f32 %v367, %v372
      %v376 = vadd.f32 %v368, %v373
      %s377 = scalar_lea.vmem [#allocation10], 16
      %v378 = vld [vmem:[%s377] sm:$0xff]
      %v379 = vmul.f32 %v378, %v210
      %v380 = vmul.f32 %v378, %v211
      %v381 = vmul.f32 %v378, %v212
      %v382 = vadd.f32 %v374, %v379
      %v383 = vadd.f32 %v375, %v380
      %v384 = vadd.f32 %v376, %v381
      %s385 = scalar_lea.vmem [#allocation10], 24
      %v386 = vld [vmem:[%s385] sm:$0xff]
      %v387 = vmul.f32 %v386, %v231
      %v388 = vmul.f32 %v386, %v232
      %v389 = vmul.f32 %v386, %v233
      %v390 = vadd.f32 %v382, %v387
      %v391 = vadd.f32 %v383, %v388
      %v392 = vadd.f32 %v384, %v389
      %s393 = scalar_lea.vmem [#allocation10], 32
      %v394 = vld [vmem:[%s393] sm:$0xff]
      %v395 = vmul.f32 %v394, %v252
      %v396 = vmul.f32 %v394, %v253
      %v397 = vmul.f32 %v394, %v254
      %v398 = vadd.f32 %v390, %v395
      %v399 = vadd.f32 %v391, %v396
      %v400 = vadd.f32 %v392, %v397
      %s401 = scalar_lea.vmem [#allocation10], 40
      %v402 = vld [vmem:[%s401] sm:$0xff]
      %v403 = vmul.f32 %v402, %v273
      %v404 = vmul.f32 %v402, %v274
      %v405 = vmul.f32 %v402, %v275
      %v406 = vadd.f32 %v398, %v403
      %v407 = vadd.f32 %v399, %v404
      %v408 = vadd.f32 %v400, %v405
      %s409 = scalar_lea.vmem [#allocation10], 48
      %v410 = vld [vmem:[%s409] sm:$0xff]
      %v411 = vmul.f32 %v410, %v294
      %v412 = vmul.f32 %v410, %v295
      %v413 = vmul.f32 %v410, %v296
      %v414 = vadd.f32 %v406, %v411
      %v415 = vadd.f32 %v407, %v412
      %v416 = vadd.f32 %v408, %v413
      %s417 = scalar_lea.vmem [#allocation10], 56
      %v418 = vld [vmem:[%s417] sm:$0xff]
      %v419 = vmul.f32 %v418, %v315
      %v420 = vmul.f32 %v418, %v316
      %v421 = vmul.f32 %v418, %v317
      %v422 = vadd.f32 %v414, %v419
      %v423 = vadd.f32 %v415, %v420
      %v424 = vadd.f32 %v416, %v421
      %s425 = scalar_lea.vmem [#allocation10], 64
      %v426 = vld [vmem:[%s425] sm:$0xff]
      %v427 = vmul.f32 %v426, %v336
      %v428 = vmul.f32 %v426, %v337
      %v429 = vmul.f32 %v426, %v338
      %v430 = vadd.f32 %v422, %v427
      %v431 = vadd.f32 %v423, %v428
      %v432 = vadd.f32 %v424, %v429
      %s433 = scalar_lea.vmem [#allocation10], 72
      %v434 = vld [vmem:[%s433] sm:$0xff]
      %v435 = vmul.f32 %v434, %v357
      %v436 = vmul.f32 %v434, %v358
      %v437 = vmul.f32 %v434, %v359
      %v438 = vadd.f32 %v430, %v435
      %v439 = vadd.f32 %v431, %v436
      %v440 = vadd.f32 %v432, %v437
      %vm441 = vcmp.gt.f32.partialorder %v438, 0.0
      %vm442 = vcmp.gt.f32.partialorder %v439, 0.0
      %vm443 = vcmp.gt.f32.partialorder %v440, 0.0
      %s444 = sld [smem:[#allocation13]]
      %v445 = vstv %s444
      %v446 = vmul.f32 %v445, %v438
      %v447 = vmul.f32 %v445, %v439
      %v448 = vmul.f32 %v445, %v440
      %v449 = vsel %vm441, %v438, %v446
      %v450 = vsel %vm442, %v439, %v447
      %v451 = vsel %vm443, %v440, %v448
      %v452 = vld [vmem:[#allocation15] sm:$0xff]
      %v453 = vmul.f32 %v452, %v449
      %v454 = vmul.f32 %v452, %v450
      %v455 = vmul.f32 %v452, %v451
      %v456 = vadd.f32 %v360, %v453
      %v457 = vadd.f32 %v360, %v454
      %v458 = vadd.f32 %v360, %v455
      %s459 = scalar_lea.vmem [#allocation12], 8
      %v460 = vld [vmem:[%s459] sm:$0xff]
      %s461 = scalar_lea.vmem [#allocation10], 80
      %v462 = vld [vmem:[%s461] sm:$0xff]
      %v463 = vmul.f32 %v462, %v168
      %v464 = vmul.f32 %v462, %v169
      %v465 = vmul.f32 %v462, %v170
      %v466 = vadd.f32 %v460, %v463
      %v467 = vadd.f32 %v460, %v464
      %v468 = vadd.f32 %v460, %v465
      %s469 = scalar_lea.vmem [#allocation10], 88
      %v470 = vld [vmem:[%s469] sm:$0xff]
      %v471 = vmul.f32 %v470, %v189
      %v472 = vmul.f32 %v470, %v190
      %v473 = vmul.f32 %v470, %v191
      %v474 = vadd.f32 %v466, %v471
      %v475 = vadd.f32 %v467, %v472
      %v476 = vadd.f32 %v468, %v473
      %s477 = scalar_lea.vmem [#allocation10], 96
      %v478 = vld [vmem:[%s477] sm:$0xff]
      %v479 = vmul.f32 %v478, %v210
      %v480 = vmul.f32 %v478, %v211
      %v481 = vmul.f32 %v478, %v212
      %v482 = vadd.f32 %v474, %v479
      %v483 = vadd.f32 %v475, %v480
      %v484 = vadd.f32 %v476, %v481
      %s485 = scalar_lea.vmem [#allocation10], 104
      %v486 = vld [vmem:[%s485] sm:$0xff]
      %v487 = vmul.f32 %v486, %v231
      %v488 = vmul.f32 %v486, %v232
      %v489 = vmul.f32 %v486, %v233
      %v490 = vadd.f32 %v482, %v487
      %v491 = vadd.f32 %v483, %v488
      %v492 = vadd.f32 %v484, %v489
      %s493 = scalar_lea.vmem [#allocation10], 112
      %v494 = vld [vmem:[%s493] sm:$0xff]
      %v495 = vmul.f32 %v494, %v252
      %v496 = vmul.f32 %v494, %v253
      %v497 = vmul.f32 %v494, %v254
      %v498 = vadd.f32 %v490, %v495
      %v499 = vadd.f32 %v491, %v496
      %v500 = vadd.f32 %v492, %v497
      %s501 = scalar_lea.vmem [#allocation10], 120
      %v502 = vld [vmem:[%s501] sm:$0xff]
      %v503 = vmul.f32 %v502, %v273
      %v504 = vmul.f32 %v502, %v274
      %v505 = vmul.f32 %v502, %v275
      %v506 = vadd.f32 %v498, %v503
      %v507 = vadd.f32 %v499, %v504
      %v508 = vadd.f32 %v500, %v505
      %s509 = scalar_lea.vmem [#allocation10], 128
      %v510 = vld [vmem:[%s509] sm:$0xff]
      %v511 = vmul.f32 %v510, %v294
      %v512 = vmul.f32 %v510, %v295
      %v513 = vmul.f32 %v510, %v296
      %v514 = vadd.f32 %v506, %v511
      %v515 = vadd.f32 %v507, %v512
      %v516 = vadd.f32 %v508, %v513
      %s517 = scalar_lea.vmem [#allocation10], 136
      %v518 = vld [vmem:[%s517] sm:$0xff]
      %v519 = vmul.f32 %v518, %v315
      %v520 = vmul.f32 %v518, %v316
      %v521 = vmul.f32 %v518, %v317
      %v522 = vadd.f32 %v514, %v519
      %v523 = vadd.f32 %v515, %v520
      %v524 = vadd.f32 %v516, %v521
      %s525 = scalar_lea.vmem [#allocation10], 144
      %v526 = vld [vmem:[%s525] sm:$0xff]
      %v527 = vmul.f32 %v526, %v336
      %v528 = vmul.f32 %v526, %v337
      %v529 = vmul.f32 %v526, %v338
      %v530 = vadd.f32 %v522, %v527
      %v531 = vadd.f32 %v523, %v528
      %v532 = vadd.f32 %v524, %v529
      %s533 = scalar_lea.vmem [#allocation10], 152
      %v534 = vld [vmem:[%s533] sm:$0xff]
      %v535 = vmul.f32 %v534, %v357
      %v536 = vmul.f32 %v534, %v358
      %v537 = vmul.f32 %v534, %v359
      %v538 = vadd.f32 %v530, %v535
      %v539 = vadd.f32 %v531, %v536
      %v540 = vadd.f32 %v532, %v537
      %vm541 = vcmp.gt.f32.partialorder %v538, 0.0
      %vm542 = vcmp.gt.f32.partialorder %v539, 0.0
      %vm543 = vcmp.gt.f32.partialorder %v540, 0.0
      %s544 = sld [smem:[#allocation13 + $0x1]]
      %v545 = vstv %s544
      %v546 = vmul.f32 %v545, %v538
      %v547 = vmul.f32 %v545, %v539
      %v548 = vmul.f32 %v545, %v540
      %v549 = vsel %vm541, %v538, %v546
      %v550 = vsel %vm542, %v539, %v547
      %v551 = vsel %vm543, %v540, %v548
      %s552 = scalar_lea.vmem [#allocation15], 8
      %v553 = vld [vmem:[%s552] sm:$0xff]
      %v554 = vmul.f32 %v553, %v549
      %v555 = vmul.f32 %v553, %v550
      %v556 = vmul.f32 %v553, %v551
      %v557 = vadd.f32 %v456, %v554
      %v558 = vadd.f32 %v457, %v555
      %v559 = vadd.f32 %v458, %v556
      %s560 = scalar_lea.vmem [#allocation12], 16
      %v561 = vld [vmem:[%s560] sm:$0xff]
      %s562 = scalar_lea.vmem [#allocation10], 160
      %v563 = vld [vmem:[%s562] sm:$0xff]
      %v564 = vmul.f32 %v563, %v168
      %v565 = vmul.f32 %v563, %v169
      %v566 = vmul.f32 %v563, %v170
      %v567 = vadd.f32 %v561, %v564
      %v568 = vadd.f32 %v561, %v565
      %v569 = vadd.f32 %v561, %v566
      %s570 = scalar_lea.vmem [#allocation10], 168
      %v571 = vld [vmem:[%s570] sm:$0xff]
      %v572 = vmul.f32 %v571, %v189
      %v573 = vmul.f32 %v571, %v190
      %v574 = vmul.f32 %v571, %v191
      %v575 = vadd.f32 %v567, %v572
      %v576 = vadd.f32 %v568, %v573
      %v577 = vadd.f32 %v569, %v574
      %s578 = scalar_lea.vmem [#allocation10], 176
      %v579 = vld [vmem:[%s578] sm:$0xff]
      %v580 = vmul.f32 %v579, %v210
      %v581 = vmul.f32 %v579, %v211
      %v582 = vmul.f32 %v579, %v212
      %v583 = vadd.f32 %v575, %v580
      %v584 = vadd.f32 %v576, %v581
      %v585 = vadd.f32 %v577, %v582
      %s586 = scalar_lea.vmem [#allocation10], 184
      %v587 = vld [vmem:[%s586] sm:$0xff]
      %v588 = vmul.f32 %v587, %v231
      %v589 = vmul.f32 %v587, %v232
      %v590 = vmul.f32 %v587, %v233
      %v591 = vadd.f32 %v583, %v588
      %v592 = vadd.f32 %v584, %v589
      %v593 = vadd.f32 %v585, %v590
      %s594 = scalar_lea.vmem [#allocation10], 192
      %v595 = vld [vmem:[%s594] sm:$0xff]
      %v596 = vmul.f32 %v595, %v252
      %v597 = vmul.f32 %v595, %v253
      %v598 = vmul.f32 %v595, %v254
      %v599 = vadd.f32 %v591, %v596
      %v600 = vadd.f32 %v592, %v597
      %v601 = vadd.f32 %v593, %v598
      %s602 = scalar_lea.vmem [#allocation10], 200
      %v603 = vld [vmem:[%s602] sm:$0xff]
      %v604 = vmul.f32 %v603, %v273
      %v605 = vmul.f32 %v603, %v274
      %v606 = vmul.f32 %v603, %v275
      %v607 = vadd.f32 %v599, %v604
      %v608 = vadd.f32 %v600, %v605
      %v609 = vadd.f32 %v601, %v606
      %s610 = scalar_lea.vmem [#allocation10], 208
      %v611 = vld [vmem:[%s610] sm:$0xff]
      %v612 = vmul.f32 %v611, %v294
      %v613 = vmul.f32 %v611, %v295
      %v614 = vmul.f32 %v611, %v296
      %v615 = vadd.f32 %v607, %v612
      %v616 = vadd.f32 %v608, %v613
      %v617 = vadd.f32 %v609, %v614
      %s618 = scalar_lea.vmem [#allocation10], 216
      %v619 = vld [vmem:[%s618] sm:$0xff]
      %v620 = vmul.f32 %v619, %v315
      %v621 = vmul.f32 %v619, %v316
      %v622 = vmul.f32 %v619, %v317
      %v623 = vadd.f32 %v615, %v620
      %v624 = vadd.f32 %v616, %v621
      %v625 = vadd.f32 %v617, %v622
      %s626 = scalar_lea.vmem [#allocation10], 224
      %v627 = vld [vmem:[%s626] sm:$0xff]
      %v628 = vmul.f32 %v627, %v336
      %v629 = vmul.f32 %v627, %v337
      %v630 = vmul.f32 %v627, %v338
      %v631 = vadd.f32 %v623, %v628
      %v632 = vadd.f32 %v624, %v629
      %v633 = vadd.f32 %v625, %v630
      %s634 = scalar_lea.vmem [#allocation10], 232
      %v635 = vld [vmem:[%s634] sm:$0xff]
      %v636 = vmul.f32 %v635, %v357
      %v637 = vmul.f32 %v635, %v358
      %v638 = vmul.f32 %v635, %v359
      %v639 = vadd.f32 %v631, %v636
      %v640 = vadd.f32 %v632, %v637
      %v641 = vadd.f32 %v633, %v638
      %vm642 = vcmp.gt.f32.partialorder %v639, 0.0
      %vm643 = vcmp.gt.f32.partialorder %v640, 0.0
      %vm644 = vcmp.gt.f32.partialorder %v641, 0.0
      %s645 = sld [smem:[#allocation13 + $0x2]]
      %v646 = vstv %s645
      %v647 = vmul.f32 %v646, %v639
      %v648 = vmul.f32 %v646, %v640
      %v649 = vmul.f32 %v646, %v641
      %v650 = vsel %vm642, %v639, %v647
      %v651 = vsel %vm643, %v640, %v648
      %v652 = vsel %vm644, %v641, %v649
      %s653 = scalar_lea.vmem [#allocation15], 16
      %v654 = vld [vmem:[%s653] sm:$0xff]
      %v655 = vmul.f32 %v654, %v650
      %v656 = vmul.f32 %v654, %v651
      %v657 = vmul.f32 %v654, %v652
      %v658 = vadd.f32 %v557, %v655
      %v659 = vadd.f32 %v558, %v656
      %v660 = vadd.f32 %v559, %v657
      %s661 = scalar_lea.vmem [#allocation12], 24
      %v662 = vld [vmem:[%s661] sm:$0xff]
      %s663 = scalar_lea.vmem [#allocation10], 240
      %v664 = vld [vmem:[%s663] sm:$0xff]
      %v665 = vmul.f32 %v664, %v168
      %v666 = vmul.f32 %v664, %v169
      %v667 = vmul.f32 %v664, %v170
      %v668 = vadd.f32 %v662, %v665
      %v669 = vadd.f32 %v662, %v666
      %v670 = vadd.f32 %v662, %v667
      %s671 = scalar_lea.vmem [#allocation10], 248
      %v672 = vld [vmem:[%s671] sm:$0xff]
      %v673 = vmul.f32 %v672, %v189
      %v674 = vmul.f32 %v672, %v190
      %v675 = vmul.f32 %v672, %v191
      %v676 = vadd.f32 %v668, %v673
      %v677 = vadd.f32 %v669, %v674
      %v678 = vadd.f32 %v670, %v675
      %s679 = scalar_lea.vmem [#allocation10], 256
      %v680 = vld [vmem:[%s679] sm:$0xff]
      %v681 = vmul.f32 %v680, %v210
      %v682 = vmul.f32 %v680, %v211
      %v683 = vmul.f32 %v680, %v212
      %v684 = vadd.f32 %v676, %v681
      %v685 = vadd.f32 %v677, %v682
      %v686 = vadd.f32 %v678, %v683
      %s687 = scalar_lea.vmem [#allocation10], 264
      %v688 = vld [vmem:[%s687] sm:$0xff]
      %v689 = vmul.f32 %v688, %v231
      %v690 = vmul.f32 %v688, %v232
      %v691 = vmul.f32 %v688, %v233
      %v692 = vadd.f32 %v684, %v689
      %v693 = vadd.f32 %v685, %v690
      %v694 = vadd.f32 %v686, %v691
      %s695 = scalar_lea.vmem [#allocation10], 272
      %v696 = vld [vmem:[%s695] sm:$0xff]
      %v697 = vmul.f32 %v696, %v252
      %v698 = vmul.f32 %v696, %v253
      %v699 = vmul.f32 %v696, %v254
      %v700 = vadd.f32 %v692, %v697
      %v701 = vadd.f32 %v693, %v698
      %v702 = vadd.f32 %v694, %v699
      %s703 = scalar_lea.vmem [#allocation10], 280
      %v704 = vld [vmem:[%s703] sm:$0xff]
      %v705 = vmul.f32 %v704, %v273
      %v706 = vmul.f32 %v704, %v274
      %v707 = vmul.f32 %v704, %v275
      %v708 = vadd.f32 %v700, %v705
      %v709 = vadd.f32 %v701, %v706
      %v710 = vadd.f32 %v702, %v707
      %s711 = scalar_lea.vmem [#allocation10], 288
      %v712 = vld [vmem:[%s711] sm:$0xff]
      %v713 = vmul.f32 %v712, %v294
      %v714 = vmul.f32 %v712, %v295
      %v715 = vmul.f32 %v712, %v296
      %v716 = vadd.f32 %v708, %v713
      %v717 = vadd.f32 %v709, %v714
      %v718 = vadd.f32 %v710, %v715
      %s719 = scalar_lea.vmem [#allocation10], 296
      %v720 = vld [vmem:[%s719] sm:$0xff]
      %v721 = vmul.f32 %v720, %v315
      %v722 = vmul.f32 %v720, %v316
      %v723 = vmul.f32 %v720, %v317
      %v724 = vadd.f32 %v716, %v721
      %v725 = vadd.f32 %v717, %v722
      %v726 = vadd.f32 %v718, %v723
      %s727 = scalar_lea.vmem [#allocation10], 304
      %v728 = vld [vmem:[%s727] sm:$0xff]
      %v729 = vmul.f32 %v728, %v336
      %v730 = vmul.f32 %v728, %v337
      %v731 = vmul.f32 %v728, %v338
      %v732 = vadd.f32 %v724, %v729
      %v733 = vadd.f32 %v725, %v730
      %v734 = vadd.f32 %v726, %v731
      %s735 = scalar_lea.vmem [#allocation10], 312
      %v736 = vld [vmem:[%s735] sm:$0xff]
      %v737 = vmul.f32 %v736, %v357
      %v738 = vmul.f32 %v736, %v358
      %v739 = vmul.f32 %v736, %v359
      %v740 = vadd.f32 %v732, %v737
      %v741 = vadd.f32 %v733, %v738
      %v742 = vadd.f32 %v734, %v739
      %vm743 = vcmp.gt.f32.partialorder %v740, 0.0
      %vm744 = vcmp.gt.f32.partialorder %v741, 0.0
      %vm745 = vcmp.gt.f32.partialorder %v742, 0.0
      %s746 = sld [smem:[#allocation13 + $0x3]]
      %v747 = vstv %s746
      %v748 = vmul.f32 %v747, %v740
      %v749 = vmul.f32 %v747, %v741
      %v750 = vmul.f32 %v747, %v742
      %v751 = vsel %vm743, %v740, %v748
      %v752 = vsel %vm744, %v741, %v749
      %v753 = vsel %vm745, %v742, %v750
      %s754 = scalar_lea.vmem [#allocation15], 24
      %v755 = vld [vmem:[%s754] sm:$0xff]
      %v756 = vmul.f32 %v755, %v751
      %v757 = vmul.f32 %v755, %v752
      %v758 = vmul.f32 %v755, %v753
      %v759 = vadd.f32 %v658, %v756
      %v760 = vadd.f32 %v659, %v757
      %v761 = vadd.f32 %v660, %v758
      %s762 = scalar_lea.vmem [#allocation12], 32
      %v763 = vld [vmem:[%s762] sm:$0xff]
      %s764 = scalar_lea.vmem [#allocation10], 320
      %v765 = vld [vmem:[%s764] sm:$0xff]
      %v766 = vmul.f32 %v765, %v168
      %v767 = vmul.f32 %v765, %v169
      %v768 = vmul.f32 %v765, %v170
      %v769 = vadd.f32 %v763, %v766
      %v770 = vadd.f32 %v763, %v767
      %v771 = vadd.f32 %v763, %v768
      %s772 = scalar_lea.vmem [#allocation10], 328
      %v773 = vld [vmem:[%s772] sm:$0xff]
      %v774 = vmul.f32 %v773, %v189
      %v775 = vmul.f32 %v773, %v190
      %v776 = vmul.f32 %v773, %v191
      %v777 = vadd.f32 %v769, %v774
      %v778 = vadd.f32 %v770, %v775
      %v779 = vadd.f32 %v771, %v776
      %s780 = scalar_lea.vmem [#allocation10], 336
      %v781 = vld [vmem:[%s780] sm:$0xff]
      %v782 = vmul.f32 %v781, %v210
      %v783 = vmul.f32 %v781, %v211
      %v784 = vmul.f32 %v781, %v212
      %v785 = vadd.f32 %v777, %v782
      %v786 = vadd.f32 %v778, %v783
      %v787 = vadd.f32 %v779, %v784
      %s788 = scalar_lea.vmem [#allocation10], 344
      %v789 = vld [vmem:[%s788] sm:$0xff]
      %v790 = vmul.f32 %v789, %v231
      %v791 = vmul.f32 %v789, %v232
      %v792 = vmul.f32 %v789, %v233
      %v793 = vadd.f32 %v785, %v790
      %v794 = vadd.f32 %v786, %v791
      %v795 = vadd.f32 %v787, %v792
      %s796 = scalar_lea.vmem [#allocation10], 352
      %v797 = vld [vmem:[%s796] sm:$0xff]
      %v798 = vmul.f32 %v797, %v252
      %v799 = vmul.f32 %v797, %v253
      %v800 = vmul.f32 %v797, %v254
      %v801 = vadd.f32 %v793, %v798
      %v802 = vadd.f32 %v794, %v799
      %v803 = vadd.f32 %v795, %v800
      %s804 = scalar_lea.vmem [#allocation10], 360
      %v805 = vld [vmem:[%s804] sm:$0xff]
      %v806 = vmul.f32 %v805, %v273
      %v807 = vmul.f32 %v805, %v274
      %v808 = vmul.f32 %v805, %v275
      %v809 = vadd.f32 %v801, %v806
      %v810 = vadd.f32 %v802, %v807
      %v811 = vadd.f32 %v803, %v808
      %s812 = scalar_lea.vmem [#allocation10], 368
      %v813 = vld [vmem:[%s812] sm:$0xff]
      %v814 = vmul.f32 %v813, %v294
      %v815 = vmul.f32 %v813, %v295
      %v816 = vmul.f32 %v813, %v296
      %v817 = vadd.f32 %v809, %v814
      %v818 = vadd.f32 %v810, %v815
      %v819 = vadd.f32 %v811, %v816
      %s820 = scalar_lea.vmem [#allocation10], 376
      %v821 = vld [vmem:[%s820] sm:$0xff]
      %v822 = vmul.f32 %v821, %v315
      %v823 = vmul.f32 %v821, %v316
      %v824 = vmul.f32 %v821, %v317
      %v825 = vadd.f32 %v817, %v822
      %v826 = vadd.f32 %v818, %v823
      %v827 = vadd.f32 %v819, %v824
      %s828 = scalar_lea.vmem [#allocation10], 384
      %v829 = vld [vmem:[%s828] sm:$0xff]
      %v830 = vmul.f32 %v829, %v336
      %v831 = vmul.f32 %v829, %v337
      %v832 = vmul.f32 %v829, %v338
      %v833 = vadd.f32 %v825, %v830
      %v834 = vadd.f32 %v826, %v831
      %v835 = vadd.f32 %v827, %v832
      %s836 = scalar_lea.vmem [#allocation10], 392
      %v837 = vld [vmem:[%s836] sm:$0xff]
      %v838 = vmul.f32 %v837, %v357
      %v839 = vmul.f32 %v837, %v358
      %v840 = vmul.f32 %v837, %v359
      %v841 = vadd.f32 %v833, %v838
      %v842 = vadd.f32 %v834, %v839
      %v843 = vadd.f32 %v835, %v840
      %vm844 = vcmp.gt.f32.partialorder %v841, 0.0
      %vm845 = vcmp.gt.f32.partialorder %v842, 0.0
      %vm846 = vcmp.gt.f32.partialorder %v843, 0.0
      %s847 = sld [smem:[#allocation13 + $0x4]]
      %v848 = vstv %s847
      %v849 = vmul.f32 %v848, %v841
      %v850 = vmul.f32 %v848, %v842
      %v851 = vmul.f32 %v848, %v843
      %v852 = vsel %vm844, %v841, %v849
      %v853 = vsel %vm845, %v842, %v850
      %v854 = vsel %vm846, %v843, %v851
      %s855 = scalar_lea.vmem [#allocation15], 32
      %v856 = vld [vmem:[%s855] sm:$0xff]
      %v857 = vmul.f32 %v856, %v852
      %v858 = vmul.f32 %v856, %v853
      %v859 = vmul.f32 %v856, %v854
      %v860 = vadd.f32 %v759, %v857
      %v861 = vadd.f32 %v760, %v858
      %v862 = vadd.f32 %v761, %v859
      %s863 = scalar_lea.vmem [#allocation12], 40
      %v864 = vld [vmem:[%s863] sm:$0xff]
      %s865 = scalar_lea.vmem [#allocation10], 400
      %v866 = vld [vmem:[%s865] sm:$0xff]
      %v867 = vmul.f32 %v866, %v168
      %v868 = vmul.f32 %v866, %v169
      %v869 = vmul.f32 %v866, %v170
      %v870 = vadd.f32 %v864, %v867
      %v871 = vadd.f32 %v864, %v868
      %v872 = vadd.f32 %v864, %v869
      %s873 = scalar_lea.vmem [#allocation10], 408
      %v874 = vld [vmem:[%s873] sm:$0xff]
      %v875 = vmul.f32 %v874, %v189
      %v876 = vmul.f32 %v874, %v190
      %v877 = vmul.f32 %v874, %v191
      %v878 = vadd.f32 %v870, %v875
      %v879 = vadd.f32 %v871, %v876
      %v880 = vadd.f32 %v872, %v877
      %s881 = scalar_lea.vmem [#allocation10], 416
      %v882 = vld [vmem:[%s881] sm:$0xff]
      %v883 = vmul.f32 %v882, %v210
      %v884 = vmul.f32 %v882, %v211
      %v885 = vmul.f32 %v882, %v212
      %v886 = vadd.f32 %v878, %v883
      %v887 = vadd.f32 %v879, %v884
      %v888 = vadd.f32 %v880, %v885
      %s889 = scalar_lea.vmem [#allocation10], 424
      %v890 = vld [vmem:[%s889] sm:$0xff]
      %v891 = vmul.f32 %v890, %v231
      %v892 = vmul.f32 %v890, %v232
      %v893 = vmul.f32 %v890, %v233
      %v894 = vadd.f32 %v886, %v891
      %v895 = vadd.f32 %v887, %v892
      %v896 = vadd.f32 %v888, %v893
      %s897 = scalar_lea.vmem [#allocation10], 432
      %v898 = vld [vmem:[%s897] sm:$0xff]
      %v899 = vmul.f32 %v898, %v252
      %v900 = vmul.f32 %v898, %v253
      %v901 = vmul.f32 %v898, %v254
      %v902 = vadd.f32 %v894, %v899
      %v903 = vadd.f32 %v895, %v900
      %v904 = vadd.f32 %v896, %v901
      %s905 = scalar_lea.vmem [#allocation10], 440
      %v906 = vld [vmem:[%s905] sm:$0xff]
      %v907 = vmul.f32 %v906, %v273
      %v908 = vmul.f32 %v906, %v274
      %v909 = vmul.f32 %v906, %v275
      %v910 = vadd.f32 %v902, %v907
      %v911 = vadd.f32 %v903, %v908
      %v912 = vadd.f32 %v904, %v909
      %s913 = scalar_lea.vmem [#allocation10], 448
      %v914 = vld [vmem:[%s913] sm:$0xff]
      %v915 = vmul.f32 %v914, %v294
      %v916 = vmul.f32 %v914, %v295
      %v917 = vmul.f32 %v914, %v296
      %v918 = vadd.f32 %v910, %v915
      %v919 = vadd.f32 %v911, %v916
      %v920 = vadd.f32 %v912, %v917
      %s921 = scalar_lea.vmem [#allocation10], 456
      %v922 = vld [vmem:[%s921] sm:$0xff]
      %v923 = vmul.f32 %v922, %v315
      %v924 = vmul.f32 %v922, %v316
      %v925 = vmul.f32 %v922, %v317
      %v926 = vadd.f32 %v918, %v923
      %v927 = vadd.f32 %v919, %v924
      %v928 = vadd.f32 %v920, %v925
      %s929 = scalar_lea.vmem [#allocation10], 464
      %v930 = vld [vmem:[%s929] sm:$0xff]
      %v931 = vmul.f32 %v930, %v336
      %v932 = vmul.f32 %v930, %v337
      %v933 = vmul.f32 %v930, %v338
      %v934 = vadd.f32 %v926, %v931
      %v935 = vadd.f32 %v927, %v932
      %v936 = vadd.f32 %v928, %v933
      %s937 = scalar_lea.vmem [#allocation10], 472
      %v938 = vld [vmem:[%s937] sm:$0xff]
      %v939 = vmul.f32 %v938, %v357
      %v940 = vmul.f32 %v938, %v358
      %v941 = vmul.f32 %v938, %v359
      %v942 = vadd.f32 %v934, %v939
      %v943 = vadd.f32 %v935, %v940
      %v944 = vadd.f32 %v936, %v941
      %vm945 = vcmp.gt.f32.partialorder %v942, 0.0
      %vm946 = vcmp.gt.f32.partialorder %v943, 0.0
      %vm947 = vcmp.gt.f32.partialorder %v944, 0.0
      %s948 = sld [smem:[#allocation13 + $0x5]]
      %v949 = vstv %s948
      %v950 = vmul.f32 %v949, %v942
      %v951 = vmul.f32 %v949, %v943
      %v952 = vmul.f32 %v949, %v944
      %v953 = vsel %vm945, %v942, %v950
      %v954 = vsel %vm946, %v943, %v951
      %v955 = vsel %vm947, %v944, %v952
      %s956 = scalar_lea.vmem [#allocation15], 40
      %v957 = vld [vmem:[%s956] sm:$0xff]
      %v958 = vmul.f32 %v957, %v953
      %v959 = vmul.f32 %v957, %v954
      %v960 = vmul.f32 %v957, %v955
      %v961 = vadd.f32 %v860, %v958
      %v962 = vadd.f32 %v861, %v959
      %v963 = vadd.f32 %v862, %v960
      %s964 = scalar_lea.vmem [#allocation12], 48
      %v965 = vld [vmem:[%s964] sm:$0xff]
      %s966 = scalar_lea.vmem [#allocation10], 480
      %v967 = vld [vmem:[%s966] sm:$0xff]
      %v968 = vmul.f32 %v967, %v168
      %v969 = vmul.f32 %v967, %v169
      %v970 = vmul.f32 %v967, %v170
      %v971 = vadd.f32 %v965, %v968
      %v972 = vadd.f32 %v965, %v969
      %v973 = vadd.f32 %v965, %v970
      %s974 = scalar_lea.vmem [#allocation10], 488
      %v975 = vld [vmem:[%s974] sm:$0xff]
      %v976 = vmul.f32 %v975, %v189
      %v977 = vmul.f32 %v975, %v190
      %v978 = vmul.f32 %v975, %v191
      %v979 = vadd.f32 %v971, %v976
      %v980 = vadd.f32 %v972, %v977
      %v981 = vadd.f32 %v973, %v978
      %s982 = scalar_lea.vmem [#allocation10], 496
      %v983 = vld [vmem:[%s982] sm:$0xff]
      %v984 = vmul.f32 %v983, %v210
      %v985 = vmul.f32 %v983, %v211
      %v986 = vmul.f32 %v983, %v212
      %v987 = vadd.f32 %v979, %v984
      %v988 = vadd.f32 %v980, %v985
      %v989 = vadd.f32 %v981, %v986
      %s990 = scalar_lea.vmem [#allocation10], 504
      %v991 = vld [vmem:[%s990] sm:$0xff]
      %v992 = vmul.f32 %v991, %v231
      %v993 = vmul.f32 %v991, %v232
      %v994 = vmul.f32 %v991, %v233
      %v995 = vadd.f32 %v987, %v992
      %v996 = vadd.f32 %v988, %v993
      %v997 = vadd.f32 %v989, %v994
      %s998 = scalar_lea.vmem [#allocation10], 512
      %v999 = vld [vmem:[%s998] sm:$0xff]
      %v1000 = vmul.f32 %v999, %v252
      %v1001 = vmul.f32 %v999, %v253
      %v1002 = vmul.f32 %v999, %v254
      %v1003 = vadd.f32 %v995, %v1000
      %v1004 = vadd.f32 %v996, %v1001
      %v1005 = vadd.f32 %v997, %v1002
      %s1006 = scalar_lea.vmem [#allocation10], 520
      %v1007 = vld [vmem:[%s1006] sm:$0xff]
      %v1008 = vmul.f32 %v1007, %v273
      %v1009 = vmul.f32 %v1007, %v274
      %v1010 = vmul.f32 %v1007, %v275
      %v1011 = vadd.f32 %v1003, %v1008
      %v1012 = vadd.f32 %v1004, %v1009
      %v1013 = vadd.f32 %v1005, %v1010
      %s1014 = scalar_lea.vmem [#allocation10], 528
      %v1015 = vld [vmem:[%s1014] sm:$0xff]
      %v1016 = vmul.f32 %v1015, %v294
      %v1017 = vmul.f32 %v1015, %v295
      %v1018 = vmul.f32 %v1015, %v296
      %v1019 = vadd.f32 %v1011, %v1016
      %v1020 = vadd.f32 %v1012, %v1017
      %v1021 = vadd.f32 %v1013, %v1018
      %s1022 = scalar_lea.vmem [#allocation10], 536
      %v1023 = vld [vmem:[%s1022] sm:$0xff]
      %v1024 = vmul.f32 %v1023, %v315
      %v1025 = vmul.f32 %v1023, %v316
      %v1026 = vmul.f32 %v1023, %v317
      %v1027 = vadd.f32 %v1019, %v1024
      %v1028 = vadd.f32 %v1020, %v1025
      %v1029 = vadd.f32 %v1021, %v1026
      %s1030 = scalar_lea.vmem [#allocation10], 544
      %v1031 = vld [vmem:[%s1030] sm:$0xff]
      %v1032 = vmul.f32 %v1031, %v336
      %v1033 = vmul.f32 %v1031, %v337
      %v1034 = vmul.f32 %v1031, %v338
      %v1035 = vadd.f32 %v1027, %v1032
      %v1036 = vadd.f32 %v1028, %v1033
      %v1037 = vadd.f32 %v1029, %v1034
      %s1038 = scalar_lea.vmem [#allocation10], 552
      %v1039 = vld [vmem:[%s1038] sm:$0xff]
      %v1040 = vmul.f32 %v1039, %v357
      %v1041 = vmul.f32 %v1039, %v358
      %v1042 = vmul.f32 %v1039, %v359
      %v1043 = vadd.f32 %v1035, %v1040
      %v1044 = vadd.f32 %v1036, %v1041
      %v1045 = vadd.f32 %v1037, %v1042
      %vm1046 = vcmp.gt.f32.partialorder %v1043, 0.0
      %vm1047 = vcmp.gt.f32.partialorder %v1044, 0.0
      %vm1048 = vcmp.gt.f32.partialorder %v1045, 0.0
      %s1049 = sld [smem:[#allocation13 + $0x6]]
      %v1050 = vstv %s1049
      %v1051 = vmul.f32 %v1050, %v1043
      %v1052 = vmul.f32 %v1050, %v1044
      %v1053 = vmul.f32 %v1050, %v1045
      %v1054 = vsel %vm1046, %v1043, %v1051
      %v1055 = vsel %vm1047, %v1044, %v1052
      %v1056 = vsel %vm1048, %v1045, %v1053
      %s1057 = scalar_lea.vmem [#allocation15], 48
      %v1058 = vld [vmem:[%s1057] sm:$0xff]
      %v1059 = vmul.f32 %v1058, %v1054
      %v1060 = vmul.f32 %v1058, %v1055
      %v1061 = vmul.f32 %v1058, %v1056
      %v1062 = vadd.f32 %v961, %v1059
      %v1063 = vadd.f32 %v962, %v1060
      %v1064 = vadd.f32 %v963, %v1061
      %s1065 = scalar_lea.vmem [#allocation12], 56
      %v1066 = vld [vmem:[%s1065] sm:$0xff]
      %s1067 = scalar_lea.vmem [#allocation10], 560
      %v1068 = vld [vmem:[%s1067] sm:$0xff]
      %v1069 = vmul.f32 %v1068, %v168
      %v1070 = vmul.f32 %v1068, %v169
      %v1071 = vmul.f32 %v1068, %v170
      %v1072 = vadd.f32 %v1066, %v1069
      %v1073 = vadd.f32 %v1066, %v1070
      %v1074 = vadd.f32 %v1066, %v1071
      %s1075 = scalar_lea.vmem [#allocation10], 568
      %v1076 = vld [vmem:[%s1075] sm:$0xff]
      %v1077 = vmul.f32 %v1076, %v189
      %v1078 = vmul.f32 %v1076, %v190
      %v1079 = vmul.f32 %v1076, %v191
      %v1080 = vadd.f32 %v1072, %v1077
      %v1081 = vadd.f32 %v1073, %v1078
      %v1082 = vadd.f32 %v1074, %v1079
      %s1083 = scalar_lea.vmem [#allocation10], 576
      %v1084 = vld [vmem:[%s1083] sm:$0xff]
      %v1085 = vmul.f32 %v1084, %v210
      %v1086 = vmul.f32 %v1084, %v211
      %v1087 = vmul.f32 %v1084, %v212
      %v1088 = vadd.f32 %v1080, %v1085
      %v1089 = vadd.f32 %v1081, %v1086
      %v1090 = vadd.f32 %v1082, %v1087
      %s1091 = scalar_lea.vmem [#allocation10], 584
      %v1092 = vld [vmem:[%s1091] sm:$0xff]
      %v1093 = vmul.f32 %v1092, %v231
      %v1094 = vmul.f32 %v1092, %v232
      %v1095 = vmul.f32 %v1092, %v233
      %v1096 = vadd.f32 %v1088, %v1093
      %v1097 = vadd.f32 %v1089, %v1094
      %v1098 = vadd.f32 %v1090, %v1095
      %s1099 = scalar_lea.vmem [#allocation10], 592
      %v1100 = vld [vmem:[%s1099] sm:$0xff]
      %v1101 = vmul.f32 %v1100, %v252
      %v1102 = vmul.f32 %v1100, %v253
      %v1103 = vmul.f32 %v1100, %v254
      %v1104 = vadd.f32 %v1096, %v1101
      %v1105 = vadd.f32 %v1097, %v1102
      %v1106 = vadd.f32 %v1098, %v1103
      %s1107 = scalar_lea.vmem [#allocation10], 600
      %v1108 = vld [vmem:[%s1107] sm:$0xff]
      %v1109 = vmul.f32 %v1108, %v273
      %v1110 = vmul.f32 %v1108, %v274
      %v1111 = vmul.f32 %v1108, %v275
      %v1112 = vadd.f32 %v1104, %v1109
      %v1113 = vadd.f32 %v1105, %v1110
      %v1114 = vadd.f32 %v1106, %v1111
      %s1115 = scalar_lea.vmem [#allocation10], 608
      %v1116 = vld [vmem:[%s1115] sm:$0xff]
      %v1117 = vmul.f32 %v1116, %v294
      %v1118 = vmul.f32 %v1116, %v295
      %v1119 = vmul.f32 %v1116, %v296
      %v1120 = vadd.f32 %v1112, %v1117
      %v1121 = vadd.f32 %v1113, %v1118
      %v1122 = vadd.f32 %v1114, %v1119
      %s1123 = scalar_lea.vmem [#allocation10], 616
      %v1124 = vld [vmem:[%s1123] sm:$0xff]
      %v1125 = vmul.f32 %v1124, %v315
      %v1126 = vmul.f32 %v1124, %v316
      %v1127 = vmul.f32 %v1124, %v317
      %v1128 = vadd.f32 %v1120, %v1125
      %v1129 = vadd.f32 %v1121, %v1126
      %v1130 = vadd.f32 %v1122, %v1127
      %s1131 = scalar_lea.vmem [#allocation10], 624
      %v1132 = vld [vmem:[%s1131] sm:$0xff]
      %v1133 = vmul.f32 %v1132, %v336
      %v1134 = vmul.f32 %v1132, %v337
      %v1135 = vmul.f32 %v1132, %v338
      %v1136 = vadd.f32 %v1128, %v1133
      %v1137 = vadd.f32 %v1129, %v1134
      %v1138 = vadd.f32 %v1130, %v1135
      %s1139 = scalar_lea.vmem [#allocation10], 632
      %v1140 = vld [vmem:[%s1139] sm:$0xff]
      %v1141 = vmul.f32 %v1140, %v357
      %v1142 = vmul.f32 %v1140, %v358
      %v1143 = vmul.f32 %v1140, %v359
      %v1144 = vadd.f32 %v1136, %v1141
      %v1145 = vadd.f32 %v1137, %v1142
      %v1146 = vadd.f32 %v1138, %v1143
      %vm1147 = vcmp.gt.f32.partialorder %v1144, 0.0
      %vm1148 = vcmp.gt.f32.partialorder %v1145, 0.0
      %vm1149 = vcmp.gt.f32.partialorder %v1146, 0.0
      %s1150 = sld [smem:[#allocation13 + $0x7]]
      %v1151 = vstv %s1150
      %v1152 = vmul.f32 %v1151, %v1144
      %v1153 = vmul.f32 %v1151, %v1145
      %v1154 = vmul.f32 %v1151, %v1146
      %v1155 = vsel %vm1147, %v1144, %v1152
      %v1156 = vsel %vm1148, %v1145, %v1153
      %v1157 = vsel %vm1149, %v1146, %v1154
      %s1158 = scalar_lea.vmem [#allocation15], 56
      %v1159 = vld [vmem:[%s1158] sm:$0xff]
      %v1160 = vmul.f32 %v1159, %v1155
      %v1161 = vmul.f32 %v1159, %v1156
      %v1162 = vmul.f32 %v1159, %v1157
      %v1163 = vadd.f32 %v1062, %v1160
      %v1164 = vadd.f32 %v1063, %v1161
      %v1165 = vadd.f32 %v1064, %v1162
      %s1166 = scalar_lea.vmem [#allocation12], 64
      %v1167 = vld [vmem:[%s1166] sm:$0xff]
      %s1168 = scalar_lea.vmem [#allocation10], 640
      %v1169 = vld [vmem:[%s1168] sm:$0xff]
      %v1170 = vmul.f32 %v1169, %v168
      %v1171 = vmul.f32 %v1169, %v169
      %v1172 = vmul.f32 %v1169, %v170
      %v1173 = vadd.f32 %v1167, %v1170
      %v1174 = vadd.f32 %v1167, %v1171
      %v1175 = vadd.f32 %v1167, %v1172
      %s1176 = scalar_lea.vmem [#allocation10], 648
      %v1177 = vld [vmem:[%s1176] sm:$0xff]
      %v1178 = vmul.f32 %v1177, %v189
      %v1179 = vmul.f32 %v1177, %v190
      %v1180 = vmul.f32 %v1177, %v191
      %v1181 = vadd.f32 %v1173, %v1178
      %v1182 = vadd.f32 %v1174, %v1179
      %v1183 = vadd.f32 %v1175, %v1180
      %s1184 = scalar_lea.vmem [#allocation10], 656
      %v1185 = vld [vmem:[%s1184] sm:$0xff]
      %v1186 = vmul.f32 %v1185, %v210
      %v1187 = vmul.f32 %v1185, %v211
      %v1188 = vmul.f32 %v1185, %v212
      %v1189 = vadd.f32 %v1181, %v1186
      %v1190 = vadd.f32 %v1182, %v1187
      %v1191 = vadd.f32 %v1183, %v1188
      %s1192 = scalar_lea.vmem [#allocation10], 664
      %v1193 = vld [vmem:[%s1192] sm:$0xff]
      %v1194 = vmul.f32 %v1193, %v231
      %v1195 = vmul.f32 %v1193, %v232
      %v1196 = vmul.f32 %v1193, %v233
      %v1197 = vadd.f32 %v1189, %v1194
      %v1198 = vadd.f32 %v1190, %v1195
      %v1199 = vadd.f32 %v1191, %v1196
      %s1200 = scalar_lea.vmem [#allocation10], 672
      %v1201 = vld [vmem:[%s1200] sm:$0xff]
      %v1202 = vmul.f32 %v1201, %v252
      %v1203 = vmul.f32 %v1201, %v253
      %v1204 = vmul.f32 %v1201, %v254
      %v1205 = vadd.f32 %v1197, %v1202
      %v1206 = vadd.f32 %v1198, %v1203
      %v1207 = vadd.f32 %v1199, %v1204
      %s1208 = scalar_lea.vmem [#allocation10], 680
      %v1209 = vld [vmem:[%s1208] sm:$0xff]
      %v1210 = vmul.f32 %v1209, %v273
      %v1211 = vmul.f32 %v1209, %v274
      %v1212 = vmul.f32 %v1209, %v275
      %v1213 = vadd.f32 %v1205, %v1210
      %v1214 = vadd.f32 %v1206, %v1211
      %v1215 = vadd.f32 %v1207, %v1212
      %s1216 = scalar_lea.vmem [#allocation10], 688
      %v1217 = vld [vmem:[%s1216] sm:$0xff]
      %v1218 = vmul.f32 %v1217, %v294
      %v1219 = vmul.f32 %v1217, %v295
      %v1220 = vmul.f32 %v1217, %v296
      %v1221 = vadd.f32 %v1213, %v1218
      %v1222 = vadd.f32 %v1214, %v1219
      %v1223 = vadd.f32 %v1215, %v1220
      %s1224 = scalar_lea.vmem [#allocation10], 696
      %v1225 = vld [vmem:[%s1224] sm:$0xff]
      %v1226 = vmul.f32 %v1225, %v315
      %v1227 = vmul.f32 %v1225, %v316
      %v1228 = vmul.f32 %v1225, %v317
      %v1229 = vadd.f32 %v1221, %v1226
      %v1230 = vadd.f32 %v1222, %v1227
      %v1231 = vadd.f32 %v1223, %v1228
      %s1232 = scalar_lea.vmem [#allocation10], 704
      %v1233 = vld [vmem:[%s1232] sm:$0xff]
      %v1234 = vmul.f32 %v1233, %v336
      %v1235 = vmul.f32 %v1233, %v337
      %v1236 = vmul.f32 %v1233, %v338
      %v1237 = vadd.f32 %v1229, %v1234
      %v1238 = vadd.f32 %v1230, %v1235
      %v1239 = vadd.f32 %v1231, %v1236
      %s1240 = scalar_lea.vmem [#allocation10], 712
      %v1241 = vld [vmem:[%s1240] sm:$0xff]
      %v1242 = vmul.f32 %v1241, %v357
      %v1243 = vmul.f32 %v1241, %v358
      %v1244 = vmul.f32 %v1241, %v359
      %v1245 = vadd.f32 %v1237, %v1242
      %v1246 = vadd.f32 %v1238, %v1243
      %v1247 = vadd.f32 %v1239, %v1244
      %vm1248 = vcmp.gt.f32.partialorder %v1245, 0.0
      %vm1249 = vcmp.gt.f32.partialorder %v1246, 0.0
      %vm1250 = vcmp.gt.f32.partialorder %v1247, 0.0
      %s1251 = sld [smem:[#allocation13 + $0x8]]
      %v1252 = vstv %s1251
      %v1253 = vmul.f32 %v1252, %v1245
      %v1254 = vmul.f32 %v1252, %v1246
      %v1255 = vmul.f32 %v1252, %v1247
      %v1256 = vsel %vm1248, %v1245, %v1253
      %v1257 = vsel %vm1249, %v1246, %v1254
      %v1258 = vsel %vm1250, %v1247, %v1255
      %s1259 = scalar_lea.vmem [#allocation15], 64
      %v1260 = vld [vmem:[%s1259] sm:$0xff]
      %v1261 = vmul.f32 %v1260, %v1256
      %v1262 = vmul.f32 %v1260, %v1257
      %v1263 = vmul.f32 %v1260, %v1258
      %v1264 = vadd.f32 %v1163, %v1261
      %v1265 = vadd.f32 %v1164, %v1262
      %v1266 = vadd.f32 %v1165, %v1263
      %s1267 = scalar_lea.vmem [#allocation12], 72
      %v1268 = vld [vmem:[%s1267] sm:$0xff]
      %s1269 = scalar_lea.vmem [#allocation10], 720
      %v1270 = vld [vmem:[%s1269] sm:$0xff]
      %v1271 = vmul.f32 %v1270, %v168
      %v1272 = vmul.f32 %v1270, %v169
      %v1273 = vmul.f32 %v1270, %v170
      %v1274 = vadd.f32 %v1268, %v1271
      %v1275 = vadd.f32 %v1268, %v1272
      %v1276 = vadd.f32 %v1268, %v1273
      %s1277 = scalar_lea.vmem [#allocation10], 728
      %v1278 = vld [vmem:[%s1277] sm:$0xff]
      %v1279 = vmul.f32 %v1278, %v189
      %v1280 = vmul.f32 %v1278, %v190
      %v1281 = vmul.f32 %v1278, %v191
      %v1282 = vadd.f32 %v1274, %v1279
      %v1283 = vadd.f32 %v1275, %v1280
      %v1284 = vadd.f32 %v1276, %v1281
      %s1285 = scalar_lea.vmem [#allocation10], 736
      %v1286 = vld [vmem:[%s1285] sm:$0xff]
      %v1287 = vmul.f32 %v1286, %v210
      %v1288 = vmul.f32 %v1286, %v211
      %v1289 = vmul.f32 %v1286, %v212
      %v1290 = vadd.f32 %v1282, %v1287
      %v1291 = vadd.f32 %v1283, %v1288
      %v1292 = vadd.f32 %v1284, %v1289
      %s1293 = scalar_lea.vmem [#allocation10], 744
      %v1294 = vld [vmem:[%s1293] sm:$0xff]
      %v1295 = vmul.f32 %v1294, %v231
      %v1296 = vmul.f32 %v1294, %v232
      %v1297 = vmul.f32 %v1294, %v233
      %v1298 = vadd.f32 %v1290, %v1295
      %v1299 = vadd.f32 %v1291, %v1296
      %v1300 = vadd.f32 %v1292, %v1297
      %s1301 = scalar_lea.vmem [#allocation10], 752
      %v1302 = vld [vmem:[%s1301] sm:$0xff]
      %v1303 = vmul.f32 %v1302, %v252
      %v1304 = vmul.f32 %v1302, %v253
      %v1305 = vmul.f32 %v1302, %v254
      %v1306 = vadd.f32 %v1298, %v1303
      %v1307 = vadd.f32 %v1299, %v1304
      %v1308 = vadd.f32 %v1300, %v1305
      %s1309 = scalar_lea.vmem [#allocation10], 760
      %v1310 = vld [vmem:[%s1309] sm:$0xff]
      %v1311 = vmul.f32 %v1310, %v273
      %v1312 = vmul.f32 %v1310, %v274
      %v1313 = vmul.f32 %v1310, %v275
      %v1314 = vadd.f32 %v1306, %v1311
      %v1315 = vadd.f32 %v1307, %v1312
      %v1316 = vadd.f32 %v1308, %v1313
      %s1317 = scalar_lea.vmem [#allocation10], 768
      %v1318 = vld [vmem:[%s1317] sm:$0xff]
      %v1319 = vmul.f32 %v1318, %v294
      %v1320 = vmul.f32 %v1318, %v295
      %v1321 = vmul.f32 %v1318, %v296
      %v1322 = vadd.f32 %v1314, %v1319
      %v1323 = vadd.f32 %v1315, %v1320
      %v1324 = vadd.f32 %v1316, %v1321
      %s1325 = scalar_lea.vmem [#allocation10], 776
      %v1326 = vld [vmem:[%s1325] sm:$0xff]
      %v1327 = vmul.f32 %v1326, %v315
      %v1328 = vmul.f32 %v1326, %v316
      %v1329 = vmul.f32 %v1326, %v317
      %v1330 = vadd.f32 %v1322, %v1327
      %v1331 = vadd.f32 %v1323, %v1328
      %v1332 = vadd.f32 %v1324, %v1329
      %s1333 = scalar_lea.vmem [#allocation10], 784
      %v1334 = vld [vmem:[%s1333] sm:$0xff]
      %v1335 = vmul.f32 %v1334, %v336
      %v1336 = vmul.f32 %v1334, %v337
      %v1337 = vmul.f32 %v1334, %v338
      %v1338 = vadd.f32 %v1330, %v1335
      %v1339 = vadd.f32 %v1331, %v1336
      %v1340 = vadd.f32 %v1332, %v1337
      %s1341 = scalar_lea.vmem [#allocation10], 792
      %v1342 = vld [vmem:[%s1341] sm:$0xff]
      %v1343 = vmul.f32 %v1342, %v357
      %v1344 = vmul.f32 %v1342, %v358
      %v1345 = vmul.f32 %v1342, %v359
      %v1346 = vadd.f32 %v1338, %v1343
      %v1347 = vadd.f32 %v1339, %v1344
      %v1348 = vadd.f32 %v1340, %v1345
      %vm1349 = vcmp.gt.f32.partialorder %v1346, 0.0
      %vm1350 = vcmp.gt.f32.partialorder %v1347, 0.0
      %vm1351 = vcmp.gt.f32.partialorder %v1348, 0.0
      %s1352 = sld [smem:[#allocation13 + $0x9]]
      %v1353 = vstv %s1352
      %v1354 = vmul.f32 %v1353, %v1346
      %v1355 = vmul.f32 %v1353, %v1347
      %v1356 = vmul.f32 %v1353, %v1348
      %v1357 = vsel %vm1349, %v1346, %v1354
      %v1358 = vsel %vm1350, %v1347, %v1355
      %v1359 = vsel %vm1351, %v1348, %v1356
      %s1360 = scalar_lea.vmem [#allocation15], 72
      %v1361 = vld [vmem:[%s1360] sm:$0xff]
      %v1362 = vmul.f32 %v1361, %v1357
      %v1363 = vmul.f32 %v1361, %v1358
      %v1364 = vmul.f32 %v1361, %v1359
      %v1365 = vadd.f32 %v1264, %v1362
      %v1366 = vadd.f32 %v1265, %v1363
      %v1367 = vadd.f32 %v1266, %v1364
      %v1368 = vadd.f32 %v149, %v1365
      %v1369 = vadd.f32 %v150, %v1366
      %v1370 = vadd.f32 %v151, %v1367
      %s1371 = scalar_lea.vmem [#allocation17], %s147
      %1372 = vst [vmem:[%s1371] sm:$0xff] %v1368
      %1373 = vst [vmem:[%s1371 + $0x8] sm:$0xff] %v1369
      %1374 = vst [vmem:[%s1371 + $0x10] sm:$0xff] %v1370
    $region74: #{tpu_custom_call.1} parent=1 // loop_footer
      %s145 = sadd.s32 1, %s141
    $region75: #{tpu_custom_call.1} parent=1 // loop_footer_branch
      %140 = sbr.rel target = $region71
    $region76: #{tpu_custom_call.1} parent=1 // loop_exit
      _
    // Predicated region
    $region77: #{tpu_custom_call.1} parent=1 // pred_check
      _
    $region78: #{tpu_custom_call.1} parent=1 // pred_check_branch
      %1376 = sbr.rel (0) target = $region80
    $region79: #{tpu_custom_call.1} parent=1 // pred_region
      %s1378 = ssub.s32 1152, 1152
      %1379 = vsyncadd [#allocation4], %s1378
      %s1380 = sshll.u32 [#allocation17], 4
      %s1381 = int_to_ptr.vmem [resolvable:$true] %s1380
      %1386 = dma.vmem_to_hbm [thread:$0]  %s1381, 1152, %s9, [#allocation4], 128, 128, 8
    $region80: #{tpu_custom_call.1} parent=1 // pred_fallthru
      _
    // Predicated region
    $region81: #{tpu_custom_call.1} parent=1 // pred_check
      _
    $region82: #{tpu_custom_call.1} parent=1 // pred_check_branch
      %1388 = sbr.rel (0) target = $region84
    $region83: #{tpu_custom_call.1} parent=1 // pred_region
      %1389 = dma.done [#allocation4], 1152
    $region84: #{tpu_custom_call.1} parent=1 // pred_fallthru
      _
    %1390 = vsyncpa [#allocation3], 1
    %1391 = vsyncpa [#allocation7], 1
    %1392 = vsyncpa [#allocation11], 1
    %1393 = vsyncpa [#allocation16], 1
    %1394 = vsyncpa [#allocation4], 1
    %1395 = vsyncpa [#allocation5], 1
    %1396 = vsyncpa [#allocation14], 1

</llo_original>
